<compile_context>
chip_gen: v7x
topology: tpu7x:2x2x1
jax: 0.10.0
libtpu: 0.0.40
codegen_flags: <defaults>
</compile_context>

<pallas_src>
import jax
import jax.numpy as jnp
from jax import lax
from jax.experimental import pallas as pl
from jax.experimental.pallas import tpu as pltpu


def _get_image_g_kernel(w_ref, x_ref, o_ref, xpad_ref):
    # w_ref:    SMEM (Cout*C*9,)      -- PyTorch OIHW weights, flattened row-major
    # x_ref:    VMEM (NB, C, H, W)    -- unpadded NCHW input block
    # o_ref:    VMEM (NB, Cout, H, W) -- NCHW output block (W on the lane axis)
    # xpad_ref: VMEM (C, H+2, W+2)    -- scratch; zero border == conv padding=1
    NB, C, H, W = x_ref.shape
    Cout = o_ref.shape[1]

    # Zero the halo scratch once per grid step.  The interior is overwritten
    # below; the 1-pixel border stays zero (the conv's implicit zero padding),
    # so no HBM pad pass is needed.
    xpad_ref[...] = jnp.zeros_like(xpad_ref)

    for n in range(NB):
        # Write this batch element's channels into the interior of the scratch.
        xpad_ref[:, 1:H + 1, 1:W + 1] = x_ref[n]

        # One (H, W) f32 accumulator per output channel.
        accs = [jnp.zeros((H, W), jnp.float32) for _ in range(Cout)]

        # 3x3 conv as 9 shifted taps per input channel, contracted on the VPU
        # with scalar-broadcast FMAs (weights read straight from SMEM).
        for c in range(C):
            xp = xpad_ref[c]                          # (H+2, W+2)
            for kw in range(3):
                slab = xp[:, kw:kw + W]               # hoisted lane shift, (H+2, W)
                for kh in range(3):
                    tap = slab[kh:kh + H, :]          # (H, W) sublane sub-slice
                    for o in range(Cout):
                        wgt = w_ref[((o * C + c) * 3 + kh) * 3 + kw]  # SMEM scalar
                        accs[o] = accs[o] + wgt * tap                 # VPU FMA

        for o in range(Cout):
            o_ref[n, o] = jnp.tanh(accs[o]).astype(o_ref.dtype)       # EUP tanh


def get_image_g(h_code_nchw, weight_oihw, *, batch_block=1):
    """Forward pass of GET_IMAGE_G.

    h_code_nchw: (N, ngf, H, W) float32
    weight_oihw: (3, ngf, 3, 3) float32 (PyTorch Conv2d weight layout)
    batch_block: batch elements per grid step.  Keep 1 on v7x (2 TensorCores);
                 set to N on single-TC chips (v5e/v6e) at toy sizes to fold the
                 grid and amortize per-step overhead.
    returns:     (N, 3, H, W) float32
    """
    N, C, H, W = h_code_nchw.shape
    Cout = weight_oihw.shape[0]
    assert N % batch_block == 0
    nb = batch_block

    # Flatten OIHW row-major: index = ((o*C + c)*3 + kh)*3 + kw (matches kernel).
    w_flat = weight_oihw.reshape(-1)

    return pl.pallas_call(
        _get_image_g_kernel,
        out_shape=jax.ShapeDtypeStruct((N, Cout, H, W), h_code_nchw.dtype),
        grid_spec=pltpu.PrefetchScalarGridSpec(
            num_scalar_prefetch=0,
            grid=(N // nb,),
            in_specs=[
                # Tiny weight vector lives in SMEM as scalars.
                pl.BlockSpec(memory_space=pltpu.MemorySpace.SMEM),
                # Unpadded NCHW block: last two dims equal the full array dims.
                pl.BlockSpec((nb, C, H, W), lambda i: (i, 0, 0, 0)),
            ],
            out_specs=pl.BlockSpec((nb, Cout, H, W), lambda i: (i, 0, 0, 0)),
            scratch_shapes=[
                pltpu.VMEM((C, H + 2, W + 2), h_code_nchw.dtype),  # halo scratch
            ],
        ),
        compiler_params=pltpu.CompilerParams(
            dimension_semantics=("parallel",),
        ),
    )(w_flat, h_code_nchw)


if __name__ == "__main__":
    key = jax.random.PRNGKey(0)
    N, ngf, H, W = 2, 8, 16, 16

    k_x, k_w = jax.random.split(key)
    h_code = jax.random.normal(k_x, (N, ngf, H, W), dtype=jnp.float32)
    # Deterministic synthetic conv weight, PyTorch layout (out=3, in=ngf, 3, 3).
    weight = 0.1 * jax.random.normal(k_w, (3, ngf, 3, 3), dtype=jnp.float32)

    out = get_image_g(h_code, weight)
    out = jax.block_until_ready(out)

    # Reference check with XLA conv (NCHW, OIHW) + tanh.
    ref = jnp.tanh(
        lax.conv_general_dilated(
            h_code, weight,
            window_strides=(1, 1), padding=((1, 1), (1, 1)),
            dimension_numbers=("NCHW", "OIHW", "NCHW"),
        )
    )
    assert out.shape == (N, 3, H, W)
    assert jnp.allclose(out, ref, atol=1e-5, rtol=1e-5)

    print("KERNEL_OK")
</pallas_src>

<mosaic_0001>
module attributes {stable_mosaic.version = 11 : i64} {
  func.func @_get_image_g_kernel(%arg0: i32, %arg1: memref<216xf32, #tpu.memory_space<smem>>, %arg2: memref<1x8x16x16xf32, #tpu.memory_space<vmem>>, %arg3: memref<1x3x16x16xf32, #tpu.memory_space<vmem>>, %arg4: memref<8x18x18xf32, #tpu.memory_space<vmem>>) attributes {dimension_semantics = [#tpu.dimension_semantics<parallel>], iteration_bounds = array<i64: 2>, scalar_prefetch = 0 : i64, scratch_operands = 1 : i64, tpu.core_type = #tpu.core_type<tc>, window_params = [{transform_indices = @transform_0, window_bounds = array<i64: 216>}, {transform_indices = @transform_1, window_bounds = array<i64: 1, 8, 16, 16>}, {transform_indices = @transform_2, window_bounds = array<i64: 1, 3, 16, 16>}]} {
    %cst = arith.constant 0.000000e+00 : f32
    %0 = vector.broadcast %cst : f32 to vector<8x18x18xf32>
    %c0 = arith.constant 0 : index
    %c0_0 = arith.constant 0 : index
    %c0_1 = arith.constant 0 : index
    %1 = vector.load %arg4[%c0, %c0_0, %c0_1] : memref<8x18x18xf32, #tpu.memory_space<vmem>>, vector<8x18x18xf32>
    tpu.vector_store %arg4[%c0, %c0_0, %c0_1], %0 {strides = array<i32>} : memref<8x18x18xf32, #tpu.memory_space<vmem>>, vector<8x18x18xf32>,
    %c0_2 = arith.constant 0 : index
    %c0_3 = arith.constant 0 : index
    %c0_4 = arith.constant 0 : index
    %c0_5 = arith.constant 0 : index
    %2 = vector.load %arg2[%c0_2, %c0_3, %c0_4, %c0_5] : memref<1x8x16x16xf32, #tpu.memory_space<vmem>>, vector<1x8x16x16xf32>
    %3 = vector.shape_cast %2 : vector<1x8x16x16xf32> to vector<8x16x16xf32>
    %c0_6 = arith.constant 0 : index
    %c1 = arith.constant 1 : index
    %c1_7 = arith.constant 1 : index
    %4 = vector.load %arg4[%c0_6, %c1, %c1_7] : memref<8x18x18xf32, #tpu.memory_space<vmem>>, vector<8x16x16xf32>
    tpu.vector_store %arg4[%c0_6, %c1, %c1_7], %3 {strides = array<i32>} : memref<8x18x18xf32, #tpu.memory_space<vmem>>, vector<8x16x16xf32>,
    %cst_8 = arith.constant 0.000000e+00 : f32
    %5 = vector.broadcast %cst_8 : f32 to vector<16x16xf32>
    %cst_9 = arith.constant 0.000000e+00 : f32
    %6 = vector.broadcast %cst_9 : f32 to vector<16x16xf32>
    %cst_10 = arith.constant 0.000000e+00 : f32
    %7 = vector.broadcast %cst_10 : f32 to vector<16x16xf32>
    %c0_11 = arith.constant 0 : index
    %c0_12 = arith.constant 0 : index
    %c0_13 = arith.constant 0 : index
    %8 = vector.load %arg4[%c0_11, %c0_12, %c0_13] : memref<8x18x18xf32, #tpu.memory_space<vmem>>, vector<1x18x18xf32>
    %9 = vector.shape_cast %8 : vector<1x18x18xf32> to vector<18x18xf32>
    %10 = vector.extract_strided_slice %9 {offsets = [0, 0], sizes = [18, 16], strides = [1, 1]} : vector<18x18xf32> to vector<18x16xf32>
    %11 = vector.extract_strided_slice %10 {offsets = [0, 0], sizes = [16, 16], strides = [1, 1]} : vector<18x16xf32> to vector<16x16xf32>
    %c0_14 = arith.constant 0 : index
    %12 = memref.load %arg1[%c0_14] : memref<216xf32, #tpu.memory_space<smem>>
    %13 = vector.broadcast %12 : f32 to vector<16x16xf32>
    %14 = arith.mulf %13, %11 : vector<16x16xf32>
    %15 = arith.addf %5, %14 : vector<16x16xf32>
    %c72 = arith.constant 72 : index
    %16 = memref.load %arg1[%c72] : memref<216xf32, #tpu.memory_space<smem>>
    %17 = vector.broadcast %16 : f32 to vector<16x16xf32>
    %18 = arith.mulf %17, %11 : vector<16x16xf32>
    %19 = arith.addf %6, %18 : vector<16x16xf32>
    %c144 = arith.constant 144 : index
    %20 = memref.load %arg1[%c144] : memref<216xf32, #tpu.memory_space<smem>>
    %21 = vector.broadcast %20 : f32 to vector<16x16xf32>
    %22 = arith.mulf %21, %11 : vector<16x16xf32>
    %23 = arith.addf %7, %22 : vector<16x16xf32>
    %24 = vector.extract_strided_slice %10 {offsets = [1, 0], sizes = [16, 16], strides = [1, 1]} : vector<18x16xf32> to vector<16x16xf32>
    %c3 = arith.constant 3 : index
    %25 = memref.load %arg1[%c3] : memref<216xf32, #tpu.memory_space<smem>>
    %26 = vector.broadcast %25 : f32 to vector<16x16xf32>
    %27 = arith.mulf %26, %24 : vector<16x16xf32>
    %28 = arith.addf %15, %27 : vector<16x16xf32>
    %c75 = arith.constant 75 : index
    %29 = memref.load %arg1[%c75] : memref<216xf32, #tpu.memory_space<smem>>
    %30 = vector.broadcast %29 : f32 to vector<16x16xf32>
    %31 = arith.mulf %30, %24 : vector<16x16xf32>
    %32 = arith.addf %19, %31 : vector<16x16xf32>
    %c147 = arith.constant 147 : index
    %33 = memref.load %arg1[%c147] : memref<216xf32, #tpu.memory_space<smem>>
    %34 = vector.broadcast %33 : f32 to vector<16x16xf32>
    %35 = arith.mulf %34, %24 : vector<16x16xf32>
    %36 = arith.addf %23, %35 : vector<16x16xf32>
    %37 = vector.extract_strided_slice %10 {offsets = [2, 0], sizes = [16, 16], strides = [1, 1]} : vector<18x16xf32> to vector<16x16xf32>
    %c6 = arith.constant 6 : index
    %38 = memref.load %arg1[%c6] : memref<216xf32, #tpu.memory_space<smem>>
    %39 = vector.broadcast %38 : f32 to vector<16x16xf32>
    %40 = arith.mulf %39, %37 : vector<16x16xf32>
    %41 = arith.addf %28, %40 : vector<16x16xf32>
    %c78 = arith.constant 78 : index
    %42 = memref.load %arg1[%c78] : memref<216xf32, #tpu.memory_space<smem>>
    %43 = vector.broadcast %42 : f32 to vector<16x16xf32>
    %44 = arith.mulf %43, %37 : vector<16x16xf32>
    %45 = arith.addf %32, %44 : vector<16x16xf32>
    %c150 = arith.constant 150 : index
    %46 = memref.load %arg1[%c150] : memref<216xf32, #tpu.memory_space<smem>>
    %47 = vector.broadcast %46 : f32 to vector<16x16xf32>
    %48 = arith.mulf %47, %37 : vector<16x16xf32>
    %49 = arith.addf %36, %48 : vector<16x16xf32>
    %50 = vector.extract_strided_slice %9 {offsets = [0, 1], sizes = [18, 16], strides = [1, 1]} : vector<18x18xf32> to vector<18x16xf32>
    %51 = vector.extract_strided_slice %50 {offsets = [0, 0], sizes = [16, 16], strides = [1, 1]} : vector<18x16xf32> to vector<16x16xf32>
    %c1_15 = arith.constant 1 : index
    %52 = memref.load %arg1[%c1_15] : memref<216xf32, #tpu.memory_space<smem>>
    %53 = vector.broadcast %52 : f32 to vector<16x16xf32>
    %54 = arith.mulf %53, %51 : vector<16x16xf32>
    %55 = arith.addf %41, %54 : vector<16x16xf32>
    %c73 = arith.constant 73 : index
    %56 = memref.load %arg1[%c73] : memref<216xf32, #tpu.memory_space<smem>>
    %57 = vector.broadcast %56 : f32 to vector<16x16xf32>
    %58 = arith.mulf %57, %51 : vector<16x16xf32>
    %59 = arith.addf %45, %58 : vector<16x16xf32>
    %c145 = arith.constant 145 : index
    %60 = memref.load %arg1[%c145] : memref<216xf32, #tpu.memory_space<smem>>
    %61 = vector.broadcast %60 : f32 to vector<16x16xf32>
    %62 = arith.mulf %61, %51 : vector<16x16xf32>
    %63 = arith.addf %49, %62 : vector<16x16xf32>
    %64 = vector.extract_strided_slice %50 {offsets = [1, 0], sizes = [16, 16], strides = [1, 1]} : vector<18x16xf32> to vector<16x16xf32>
    %c4 = arith.constant 4 : index
    %65 = memref.load %arg1[%c4] : memref<216xf32, #tpu.memory_space<smem>>
    %66 = vector.broadcast %65 : f32 to vector<16x16xf32>
    %67 = arith.mulf %66, %64 : vector<16x16xf32>
    %68 = arith.addf %55, %67 : vector<16x16xf32>
    %c76 = arith.constant 76 : index
    %69 = memref.load %arg1[%c76] : memref<216xf32, #tpu.memory_space<smem>>
    %70 = vector.broadcast %69 : f32 to vector<16x16xf32>
    %71 = arith.mulf %70, %64 : vector<16x16xf32>
    %72 = arith.addf %59, %71 : vector<16x16xf32>
    %c148 = arith.constant 148 : index
    %73 = memref.load %arg1[%c148] : memref<216xf32, #tpu.memory_space<smem>>
    %74 = vector.broadcast %73 : f32 to vector<16x16xf32>
    %75 = arith.mulf %74, %64 : vector<16x16xf32>
    %76 = arith.addf %63, %75 : vector<16x16xf32>
    %77 = vector.extract_strided_slice %50 {offsets = [2, 0], sizes = [16, 16], strides = [1, 1]} : vector<18x16xf32> to vector<16x16xf32>
    %c7 = arith.constant 7 : index
    %78 = memref.load %arg1[%c7] : memref<216xf32, #tpu.memory_space<smem>>
    %79 = vector.broadcast %78 : f32 to vector<16x16xf32>
    %80 = arith.mulf %79, %77 : vector<16x16xf32>
    %81 = arith.addf %68, %80 : vector<16x16xf32>
    %c79 = arith.constant 79 : index
    %82 = memref.load %arg1[%c79] : memref<216xf32, #tpu.memory_space<smem>>
    %83 = vector.broadcast %82 : f32 to vector<16x16xf32>
    %84 = arith.mulf %83, %77 : vector<16x16xf32>
    %85 = arith.addf %72, %84 : vector<16x16xf32>
    %c151 = arith.constant 151 : index
    %86 = memref.load %arg1[%c151] : memref<216xf32, #tpu.memory_space<smem>>
    %87 = vector.broadcast %86 : f32 to vector<16x16xf32>
    %88 = arith.mulf %87, %77 : vector<16x16xf32>
    %89 = arith.addf %76, %88 : vector<16x16xf32>
    %90 = vector.extract_strided_slice %9 {offsets = [0, 2], sizes = [18, 16], strides = [1, 1]} : vector<18x18xf32> to vector<18x16xf32>
    %91 = vector.extract_strided_slice %90 {offsets = [0, 0], sizes = [16, 16], strides = [1, 1]} : vector<18x16xf32> to vector<16x16xf32>
    %c2 = arith.constant 2 : index
    %92 = memref.load %arg1[%c2] : memref<216xf32, #tpu.memory_space<smem>>
    %93 = vector.broadcast %92 : f32 to vector<16x16xf32>
    %94 = arith.mulf %93, %91 : vector<16x16xf32>
    %95 = arith.addf %81, %94 : vector<16x16xf32>
    %c74 = arith.constant 74 : index
    %96 = memref.load %arg1[%c74] : memref<216xf32, #tpu.memory_space<smem>>
    %97 = vector.broadcast %96 : f32 to vector<16x16xf32>
    %98 = arith.mulf %97, %91 : vector<16x16xf32>
    %99 = arith.addf %85, %98 : vector<16x16xf32>
    %c146 = arith.constant 146 : index
    %100 = memref.load %arg1[%c146] : memref<216xf32, #tpu.memory_space<smem>>
    %101 = vector.broadcast %100 : f32 to vector<16x16xf32>
    %102 = arith.mulf %101, %91 : vector<16x16xf32>
    %103 = arith.addf %89, %102 : vector<16x16xf32>
    %104 = vector.extract_strided_slice %90 {offsets = [1, 0], sizes = [16, 16], strides = [1, 1]} : vector<18x16xf32> to vector<16x16xf32>
    %c5 = arith.constant 5 : index
    %105 = memref.load %arg1[%c5] : memref<216xf32, #tpu.memory_space<smem>>
    %106 = vector.broadcast %105 : f32 to vector<16x16xf32>
    %107 = arith.mulf %106, %104 : vector<16x16xf32>
    %108 = arith.addf %95, %107 : vector<16x16xf32>
    %c77 = arith.constant 77 : index
    %109 = memref.load %arg1[%c77] : memref<216xf32, #tpu.memory_space<smem>>
    %110 = vector.broadcast %109 : f32 to vector<16x16xf32>
    %111 = arith.mulf %110, %104 : vector<16x16xf32>
    %112 = arith.addf %99, %111 : vector<16x16xf32>
    %c149 = arith.constant 149 : index
    %113 = memref.load %arg1[%c149] : memref<216xf32, #tpu.memory_space<smem>>
    %114 = vector.broadcast %113 : f32 to vector<16x16xf32>
    %115 = arith.mulf %114, %104 : vector<16x16xf32>
    %116 = arith.addf %103, %115 : vector<16x16xf32>
    %117 = vector.extract_strided_slice %90 {offsets = [2, 0], sizes = [16, 16], strides = [1, 1]} : vector<18x16xf32> to vector<16x16xf32>
    %c8 = arith.constant 8 : index
    %118 = memref.load %arg1[%c8] : memref<216xf32, #tpu.memory_space<smem>>
    %119 = vector.broadcast %118 : f32 to vector<16x16xf32>
    %120 = arith.mulf %119, %117 : vector<16x16xf32>
    %121 = arith.addf %108, %120 : vector<16x16xf32>
    %c80 = arith.constant 80 : index
    %122 = memref.load %arg1[%c80] : memref<216xf32, #tpu.memory_space<smem>>
    %123 = vector.broadcast %122 : f32 to vector<16x16xf32>
    %124 = arith.mulf %123, %117 : vector<16x16xf32>
    %125 = arith.addf %112, %124 : vector<16x16xf32>
    %c152 = arith.constant 152 : index
    %126 = memref.load %arg1[%c152] : memref<216xf32, #tpu.memory_space<smem>>
    %127 = vector.broadcast %126 : f32 to vector<16x16xf32>
    %128 = arith.mulf %127, %117 : vector<16x16xf32>
    %129 = arith.addf %116, %128 : vector<16x16xf32>
    %c1_16 = arith.constant 1 : index
    %c0_17 = arith.constant 0 : index
    %c0_18 = arith.constant 0 : index
    %130 = vector.load %arg4[%c1_16, %c0_17, %c0_18] : memref<8x18x18xf32, #tpu.memory_space<vmem>>, vector<1x18x18xf32>
    %131 = vector.shape_cast %130 : vector<1x18x18xf32> to vector<18x18xf32>
    %132 = vector.extract_strided_slice %131 {offsets = [0, 0], sizes = [18, 16], strides = [1, 1]} : vector<18x18xf32> to vector<18x16xf32>
    %133 = vector.extract_strided_slice %132 {offsets = [0, 0], sizes = [16, 16], strides = [1, 1]} : vector<18x16xf32> to vector<16x16xf32>
    %c9 = arith.constant 9 : index
    %134 = memref.load %arg1[%c9] : memref<216xf32, #tpu.memory_space<smem>>
    %135 = vector.broadcast %134 : f32 to vector<16x16xf32>
    %136 = arith.mulf %135, %133 : vector<16x16xf32>
    %137 = arith.addf %121, %136 : vector<16x16xf32>
    %c81 = arith.constant 81 : index
    %138 = memref.load %arg1[%c81] : memref<216xf32, #tpu.memory_space<smem>>
    %139 = vector.broadcast %138 : f32 to vector<16x16xf32>
    %140 = arith.mulf %139, %133 : vector<16x16xf32>
    %141 = arith.addf %125, %140 : vector<16x16xf32>
    %c153 = arith.constant 153 : index
    %142 = memref.load %arg1[%c153] : memref<216xf32, #tpu.memory_space<smem>>
    %143 = vector.broadcast %142 : f32 to vector<16x16xf32>
    %144 = arith.mulf %143, %133 : vector<16x16xf32>
    %145 = arith.addf %129, %144 : vector<16x16xf32>
    %146 = vector.extract_strided_slice %132 {offsets = [1, 0], sizes = [16, 16], strides = [1, 1]} : vector<18x16xf32> to vector<16x16xf32>
    %c12 = arith.constant 12 : index
    %147 = memref.load %arg1[%c12] : memref<216xf32, #tpu.memory_space<smem>>
    %148 = vector.broadcast %147 : f32 to vector<16x16xf32>
    %149 = arith.mulf %148, %146 : vector<16x16xf32>
    %150 = arith.addf %137, %149 : vector<16x16xf32>
    %c84 = arith.constant 84 : index
    %151 = memref.load %arg1[%c84] : memref<216xf32, #tpu.memory_space<smem>>
    %152 = vector.broadcast %151 : f32 to vector<16x16xf32>
    %153 = arith.mulf %152, %146 : vector<16x16xf32>
    %154 = arith.addf %141, %153 : vector<16x16xf32>
    %c156 = arith.constant 156 : index
    %155 = memref.load %arg1[%c156] : memref<216xf32, #tpu.memory_space<smem>>
    %156 = vector.broadcast %155 : f32 to vector<16x16xf32>
    %157 = arith.mulf %156, %146 : vector<16x16xf32>
    %158 = arith.addf %145, %157 : vector<16x16xf32>
    %159 = vector.extract_strided_slice %132 {offsets = [2, 0], sizes = [16, 16], strides = [1, 1]} : vector<18x16xf32> to vector<16x16xf32>
    %c15 = arith.constant 15 : index
    %160 = memref.load %arg1[%c15] : memref<216xf32, #tpu.memory_space<smem>>
    %161 = vector.broadcast %160 : f32 to vector<16x16xf32>
    %162 = arith.mulf %161, %159 : vector<16x16xf32>
    %163 = arith.addf %150, %162 : vector<16x16xf32>
    %c87 = arith.constant 87 : index
    %164 = memref.load %arg1[%c87] : memref<216xf32, #tpu.memory_space<smem>>
    %165 = vector.broadcast %164 : f32 to vector<16x16xf32>
    %166 = arith.mulf %165, %159 : vector<16x16xf32>
    %167 = arith.addf %154, %166 : vector<16x16xf32>
    %c159 = arith.constant 159 : index
    %168 = memref.load %arg1[%c159] : memref<216xf32, #tpu.memory_space<smem>>
    %169 = vector.broadcast %168 : f32 to vector<16x16xf32>
    %170 = arith.mulf %169, %159 : vector<16x16xf32>
    %171 = arith.addf %158, %170 : vector<16x16xf32>
    %172 = vector.extract_strided_slice %131 {offsets = [0, 1], sizes = [18, 16], strides = [1, 1]} : vector<18x18xf32> to vector<18x16xf32>
    %173 = vector.extract_strided_slice %172 {offsets = [0, 0], sizes = [16, 16], strides = [1, 1]} : vector<18x16xf32> to vector<16x16xf32>
    %c10 = arith.constant 10 : index
    %174 = memref.load %arg1[%c10] : memref<216xf32, #tpu.memory_space<smem>>
    %175 = vector.broadcast %174 : f32 to vector<16x16xf32>
    %176 = arith.mulf %175, %173 : vector<16x16xf32>
    %177 = arith.addf %163, %176 : vector<16x16xf32>
    %c82 = arith.constant 82 : index
    %178 = memref.load %arg1[%c82] : memref<216xf32, #tpu.memory_space<smem>>
    %179 = vector.broadcast %178 : f32 to vector<16x16xf32>
    %180 = arith.mulf %179, %173 : vector<16x16xf32>
    %181 = arith.addf %167, %180 : vector<16x16xf32>
    %c154 = arith.constant 154 : index
    %182 = memref.load %arg1[%c154] : memref<216xf32, #tpu.memory_space<smem>>
    %183 = vector.broadcast %182 : f32 to vector<16x16xf32>
    %184 = arith.mulf %183, %173 : vector<16x16xf32>
    %185 = arith.addf %171, %184 : vector<16x16xf32>
    %186 = vector.extract_strided_slice %172 {offsets = [1, 0], sizes = [16, 16], strides = [1, 1]} : vector<18x16xf32> to vector<16x16xf32>
    %c13 = arith.constant 13 : index
    %187 = memref.load %arg1[%c13] : memref<216xf32, #tpu.memory_space<smem>>
    %188 = vector.broadcast %187 : f32 to vector<16x16xf32>
    %189 = arith.mulf %188, %186 : vector<16x16xf32>
    %190 = arith.addf %177, %189 : vector<16x16xf32>
    %c85 = arith.constant 85 : index
    %191 = memref.load %arg1[%c85] : memref<216xf32, #tpu.memory_space<smem>>
    %192 = vector.broadcast %191 : f32 to vector<16x16xf32>
    %193 = arith.mulf %192, %186 : vector<16x16xf32>
    %194 = arith.addf %181, %193 : vector<16x16xf32>
    %c157 = arith.constant 157 : index
    %195 = memref.load %arg1[%c157] : memref<216xf32, #tpu.memory_space<smem>>
    %196 = vector.broadcast %195 : f32 to vector<16x16xf32>
    %197 = arith.mulf %196, %186 : vector<16x16xf32>
    %198 = arith.addf %185, %197 : vector<16x16xf32>
    %199 = vector.extract_strided_slice %172 {offsets = [2, 0], sizes = [16, 16], strides = [1, 1]} : vector<18x16xf32> to vector<16x16xf32>
    %c16 = arith.constant 16 : index
    %200 = memref.load %arg1[%c16] : memref<216xf32, #tpu.memory_space<smem>>
    %201 = vector.broadcast %200 : f32 to vector<16x16xf32>
    %202 = arith.mulf %201, %199 : vector<16x16xf32>
    %203 = arith.addf %190, %202 : vector<16x16xf32>
    %c88 = arith.constant 88 : index
    %204 = memref.load %arg1[%c88] : memref<216xf32, #tpu.memory_space<smem>>
    %205 = vector.broadcast %204 : f32 to vector<16x16xf32>
    %206 = arith.mulf %205, %199 : vector<16x16xf32>
    %207 = arith.addf %194, %206 : vector<16x16xf32>
    %c160 = arith.constant 160 : index
    %208 = memref.load %arg1[%c160] : memref<216xf32, #tpu.memory_space<smem>>
    %209 = vector.broadcast %208 : f32 to vector<16x16xf32>
    %210 = arith.mulf %209, %199 : vector<16x16xf32>
    %211 = arith.addf %198, %210 : vector<16x16xf32>
    %212 = vector.extract_strided_slice %131 {offsets = [0, 2], sizes = [18, 16], strides = [1, 1]} : vector<18x18xf32> to vector<18x16xf32>
    %213 = vector.extract_strided_slice %212 {offsets = [0, 0], sizes = [16, 16], strides = [1, 1]} : vector<18x16xf32> to vector<16x16xf32>
    %c11 = arith.constant 11 : index
    %214 = memref.load %arg1[%c11] : memref<216xf32, #tpu.memory_space<smem>>
    %215 = vector.broadcast %214 : f32 to vector<16x16xf32>
    %216 = arith.mulf %215, %213 : vector<16x16xf32>
    %217 = arith.addf %203, %216 : vector<16x16xf32>
    %c83 = arith.constant 83 : index
    %218 = memref.load %arg1[%c83] : memref<216xf32, #tpu.memory_space<smem>>
    %219 = vector.broadcast %218 : f32 to vector<16x16xf32>
    %220 = arith.mulf %219, %213 : vector<16x16xf32>
    %221 = arith.addf %207, %220 : vector<16x16xf32>
    %c155 = arith.constant 155 : index
    %222 = memref.load %arg1[%c155] : memref<216xf32, #tpu.memory_space<smem>>
    %223 = vector.broadcast %222 : f32 to vector<16x16xf32>
    %224 = arith.mulf %223, %213 : vector<16x16xf32>
    %225 = arith.addf %211, %224 : vector<16x16xf32>
    %226 = vector.extract_strided_slice %212 {offsets = [1, 0], sizes = [16, 16], strides = [1, 1]} : vector<18x16xf32> to vector<16x16xf32>
    %c14 = arith.constant 14 : index
    %227 = memref.load %arg1[%c14] : memref<216xf32, #tpu.memory_space<smem>>
    %228 = vector.broadcast %227 : f32 to vector<16x16xf32>
    %229 = arith.mulf %228, %226 : vector<16x16xf32>
    %230 = arith.addf %217, %229 : vector<16x16xf32>
    %c86 = arith.constant 86 : index
    %231 = memref.load %arg1[%c86] : memref<216xf32, #tpu.memory_space<smem>>
    %232 = vector.broadcast %231 : f32 to vector<16x16xf32>
    %233 = arith.mulf %232, %226 : vector<16x16xf32>
    %234 = arith.addf %221, %233 : vector<16x16xf32>
    %c158 = arith.constant 158 : index
    %235 = memref.load %arg1[%c158] : memref<216xf32, #tpu.memory_space<smem>>
    %236 = vector.broadcast %235 : f32 to vector<16x16xf32>
    %237 = arith.mulf %236, %226 : vector<16x16xf32>
    %238 = arith.addf %225, %237 : vector<16x16xf32>
    %239 = vector.extract_strided_slice %212 {offsets = [2, 0], sizes = [16, 16], strides = [1, 1]} : vector<18x16xf32> to vector<16x16xf32>
    %c17 = arith.constant 17 : index
    %240 = memref.load %arg1[%c17] : memref<216xf32, #tpu.memory_space<smem>>
    %241 = vector.broadcast %240 : f32 to vector<16x16xf32>
    %242 = arith.mulf %241, %239 : vector<16x16xf32>
    %243 = arith.addf %230, %242 : vector<16x16xf32>
    %c89 = arith.constant 89 : index
    %244 = memref.load %arg1[%c89] : memref<216xf32, #tpu.memory_space<smem>>
    %245 = vector.broadcast %244 : f32 to vector<16x16xf32>
    %246 = arith.mulf %245, %239 : vector<16x16xf32>
    %247 = arith.addf %234, %246 : vector<16x16xf32>
    %c161 = arith.constant 161 : index
    %248 = memref.load %arg1[%c161] : memref<216xf32, #tpu.memory_space<smem>>
    %249 = vector.broadcast %248 : f32 to vector<16x16xf32>
    %250 = arith.mulf %249, %239 : vector<16x16xf32>
    %251 = arith.addf %238, %250 : vector<16x16xf32>
    %c2_19 = arith.constant 2 : index
    %c0_20 = arith.constant 0 : index
    %c0_21 = arith.constant 0 : index
    %252 = vector.load %arg4[%c2_19, %c0_20, %c0_21] : memref<8x18x18xf32, #tpu.memory_space<vmem>>, vector<1x18x18xf32>
    %253 = vector.shape_cast %252 : vector<1x18x18xf32> to vector<18x18xf32>
    %254 = vector.extract_strided_slice %253 {offsets = [0, 0], sizes = [18, 16], strides = [1, 1]} : vector<18x18xf32> to vector<18x16xf32>
    %255 = vector.extract_strided_slice %254 {offsets = [0, 0], sizes = [16, 16], strides = [1, 1]} : vector<18x16xf32> to vector<16x16xf32>
    %c18 = arith.constant 18 : index
    %256 = memref.load %arg1[%c18] : memref<216xf32, #tpu.memory_space<smem>>
    %257 = vector.broadcast %256 : f32 to vector<16x16xf32>
    %258 = arith.mulf %257, %255 : vector<16x16xf32>
    %259 = arith.addf %243, %258 : vector<16x16xf32>
    %c90 = arith.constant 90 : index
    %260 = memref.load %arg1[%c90] : memref<216xf32, #tpu.memory_space<smem>>
    %261 = vector.broadcast %260 : f32 to vector<16x16xf32>
    %262 = arith.mulf %261, %255 : vector<16x16xf32>
    %263 = arith.addf %247, %262 : vector<16x16xf32>
    %c162 = arith.constant 162 : index
    %264 = memref.load %arg1[%c162] : memref<216xf32, #tpu.memory_space<smem>>
    %265 = vector.broadcast %264 : f32 to vector<16x16xf32>
    %266 = arith.mulf %265, %255 : vector<16x16xf32>
    %267 = arith.addf %251, %266 : vector<16x16xf32>
    %268 = vector.extract_strided_slice %254 {offsets = [1, 0], sizes = [16, 16], strides = [1, 1]} : vector<18x16xf32> to vector<16x16xf32>
    %c21 = arith.constant 21 : index
    %269 = memref.load %arg1[%c21] : memref<216xf32, #tpu.memory_space<smem>>
    %270 = vector.broadcast %269 : f32 to vector<16x16xf32>
    %271 = arith.mulf %270, %268 : vector<16x16xf32>
    %272 = arith.addf %259, %271 : vector<16x16xf32>
    %c93 = arith.constant 93 : index
    %273 = memref.load %arg1[%c93] : memref<216xf32, #tpu.memory_space<smem>>
    %274 = vector.broadcast %273 : f32 to vector<16x16xf32>
    %275 = arith.mulf %274, %268 : vector<16x16xf32>
    %276 = arith.addf %263, %275 : vector<16x16xf32>
    %c165 = arith.constant 165 : index
    %277 = memref.load %arg1[%c165] : memref<216xf32, #tpu.memory_space<smem>>
    %278 = vector.broadcast %277 : f32 to vector<16x16xf32>
    %279 = arith.mulf %278, %268 : vector<16x16xf32>
    %280 = arith.addf %267, %279 : vector<16x16xf32>
    %281 = vector.extract_strided_slice %254 {offsets = [2, 0], sizes = [16, 16], strides = [1, 1]} : vector<18x16xf32> to vector<16x16xf32>
    %c24 = arith.constant 24 : index
    %282 = memref.load %arg1[%c24] : memref<216xf32, #tpu.memory_space<smem>>
    %283 = vector.broadcast %282 : f32 to vector<16x16xf32>
    %284 = arith.mulf %283, %281 : vector<16x16xf32>
    %285 = arith.addf %272, %284 : vector<16x16xf32>
    %c96 = arith.constant 96 : index
    %286 = memref.load %arg1[%c96] : memref<216xf32, #tpu.memory_space<smem>>
    %287 = vector.broadcast %286 : f32 to vector<16x16xf32>
    %288 = arith.mulf %287, %281 : vector<16x16xf32>
    %289 = arith.addf %276, %288 : vector<16x16xf32>
    %c168 = arith.constant 168 : index
    %290 = memref.load %arg1[%c168] : memref<216xf32, #tpu.memory_space<smem>>
    %291 = vector.broadcast %290 : f32 to vector<16x16xf32>
    %292 = arith.mulf %291, %281 : vector<16x16xf32>
    %293 = arith.addf %280, %292 : vector<16x16xf32>
    %294 = vector.extract_strided_slice %253 {offsets = [0, 1], sizes = [18, 16], strides = [1, 1]} : vector<18x18xf32> to vector<18x16xf32>
    %295 = vector.extract_strided_slice %294 {offsets = [0, 0], sizes = [16, 16], strides = [1, 1]} : vector<18x16xf32> to vector<16x16xf32>
    %c19 = arith.constant 19 : index
    %296 = memref.load %arg1[%c19] : memref<216xf32, #tpu.memory_space<smem>>
    %297 = vector.broadcast %296 : f32 to vector<16x16xf32>
    %298 = arith.mulf %297, %295 : vector<16x16xf32>
    %299 = arith.addf %285, %298 : vector<16x16xf32>
    %c91 = arith.constant 91 : index
    %300 = memref.load %arg1[%c91] : memref<216xf32, #tpu.memory_space<smem>>
    %301 = vector.broadcast %300 : f32 to vector<16x16xf32>
    %302 = arith.mulf %301, %295 : vector<16x16xf32>
    %303 = arith.addf %289, %302 : vector<16x16xf32>
    %c163 = arith.constant 163 : index
    %304 = memref.load %arg1[%c163] : memref<216xf32, #tpu.memory_space<smem>>
    %305 = vector.broadcast %304 : f32 to vector<16x16xf32>
    %306 = arith.mulf %305, %295 : vector<16x16xf32>
    %307 = arith.addf %293, %306 : vector<16x16xf32>
    %308 = vector.extract_strided_slice %294 {offsets = [1, 0], sizes = [16, 16], strides = [1, 1]} : vector<18x16xf32> to vector<16x16xf32>
    %c22 = arith.constant 22 : index
    %309 = memref.load %arg1[%c22] : memref<216xf32, #tpu.memory_space<smem>>
    %310 = vector.broadcast %309 : f32 to vector<16x16xf32>
    %311 = arith.mulf %310, %308 : vector<16x16xf32>
    %312 = arith.addf %299, %311 : vector<16x16xf32>
    %c94 = arith.constant 94 : index
    %313 = memref.load %arg1[%c94] : memref<216xf32, #tpu.memory_space<smem>>
    %314 = vector.broadcast %313 : f32 to vector<16x16xf32>
    %315 = arith.mulf %314, %308 : vector<16x16xf32>
    %316 = arith.addf %303, %315 : vector<16x16xf32>
    %c166 = arith.constant 166 : index
    %317 = memref.load %arg1[%c166] : memref<216xf32, #tpu.memory_space<smem>>
    %318 = vector.broadcast %317 : f32 to vector<16x16xf32>
    %319 = arith.mulf %318, %308 : vector<16x16xf32>
    %320 = arith.addf %307, %319 : vector<16x16xf32>
    %321 = vector.extract_strided_slice %294 {offsets = [2, 0], sizes = [16, 16], strides = [1, 1]} : vector<18x16xf32> to vector<16x16xf32>
    %c25 = arith.constant 25 : index
    %322 = memref.load %arg1[%c25] : memref<216xf32, #tpu.memory_space<smem>>
    %323 = vector.broadcast %322 : f32 to vector<16x16xf32>
    %324 = arith.mulf %323, %321 : vector<16x16xf32>
    %325 = arith.addf %312, %324 : vector<16x16xf32>
    %c97 = arith.constant 97 : index
    %326 = memref.load %arg1[%c97] : memref<216xf32, #tpu.memory_space<smem>>
    %327 = vector.broadcast %326 : f32 to vector<16x16xf32>
    %328 = arith.mulf %327, %321 : vector<16x16xf32>
    %329 = arith.addf %316, %328 : vector<16x16xf32>
    %c169 = arith.constant 169 : index
    %330 = memref.load %arg1[%c169] : memref<216xf32, #tpu.memory_space<smem>>
    %331 = vector.broadcast %330 : f32 to vector<16x16xf32>
    %332 = arith.mulf %331, %321 : vector<16x16xf32>
    %333 = arith.addf %320, %332 : vector<16x16xf32>
    %334 = vector.extract_strided_slice %253 {offsets = [0, 2], sizes = [18, 16], strides = [1, 1]} : vector<18x18xf32> to vector<18x16xf32>
    %335 = vector.extract_strided_slice %334 {offsets = [0, 0], sizes = [16, 16], strides = [1, 1]} : vector<18x16xf32> to vector<16x16xf32>
    %c20 = arith.constant 20 : index
    %336 = memref.load %arg1[%c20] : memref<216xf32, #tpu.memory_space<smem>>
    %337 = vector.broadcast %336 : f32 to vector<16x16xf32>
    %338 = arith.mulf %337, %335 : vector<16x16xf32>
    %339 = arith.addf %325, %338 : vector<16x16xf32>
    %c92 = arith.constant 92 : index
    %340 = memref.load %arg1[%c92] : memref<216xf32, #tpu.memory_space<smem>>
    %341 = vector.broadcast %340 : f32 to vector<16x16xf32>
    %342 = arith.mulf %341, %335 : vector<16x16xf32>
    %343 = arith.addf %329, %342 : vector<16x16xf32>
    %c164 = arith.constant 164 : index
    %344 = memref.load %arg1[%c164] : memref<216xf32, #tpu.memory_space<smem>>
    %345 = vector.broadcast %344 : f32 to vector<16x16xf32>
    %346 = arith.mulf %345, %335 : vector<16x16xf32>
    %347 = arith.addf %333, %346 : vector<16x16xf32>
    %348 = vector.extract_strided_slice %334 {offsets = [1, 0], sizes = [16, 16], strides = [1, 1]} : vector<18x16xf32> to vector<16x16xf32>
    %c23 = arith.constant 23 : index
    %349 = memref.load %arg1[%c23] : memref<216xf32, #tpu.memory_space<smem>>
    %350 = vector.broadcast %349 : f32 to vector<16x16xf32>
    %351 = arith.mulf %350, %348 : vector<16x16xf32>
    %352 = arith.addf %339, %351 : vector<16x16xf32>
    %c95 = arith.constant 95 : index
    %353 = memref.load %arg1[%c95] : memref<216xf32, #tpu.memory_space<smem>>
    %354 = vector.broadcast %353 : f32 to vector<16x16xf32>
    %355 = arith.mulf %354, %348 : vector<16x16xf32>
    %356 = arith.addf %343, %355 : vector<16x16xf32>
    %c167 = arith.constant 167 : index
    %357 = memref.load %arg1[%c167] : memref<216xf32, #tpu.memory_space<smem>>
    %358 = vector.broadcast %357 : f32 to vector<16x16xf32>
    %359 = arith.mulf %358, %348 : vector<16x16xf32>
    %360 = arith.addf %347, %359 : vector<16x16xf32>
    %361 = vector.extract_strided_slice %334 {offsets = [2, 0], sizes = [16, 16], strides = [1, 1]} : vector<18x16xf32> to vector<16x16xf32>
    %c26 = arith.constant 26 : index
    %362 = memref.load %arg1[%c26] : memref<216xf32, #tpu.memory_space<smem>>
    %363 = vector.broadcast %362 : f32 to vector<16x16xf32>
    %364 = arith.mulf %363, %361 : vector<16x16xf32>
    %365 = arith.addf %352, %364 : vector<16x16xf32>
    %c98 = arith.constant 98 : index
    %366 = memref.load %arg1[%c98] : memref<216xf32, #tpu.memory_space<smem>>
    %367 = vector.broadcast %366 : f32 to vector<16x16xf32>
    %368 = arith.mulf %367, %361 : vector<16x16xf32>
    %369 = arith.addf %356, %368 : vector<16x16xf32>
    %c170 = arith.constant 170 : index
    %370 = memref.load %arg1[%c170] : memref<216xf32, #tpu.memory_space<smem>>
    %371 = vector.broadcast %370 : f32 to vector<16x16xf32>
    %372 = arith.mulf %371, %361 : vector<16x16xf32>
    %373 = arith.addf %360, %372 : vector<16x16xf32>
    %c3_22 = arith.constant 3 : index
    %c0_23 = arith.constant 0 : index
    %c0_24 = arith.constant 0 : index
    %374 = vector.load %arg4[%c3_22, %c0_23, %c0_24] : memref<8x18x18xf32, #tpu.memory_space<vmem>>, vector<1x18x18xf32>
    %375 = vector.shape_cast %374 : vector<1x18x18xf32> to vector<18x18xf32>
    %376 = vector.extract_strided_slice %375 {offsets = [0, 0], sizes = [18, 16], strides = [1, 1]} : vector<18x18xf32> to vector<18x16xf32>
    %377 = vector.extract_strided_slice %376 {offsets = [0, 0], sizes = [16, 16], strides = [1, 1]} : vector<18x16xf32> to vector<16x16xf32>
    %c27 = arith.constant 27 : index
    %378 = memref.load %arg1[%c27] : memref<216xf32, #tpu.memory_space<smem>>
    %379 = vector.broadcast %378 : f32 to vector<16x16xf32>
    %380 = arith.mulf %379, %377 : vector<16x16xf32>
    %381 = arith.addf %365, %380 : vector<16x16xf32>
    %c99 = arith.constant 99 : index
    %382 = memref.load %arg1[%c99] : memref<216xf32, #tpu.memory_space<smem>>
    %383 = vector.broadcast %382 : f32 to vector<16x16xf32>
    %384 = arith.mulf %383, %377 : vector<16x16xf32>
    %385 = arith.addf %369, %384 : vector<16x16xf32>
    %c171 = arith.constant 171 : index
    %386 = memref.load %arg1[%c171] : memref<216xf32, #tpu.memory_space<smem>>
    %387 = vector.broadcast %386 : f32 to vector<16x16xf32>
    %388 = arith.mulf %387, %377 : vector<16x16xf32>
    %389 = arith.addf %373, %388 : vector<16x16xf32>
    %390 = vector.extract_strided_slice %376 {offsets = [1, 0], sizes = [16, 16], strides = [1, 1]} : vector<18x16xf32> to vector<16x16xf32>
    %c30 = arith.constant 30 : index
    %391 = memref.load %arg1[%c30] : memref<216xf32, #tpu.memory_space<smem>>
    %392 = vector.broadcast %391 : f32 to vector<16x16xf32>
    %393 = arith.mulf %392, %390 : vector<16x16xf32>
    %394 = arith.addf %381, %393 : vector<16x16xf32>
    %c102 = arith.constant 102 : index
    %395 = memref.load %arg1[%c102] : memref<216xf32, #tpu.memory_space<smem>>
    %396 = vector.broadcast %395 : f32 to vector<16x16xf32>
    %397 = arith.mulf %396, %390 : vector<16x16xf32>
    %398 = arith.addf %385, %397 : vector<16x16xf32>
    %c174 = arith.constant 174 : index
    %399 = memref.load %arg1[%c174] : memref<216xf32, #tpu.memory_space<smem>>
    %400 = vector.broadcast %399 : f32 to vector<16x16xf32>
    %401 = arith.mulf %400, %390 : vector<16x16xf32>
    %402 = arith.addf %389, %401 : vector<16x16xf32>
    %403 = vector.extract_strided_slice %376 {offsets = [2, 0], sizes = [16, 16], strides = [1, 1]} : vector<18x16xf32> to vector<16x16xf32>
    %c33 = arith.constant 33 : index
    %404 = memref.load %arg1[%c33] : memref<216xf32, #tpu.memory_space<smem>>
    %405 = vector.broadcast %404 : f32 to vector<16x16xf32>
    %406 = arith.mulf %405, %403 : vector<16x16xf32>
    %407 = arith.addf %394, %406 : vector<16x16xf32>
    %c105 = arith.constant 105 : index
    %408 = memref.load %arg1[%c105] : memref<216xf32, #tpu.memory_space<smem>>
    %409 = vector.broadcast %408 : f32 to vector<16x16xf32>
    %410 = arith.mulf %409, %403 : vector<16x16xf32>
    %411 = arith.addf %398, %410 : vector<16x16xf32>
    %c177 = arith.constant 177 : index
    %412 = memref.load %arg1[%c177] : memref<216xf32, #tpu.memory_space<smem>>
    %413 = vector.broadcast %412 : f32 to vector<16x16xf32>
    %414 = arith.mulf %413, %403 : vector<16x16xf32>
    %415 = arith.addf %402, %414 : vector<16x16xf32>
    %416 = vector.extract_strided_slice %375 {offsets = [0, 1], sizes = [18, 16], strides = [1, 1]} : vector<18x18xf32> to vector<18x16xf32>
    %417 = vector.extract_strided_slice %416 {offsets = [0, 0], sizes = [16, 16], strides = [1, 1]} : vector<18x16xf32> to vector<16x16xf32>
    %c28 = arith.constant 28 : index
    %418 = memref.load %arg1[%c28] : memref<216xf32, #tpu.memory_space<smem>>
    %419 = vector.broadcast %418 : f32 to vector<16x16xf32>
    %420 = arith.mulf %419, %417 : vector<16x16xf32>
    %421 = arith.addf %407, %420 : vector<16x16xf32>
    %c100 = arith.constant 100 : index
    %422 = memref.load %arg1[%c100] : memref<216xf32, #tpu.memory_space<smem>>
    %423 = vector.broadcast %422 : f32 to vector<16x16xf32>
    %424 = arith.mulf %423, %417 : vector<16x16xf32>
    %425 = arith.addf %411, %424 : vector<16x16xf32>
    %c172 = arith.constant 172 : index
    %426 = memref.load %arg1[%c172] : memref<216xf32, #tpu.memory_space<smem>>
    %427 = vector.broadcast %426 : f32 to vector<16x16xf32>
    %428 = arith.mulf %427, %417 : vector<16x16xf32>
    %429 = arith.addf %415, %428 : vector<16x16xf32>
    %430 = vector.extract_strided_slice %416 {offsets = [1, 0], sizes = [16, 16], strides = [1, 1]} : vector<18x16xf32> to vector<16x16xf32>
    %c31 = arith.constant 31 : index
    %431 = memref.load %arg1[%c31] : memref<216xf32, #tpu.memory_space<smem>>
    %432 = vector.broadcast %431 : f32 to vector<16x16xf32>
    %433 = arith.mulf %432, %430 : vector<16x16xf32>
    %434 = arith.addf %421, %433 : vector<16x16xf32>
    %c103 = arith.constant 103 : index
    %435 = memref.load %arg1[%c103] : memref<216xf32, #tpu.memory_space<smem>>
    %436 = vector.broadcast %435 : f32 to vector<16x16xf32>
    %437 = arith.mulf %436, %430 : vector<16x16xf32>
    %438 = arith.addf %425, %437 : vector<16x16xf32>
    %c175 = arith.constant 175 : index
    %439 = memref.load %arg1[%c175] : memref<216xf32, #tpu.memory_space<smem>>
    %440 = vector.broadcast %439 : f32 to vector<16x16xf32>
    %441 = arith.mulf %440, %430 : vector<16x16xf32>
    %442 = arith.addf %429, %441 : vector<16x16xf32>
    %443 = vector.extract_strided_slice %416 {offsets = [2, 0], sizes = [16, 16], strides = [1, 1]} : vector<18x16xf32> to vector<16x16xf32>
    %c34 = arith.constant 34 : index
    %444 = memref.load %arg1[%c34] : memref<216xf32, #tpu.memory_space<smem>>
    %445 = vector.broadcast %444 : f32 to vector<16x16xf32>
    %446 = arith.mulf %445, %443 : vector<16x16xf32>
    %447 = arith.addf %434, %446 : vector<16x16xf32>
    %c106 = arith.constant 106 : index
    %448 = memref.load %arg1[%c106] : memref<216xf32, #tpu.memory_space<smem>>
    %449 = vector.broadcast %448 : f32 to vector<16x16xf32>
    %450 = arith.mulf %449, %443 : vector<16x16xf32>
    %451 = arith.addf %438, %450 : vector<16x16xf32>
    %c178 = arith.constant 178 : index
    %452 = memref.load %arg1[%c178] : memref<216xf32, #tpu.memory_space<smem>>
    %453 = vector.broadcast %452 : f32 to vector<16x16xf32>
    %454 = arith.mulf %453, %443 : vector<16x16xf32>
    %455 = arith.addf %442, %454 : vector<16x16xf32>
    %456 = vector.extract_strided_slice %375 {offsets = [0, 2], sizes = [18, 16], strides = [1, 1]} : vector<18x18xf32> to vector<18x16xf32>
    %457 = vector.extract_strided_slice %456 {offsets = [0, 0], sizes = [16, 16], strides = [1, 1]} : vector<18x16xf32> to vector<16x16xf32>
    %c29 = arith.constant 29 : index
    %458 = memref.load %arg1[%c29] : memref<216xf32, #tpu.memory_space<smem>>
    %459 = vector.broadcast %458 : f32 to vector<16x16xf32>
    %460 = arith.mulf %459, %457 : vector<16x16xf32>
    %461 = arith.addf %447, %460 : vector<16x16xf32>
    %c101 = arith.constant 101 : index
    %462 = memref.load %arg1[%c101] : memref<216xf32, #tpu.memory_space<smem>>
    %463 = vector.broadcast %462 : f32 to vector<16x16xf32>
    %464 = arith.mulf %463, %457 : vector<16x16xf32>
    %465 = arith.addf %451, %464 : vector<16x16xf32>
    %c173 = arith.constant 173 : index
    %466 = memref.load %arg1[%c173] : memref<216xf32, #tpu.memory_space<smem>>
    %467 = vector.broadcast %466 : f32 to vector<16x16xf32>
    %468 = arith.mulf %467, %457 : vector<16x16xf32>
    %469 = arith.addf %455, %468 : vector<16x16xf32>
    %470 = vector.extract_strided_slice %456 {offsets = [1, 0], sizes = [16, 16], strides = [1, 1]} : vector<18x16xf32> to vector<16x16xf32>
    %c32 = arith.constant 32 : index
    %471 = memref.load %arg1[%c32] : memref<216xf32, #tpu.memory_space<smem>>
    %472 = vector.broadcast %471 : f32 to vector<16x16xf32>
    %473 = arith.mulf %472, %470 : vector<16x16xf32>
    %474 = arith.addf %461, %473 : vector<16x16xf32>
    %c104 = arith.constant 104 : index
    %475 = memref.load %arg1[%c104] : memref<216xf32, #tpu.memory_space<smem>>
    %476 = vector.broadcast %475 : f32 to vector<16x16xf32>
    %477 = arith.mulf %476, %470 : vector<16x16xf32>
    %478 = arith.addf %465, %477 : vector<16x16xf32>
    %c176 = arith.constant 176 : index
    %479 = memref.load %arg1[%c176] : memref<216xf32, #tpu.memory_space<smem>>
    %480 = vector.broadcast %479 : f32 to vector<16x16xf32>
    %481 = arith.mulf %480, %470 : vector<16x16xf32>
    %482 = arith.addf %469, %481 : vector<16x16xf32>
    %483 = vector.extract_strided_slice %456 {offsets = [2, 0], sizes = [16, 16], strides = [1, 1]} : vector<18x16xf32> to vector<16x16xf32>
    %c35 = arith.constant 35 : index
    %484 = memref.load %arg1[%c35] : memref<216xf32, #tpu.memory_space<smem>>
    %485 = vector.broadcast %484 : f32 to vector<16x16xf32>
    %486 = arith.mulf %485, %483 : vector<16x16xf32>
    %487 = arith.addf %474, %486 : vector<16x16xf32>
    %c107 = arith.constant 107 : index
    %488 = memref.load %arg1[%c107] : memref<216xf32, #tpu.memory_space<smem>>
    %489 = vector.broadcast %488 : f32 to vector<16x16xf32>
    %490 = arith.mulf %489, %483 : vector<16x16xf32>
    %491 = arith.addf %478, %490 : vector<16x16xf32>
    %c179 = arith.constant 179 : index
    %492 = memref.load %arg1[%c179] : memref<216xf32, #tpu.memory_space<smem>>
    %493 = vector.broadcast %492 : f32 to vector<16x16xf32>
    %494 = arith.mulf %493, %483 : vector<16x16xf32>
    %495 = arith.addf %482, %494 : vector<16x16xf32>
    %c4_25 = arith.constant 4 : index
    %c0_26 = arith.constant 0 : index
    %c0_27 = arith.constant 0 : index
    %496 = vector.load %arg4[%c4_25, %c0_26, %c0_27] : memref<8x18x18xf32, #tpu.memory_space<vmem>>, vector<1x18x18xf32>
    %497 = vector.shape_cast %496 : vector<1x18x18xf32> to vector<18x18xf32>
    %498 = vector.extract_strided_slice %497 {offsets = [0, 0], sizes = [18, 16], strides = [1, 1]} : vector<18x18xf32> to vector<18x16xf32>
    %499 = vector.extract_strided_slice %498 {offsets = [0, 0], sizes = [16, 16], strides = [1, 1]} : vector<18x16xf32> to vector<16x16xf32>
    %c36 = arith.constant 36 : index
    %500 = memref.load %arg1[%c36] : memref<216xf32, #tpu.memory_space<smem>>
    %501 = vector.broadcast %500 : f32 to vector<16x16xf32>
    %502 = arith.mulf %501, %499 : vector<16x16xf32>
    %503 = arith.addf %487, %502 : vector<16x16xf32>
    %c108 = arith.constant 108 : index
    %504 = memref.load %arg1[%c108] : memref<216xf32, #tpu.memory_space<smem>>
    %505 = vector.broadcast %504 : f32 to vector<16x16xf32>
    %506 = arith.mulf %505, %499 : vector<16x16xf32>
    %507 = arith.addf %491, %506 : vector<16x16xf32>
    %c180 = arith.constant 180 : index
    %508 = memref.load %arg1[%c180] : memref<216xf32, #tpu.memory_space<smem>>
    %509 = vector.broadcast %508 : f32 to vector<16x16xf32>
    %510 = arith.mulf %509, %499 : vector<16x16xf32>
    %511 = arith.addf %495, %510 : vector<16x16xf32>
    %512 = vector.extract_strided_slice %498 {offsets = [1, 0], sizes = [16, 16], strides = [1, 1]} : vector<18x16xf32> to vector<16x16xf32>
    %c39 = arith.constant 39 : index
    %513 = memref.load %arg1[%c39] : memref<216xf32, #tpu.memory_space<smem>>
    %514 = vector.broadcast %513 : f32 to vector<16x16xf32>
    %515 = arith.mulf %514, %512 : vector<16x16xf32>
    %516 = arith.addf %503, %515 : vector<16x16xf32>
    %c111 = arith.constant 111 : index
    %517 = memref.load %arg1[%c111] : memref<216xf32, #tpu.memory_space<smem>>
    %518 = vector.broadcast %517 : f32 to vector<16x16xf32>
    %519 = arith.mulf %518, %512 : vector<16x16xf32>
    %520 = arith.addf %507, %519 : vector<16x16xf32>
    %c183 = arith.constant 183 : index
    %521 = memref.load %arg1[%c183] : memref<216xf32, #tpu.memory_space<smem>>
    %522 = vector.broadcast %521 : f32 to vector<16x16xf32>
    %523 = arith.mulf %522, %512 : vector<16x16xf32>
    %524 = arith.addf %511, %523 : vector<16x16xf32>
    %525 = vector.extract_strided_slice %498 {offsets = [2, 0], sizes = [16, 16], strides = [1, 1]} : vector<18x16xf32> to vector<16x16xf32>
    %c42 = arith.constant 42 : index
    %526 = memref.load %arg1[%c42] : memref<216xf32, #tpu.memory_space<smem>>
    %527 = vector.broadcast %526 : f32 to vector<16x16xf32>
    %528 = arith.mulf %527, %525 : vector<16x16xf32>
    %529 = arith.addf %516, %528 : vector<16x16xf32>
    %c114 = arith.constant 114 : index
    %530 = memref.load %arg1[%c114] : memref<216xf32, #tpu.memory_space<smem>>
    %531 = vector.broadcast %530 : f32 to vector<16x16xf32>
    %532 = arith.mulf %531, %525 : vector<16x16xf32>
    %533 = arith.addf %520, %532 : vector<16x16xf32>
    %c186 = arith.constant 186 : index
    %534 = memref.load %arg1[%c186] : memref<216xf32, #tpu.memory_space<smem>>
    %535 = vector.broadcast %534 : f32 to vector<16x16xf32>
    %536 = arith.mulf %535, %525 : vector<16x16xf32>
    %537 = arith.addf %524, %536 : vector<16x16xf32>
    %538 = vector.extract_strided_slice %497 {offsets = [0, 1], sizes = [18, 16], strides = [1, 1]} : vector<18x18xf32> to vector<18x16xf32>
    %539 = vector.extract_strided_slice %538 {offsets = [0, 0], sizes = [16, 16], strides = [1, 1]} : vector<18x16xf32> to vector<16x16xf32>
    %c37 = arith.constant 37 : index
    %540 = memref.load %arg1[%c37] : memref<216xf32, #tpu.memory_space<smem>>
    %541 = vector.broadcast %540 : f32 to vector<16x16xf32>
    %542 = arith.mulf %541, %539 : vector<16x16xf32>
    %543 = arith.addf %529, %542 : vector<16x16xf32>
    %c109 = arith.constant 109 : index
    %544 = memref.load %arg1[%c109] : memref<216xf32, #tpu.memory_space<smem>>
    %545 = vector.broadcast %544 : f32 to vector<16x16xf32>
    %546 = arith.mulf %545, %539 : vector<16x16xf32>
    %547 = arith.addf %533, %546 : vector<16x16xf32>
    %c181 = arith.constant 181 : index
    %548 = memref.load %arg1[%c181] : memref<216xf32, #tpu.memory_space<smem>>
    %549 = vector.broadcast %548 : f32 to vector<16x16xf32>
    %550 = arith.mulf %549, %539 : vector<16x16xf32>
    %551 = arith.addf %537, %550 : vector<16x16xf32>
    %552 = vector.extract_strided_slice %538 {offsets = [1, 0], sizes = [16, 16], strides = [1, 1]} : vector<18x16xf32> to vector<16x16xf32>
    %c40 = arith.constant 40 : index
    %553 = memref.load %arg1[%c40] : memref<216xf32, #tpu.memory_space<smem>>
    %554 = vector.broadcast %553 : f32 to vector<16x16xf32>
    %555 = arith.mulf %554, %552 : vector<16x16xf32>
    %556 = arith.addf %543, %555 : vector<16x16xf32>
    %c112 = arith.constant 112 : index
    %557 = memref.load %arg1[%c112] : memref<216xf32, #tpu.memory_space<smem>>
    %558 = vector.broadcast %557 : f32 to vector<16x16xf32>
    %559 = arith.mulf %558, %552 : vector<16x16xf32>
    %560 = arith.addf %547, %559 : vector<16x16xf32>
    %c184 = arith.constant 184 : index
    %561 = memref.load %arg1[%c184] : memref<216xf32, #tpu.memory_space<smem>>
    %562 = vector.broadcast %561 : f32 to vector<16x16xf32>
    %563 = arith.mulf %562, %552 : vector<16x16xf32>
    %564 = arith.addf %551, %563 : vector<16x16xf32>
    %565 = vector.extract_strided_slice %538 {offsets = [2, 0], sizes = [16, 16], strides = [1, 1]} : vector<18x16xf32> to vector<16x16xf32>
    %c43 = arith.constant 43 : index
    %566 = memref.load %arg1[%c43] : memref<216xf32, #tpu.memory_space<smem>>
    %567 = vector.broadcast %566 : f32 to vector<16x16xf32>
    %568 = arith.mulf %567, %565 : vector<16x16xf32>
    %569 = arith.addf %556, %568 : vector<16x16xf32>
    %c115 = arith.constant 115 : index
    %570 = memref.load %arg1[%c115] : memref<216xf32, #tpu.memory_space<smem>>
    %571 = vector.broadcast %570 : f32 to vector<16x16xf32>
    %572 = arith.mulf %571, %565 : vector<16x16xf32>
    %573 = arith.addf %560, %572 : vector<16x16xf32>
    %c187 = arith.constant 187 : index
    %574 = memref.load %arg1[%c187] : memref<216xf32, #tpu.memory_space<smem>>
    %575 = vector.broadcast %574 : f32 to vector<16x16xf32>
    %576 = arith.mulf %575, %565 : vector<16x16xf32>
    %577 = arith.addf %564, %576 : vector<16x16xf32>
    %578 = vector.extract_strided_slice %497 {offsets = [0, 2], sizes = [18, 16], strides = [1, 1]} : vector<18x18xf32> to vector<18x16xf32>
    %579 = vector.extract_strided_slice %578 {offsets = [0, 0], sizes = [16, 16], strides = [1, 1]} : vector<18x16xf32> to vector<16x16xf32>
    %c38 = arith.constant 38 : index
    %580 = memref.load %arg1[%c38] : memref<216xf32, #tpu.memory_space<smem>>
    %581 = vector.broadcast %580 : f32 to vector<16x16xf32>
    %582 = arith.mulf %581, %579 : vector<16x16xf32>
    %583 = arith.addf %569, %582 : vector<16x16xf32>
    %c110 = arith.constant 110 : index
    %584 = memref.load %arg1[%c110] : memref<216xf32, #tpu.memory_space<smem>>
    %585 = vector.broadcast %584 : f32 to vector<16x16xf32>
    %586 = arith.mulf %585, %579 : vector<16x16xf32>
    %587 = arith.addf %573, %586 : vector<16x16xf32>
    %c182 = arith.constant 182 : index
    %588 = memref.load %arg1[%c182] : memref<216xf32, #tpu.memory_space<smem>>
    %589 = vector.broadcast %588 : f32 to vector<16x16xf32>
    %590 = arith.mulf %589, %579 : vector<16x16xf32>
    %591 = arith.addf %577, %590 : vector<16x16xf32>
    %592 = vector.extract_strided_slice %578 {offsets = [1, 0], sizes = [16, 16], strides = [1, 1]} : vector<18x16xf32> to vector<16x16xf32>
    %c41 = arith.constant 41 : index
    %593 = memref.load %arg1[%c41] : memref<216xf32, #tpu.memory_space<smem>>
    %594 = vector.broadcast %593 : f32 to vector<16x16xf32>
    %595 = arith.mulf %594, %592 : vector<16x16xf32>
    %596 = arith.addf %583, %595 : vector<16x16xf32>
    %c113 = arith.constant 113 : index
    %597 = memref.load %arg1[%c113] : memref<216xf32, #tpu.memory_space<smem>>
    %598 = vector.broadcast %597 : f32 to vector<16x16xf32>
    %599 = arith.mulf %598, %592 : vector<16x16xf32>
    %600 = arith.addf %587, %599 : vector<16x16xf32>
    %c185 = arith.constant 185 : index
    %601 = memref.load %arg1[%c185] : memref<216xf32, #tpu.memory_space<smem>>
    %602 = vector.broadcast %601 : f32 to vector<16x16xf32>
    %603 = arith.mulf %602, %592 : vector<16x16xf32>
    %604 = arith.addf %591, %603 : vector<16x16xf32>
    %605 = vector.extract_strided_slice %578 {offsets = [2, 0], sizes = [16, 16], strides = [1, 1]} : vector<18x16xf32> to vector<16x16xf32>
    %c44 = arith.constant 44 : index
    %606 = memref.load %arg1[%c44] : memref<216xf32, #tpu.memory_space<smem>>
    %607 = vector.broadcast %606 : f32 to vector<16x16xf32>
    %608 = arith.mulf %607, %605 : vector<16x16xf32>
    %609 = arith.addf %596, %608 : vector<16x16xf32>
    %c116 = arith.constant 116 : index
    %610 = memref.load %arg1[%c116] : memref<216xf32, #tpu.memory_space<smem>>
    %611 = vector.broadcast %610 : f32 to vector<16x16xf32>
    %612 = arith.mulf %611, %605 : vector<16x16xf32>
    %613 = arith.addf %600, %612 : vector<16x16xf32>
    %c188 = arith.constant 188 : index
    %614 = memref.load %arg1[%c188] : memref<216xf32, #tpu.memory_space<smem>>
    %615 = vector.broadcast %614 : f32 to vector<16x16xf32>
    %616 = arith.mulf %615, %605 : vector<16x16xf32>
    %617 = arith.addf %604, %616 : vector<16x16xf32>
    %c5_28 = arith.constant 5 : index
    %c0_29 = arith.constant 0 : index
    %c0_30 = arith.constant 0 : index
    %618 = vector.load %arg4[%c5_28, %c0_29, %c0_30] : memref<8x18x18xf32, #tpu.memory_space<vmem>>, vector<1x18x18xf32>
    %619 = vector.shape_cast %618 : vector<1x18x18xf32> to vector<18x18xf32>
    %620 = vector.extract_strided_slice %619 {offsets = [0, 0], sizes = [18, 16], strides = [1, 1]} : vector<18x18xf32> to vector<18x16xf32>
    %621 = vector.extract_strided_slice %620 {offsets = [0, 0], sizes = [16, 16], strides = [1, 1]} : vector<18x16xf32> to vector<16x16xf32>
    %c45 = arith.constant 45 : index
    %622 = memref.load %arg1[%c45] : memref<216xf32, #tpu.memory_space<smem>>
    %623 = vector.broadcast %622 : f32 to vector<16x16xf32>
    %624 = arith.mulf %623, %621 : vector<16x16xf32>
    %625 = arith.addf %609, %624 : vector<16x16xf32>
    %c117 = arith.constant 117 : index
    %626 = memref.load %arg1[%c117] : memref<216xf32, #tpu.memory_space<smem>>
    %627 = vector.broadcast %626 : f32 to vector<16x16xf32>
    %628 = arith.mulf %627, %621 : vector<16x16xf32>
    %629 = arith.addf %613, %628 : vector<16x16xf32>
    %c189 = arith.constant 189 : index
    %630 = memref.load %arg1[%c189] : memref<216xf32, #tpu.memory_space<smem>>
    %631 = vector.broadcast %630 : f32 to vector<16x16xf32>
    %632 = arith.mulf %631, %621 : vector<16x16xf32>
    %633 = arith.addf %617, %632 : vector<16x16xf32>
    %634 = vector.extract_strided_slice %620 {offsets = [1, 0], sizes = [16, 16], strides = [1, 1]} : vector<18x16xf32> to vector<16x16xf32>
    %c48 = arith.constant 48 : index
    %635 = memref.load %arg1[%c48] : memref<216xf32, #tpu.memory_space<smem>>
    %636 = vector.broadcast %635 : f32 to vector<16x16xf32>
    %637 = arith.mulf %636, %634 : vector<16x16xf32>
    %638 = arith.addf %625, %637 : vector<16x16xf32>
    %c120 = arith.constant 120 : index
    %639 = memref.load %arg1[%c120] : memref<216xf32, #tpu.memory_space<smem>>
    %640 = vector.broadcast %639 : f32 to vector<16x16xf32>
    %641 = arith.mulf %640, %634 : vector<16x16xf32>
    %642 = arith.addf %629, %641 : vector<16x16xf32>
    %c192 = arith.constant 192 : index
    %643 = memref.load %arg1[%c192] : memref<216xf32, #tpu.memory_space<smem>>
    %644 = vector.broadcast %643 : f32 to vector<16x16xf32>
    %645 = arith.mulf %644, %634 : vector<16x16xf32>
    %646 = arith.addf %633, %645 : vector<16x16xf32>
    %647 = vector.extract_strided_slice %620 {offsets = [2, 0], sizes = [16, 16], strides = [1, 1]} : vector<18x16xf32> to vector<16x16xf32>
    %c51 = arith.constant 51 : index
    %648 = memref.load %arg1[%c51] : memref<216xf32, #tpu.memory_space<smem>>
    %649 = vector.broadcast %648 : f32 to vector<16x16xf32>
    %650 = arith.mulf %649, %647 : vector<16x16xf32>
    %651 = arith.addf %638, %650 : vector<16x16xf32>
    %c123 = arith.constant 123 : index
    %652 = memref.load %arg1[%c123] : memref<216xf32, #tpu.memory_space<smem>>
    %653 = vector.broadcast %652 : f32 to vector<16x16xf32>
    %654 = arith.mulf %653, %647 : vector<16x16xf32>
    %655 = arith.addf %642, %654 : vector<16x16xf32>
    %c195 = arith.constant 195 : index
    %656 = memref.load %arg1[%c195] : memref<216xf32, #tpu.memory_space<smem>>
    %657 = vector.broadcast %656 : f32 to vector<16x16xf32>
    %658 = arith.mulf %657, %647 : vector<16x16xf32>
    %659 = arith.addf %646, %658 : vector<16x16xf32>
    %660 = vector.extract_strided_slice %619 {offsets = [0, 1], sizes = [18, 16], strides = [1, 1]} : vector<18x18xf32> to vector<18x16xf32>
    %661 = vector.extract_strided_slice %660 {offsets = [0, 0], sizes = [16, 16], strides = [1, 1]} : vector<18x16xf32> to vector<16x16xf32>
    %c46 = arith.constant 46 : index
    %662 = memref.load %arg1[%c46] : memref<216xf32, #tpu.memory_space<smem>>
    %663 = vector.broadcast %662 : f32 to vector<16x16xf32>
    %664 = arith.mulf %663, %661 : vector<16x16xf32>
    %665 = arith.addf %651, %664 : vector<16x16xf32>
    %c118 = arith.constant 118 : index
    %666 = memref.load %arg1[%c118] : memref<216xf32, #tpu.memory_space<smem>>
    %667 = vector.broadcast %666 : f32 to vector<16x16xf32>
    %668 = arith.mulf %667, %661 : vector<16x16xf32>
    %669 = arith.addf %655, %668 : vector<16x16xf32>
    %c190 = arith.constant 190 : index
    %670 = memref.load %arg1[%c190] : memref<216xf32, #tpu.memory_space<smem>>
    %671 = vector.broadcast %670 : f32 to vector<16x16xf32>
    %672 = arith.mulf %671, %661 : vector<16x16xf32>
    %673 = arith.addf %659, %672 : vector<16x16xf32>
    %674 = vector.extract_strided_slice %660 {offsets = [1, 0], sizes = [16, 16], strides = [1, 1]} : vector<18x16xf32> to vector<16x16xf32>
    %c49 = arith.constant 49 : index
    %675 = memref.load %arg1[%c49] : memref<216xf32, #tpu.memory_space<smem>>
    %676 = vector.broadcast %675 : f32 to vector<16x16xf32>
    %677 = arith.mulf %676, %674 : vector<16x16xf32>
    %678 = arith.addf %665, %677 : vector<16x16xf32>
    %c121 = arith.constant 121 : index
    %679 = memref.load %arg1[%c121] : memref<216xf32, #tpu.memory_space<smem>>
    %680 = vector.broadcast %679 : f32 to vector<16x16xf32>
    %681 = arith.mulf %680, %674 : vector<16x16xf32>
    %682 = arith.addf %669, %681 : vector<16x16xf32>
    %c193 = arith.constant 193 : index
    %683 = memref.load %arg1[%c193] : memref<216xf32, #tpu.memory_space<smem>>
    %684 = vector.broadcast %683 : f32 to vector<16x16xf32>
    %685 = arith.mulf %684, %674 : vector<16x16xf32>
    %686 = arith.addf %673, %685 : vector<16x16xf32>
    %687 = vector.extract_strided_slice %660 {offsets = [2, 0], sizes = [16, 16], strides = [1, 1]} : vector<18x16xf32> to vector<16x16xf32>
    %c52 = arith.constant 52 : index
    %688 = memref.load %arg1[%c52] : memref<216xf32, #tpu.memory_space<smem>>
    %689 = vector.broadcast %688 : f32 to vector<16x16xf32>
    %690 = arith.mulf %689, %687 : vector<16x16xf32>
    %691 = arith.addf %678, %690 : vector<16x16xf32>
    %c124 = arith.constant 124 : index
    %692 = memref.load %arg1[%c124] : memref<216xf32, #tpu.memory_space<smem>>
    %693 = vector.broadcast %692 : f32 to vector<16x16xf32>
    %694 = arith.mulf %693, %687 : vector<16x16xf32>
    %695 = arith.addf %682, %694 : vector<16x16xf32>
    %c196 = arith.constant 196 : index
    %696 = memref.load %arg1[%c196] : memref<216xf32, #tpu.memory_space<smem>>
    %697 = vector.broadcast %696 : f32 to vector<16x16xf32>
    %698 = arith.mulf %697, %687 : vector<16x16xf32>
    %699 = arith.addf %686, %698 : vector<16x16xf32>
    %700 = vector.extract_strided_slice %619 {offsets = [0, 2], sizes = [18, 16], strides = [1, 1]} : vector<18x18xf32> to vector<18x16xf32>
    %701 = vector.extract_strided_slice %700 {offsets = [0, 0], sizes = [16, 16], strides = [1, 1]} : vector<18x16xf32> to vector<16x16xf32>
    %c47 = arith.constant 47 : index
    %702 = memref.load %arg1[%c47] : memref<216xf32, #tpu.memory_space<smem>>
    %703 = vector.broadcast %702 : f32 to vector<16x16xf32>
    %704 = arith.mulf %703, %701 : vector<16x16xf32>
    %705 = arith.addf %691, %704 : vector<16x16xf32>
    %c119 = arith.constant 119 : index
    %706 = memref.load %arg1[%c119] : memref<216xf32, #tpu.memory_space<smem>>
    %707 = vector.broadcast %706 : f32 to vector<16x16xf32>
    %708 = arith.mulf %707, %701 : vector<16x16xf32>
    %709 = arith.addf %695, %708 : vector<16x16xf32>
    %c191 = arith.constant 191 : index
    %710 = memref.load %arg1[%c191] : memref<216xf32, #tpu.memory_space<smem>>
    %711 = vector.broadcast %710 : f32 to vector<16x16xf32>
    %712 = arith.mulf %711, %701 : vector<16x16xf32>
    %713 = arith.addf %699, %712 : vector<16x16xf32>
    %714 = vector.extract_strided_slice %700 {offsets = [1, 0], sizes = [16, 16], strides = [1, 1]} : vector<18x16xf32> to vector<16x16xf32>
    %c50 = arith.constant 50 : index
    %715 = memref.load %arg1[%c50] : memref<216xf32, #tpu.memory_space<smem>>
    %716 = vector.broadcast %715 : f32 to vector<16x16xf32>
    %717 = arith.mulf %716, %714 : vector<16x16xf32>
    %718 = arith.addf %705, %717 : vector<16x16xf32>
    %c122 = arith.constant 122 : index
    %719 = memref.load %arg1[%c122] : memref<216xf32, #tpu.memory_space<smem>>
    %720 = vector.broadcast %719 : f32 to vector<16x16xf32>
    %721 = arith.mulf %720, %714 : vector<16x16xf32>
    %722 = arith.addf %709, %721 : vector<16x16xf32>
    %c194 = arith.constant 194 : index
    %723 = memref.load %arg1[%c194] : memref<216xf32, #tpu.memory_space<smem>>
    %724 = vector.broadcast %723 : f32 to vector<16x16xf32>
    %725 = arith.mulf %724, %714 : vector<16x16xf32>
    %726 = arith.addf %713, %725 : vector<16x16xf32>
    %727 = vector.extract_strided_slice %700 {offsets = [2, 0], sizes = [16, 16], strides = [1, 1]} : vector<18x16xf32> to vector<16x16xf32>
    %c53 = arith.constant 53 : index
    %728 = memref.load %arg1[%c53] : memref<216xf32, #tpu.memory_space<smem>>
    %729 = vector.broadcast %728 : f32 to vector<16x16xf32>
    %730 = arith.mulf %729, %727 : vector<16x16xf32>
    %731 = arith.addf %718, %730 : vector<16x16xf32>
    %c125 = arith.constant 125 : index
    %732 = memref.load %arg1[%c125] : memref<216xf32, #tpu.memory_space<smem>>
    %733 = vector.broadcast %732 : f32 to vector<16x16xf32>
    %734 = arith.mulf %733, %727 : vector<16x16xf32>
    %735 = arith.addf %722, %734 : vector<16x16xf32>
    %c197 = arith.constant 197 : index
    %736 = memref.load %arg1[%c197] : memref<216xf32, #tpu.memory_space<smem>>
    %737 = vector.broadcast %736 : f32 to vector<16x16xf32>
    %738 = arith.mulf %737, %727 : vector<16x16xf32>
    %739 = arith.addf %726, %738 : vector<16x16xf32>
    %c6_31 = arith.constant 6 : index
    %c0_32 = arith.constant 0 : index
    %c0_33 = arith.constant 0 : index
    %740 = vector.load %arg4[%c6_31, %c0_32, %c0_33] : memref<8x18x18xf32, #tpu.memory_space<vmem>>, vector<1x18x18xf32>
    %741 = vector.shape_cast %740 : vector<1x18x18xf32> to vector<18x18xf32>
    %742 = vector.extract_strided_slice %741 {offsets = [0, 0], sizes = [18, 16], strides = [1, 1]} : vector<18x18xf32> to vector<18x16xf32>
    %743 = vector.extract_strided_slice %742 {offsets = [0, 0], sizes = [16, 16], strides = [1, 1]} : vector<18x16xf32> to vector<16x16xf32>
    %c54 = arith.constant 54 : index
    %744 = memref.load %arg1[%c54] : memref<216xf32, #tpu.memory_space<smem>>
    %745 = vector.broadcast %744 : f32 to vector<16x16xf32>
    %746 = arith.mulf %745, %743 : vector<16x16xf32>
    %747 = arith.addf %731, %746 : vector<16x16xf32>
    %c126 = arith.constant 126 : index
    %748 = memref.load %arg1[%c126] : memref<216xf32, #tpu.memory_space<smem>>
    %749 = vector.broadcast %748 : f32 to vector<16x16xf32>
    %750 = arith.mulf %749, %743 : vector<16x16xf32>
    %751 = arith.addf %735, %750 : vector<16x16xf32>
    %c198 = arith.constant 198 : index
    %752 = memref.load %arg1[%c198] : memref<216xf32, #tpu.memory_space<smem>>
    %753 = vector.broadcast %752 : f32 to vector<16x16xf32>
    %754 = arith.mulf %753, %743 : vector<16x16xf32>
    %755 = arith.addf %739, %754 : vector<16x16xf32>
    %756 = vector.extract_strided_slice %742 {offsets = [1, 0], sizes = [16, 16], strides = [1, 1]} : vector<18x16xf32> to vector<16x16xf32>
    %c57 = arith.constant 57 : index
    %757 = memref.load %arg1[%c57] : memref<216xf32, #tpu.memory_space<smem>>
    %758 = vector.broadcast %757 : f32 to vector<16x16xf32>
    %759 = arith.mulf %758, %756 : vector<16x16xf32>
    %760 = arith.addf %747, %759 : vector<16x16xf32>
    %c129 = arith.constant 129 : index
    %761 = memref.load %arg1[%c129] : memref<216xf32, #tpu.memory_space<smem>>
    %762 = vector.broadcast %761 : f32 to vector<16x16xf32>
    %763 = arith.mulf %762, %756 : vector<16x16xf32>
    %764 = arith.addf %751, %763 : vector<16x16xf32>
    %c201 = arith.constant 201 : index
    %765 = memref.load %arg1[%c201] : memref<216xf32, #tpu.memory_space<smem>>
    %766 = vector.broadcast %765 : f32 to vector<16x16xf32>
    %767 = arith.mulf %766, %756 : vector<16x16xf32>
    %768 = arith.addf %755, %767 : vector<16x16xf32>
    %769 = vector.extract_strided_slice %742 {offsets = [2, 0], sizes = [16, 16], strides = [1, 1]} : vector<18x16xf32> to vector<16x16xf32>
    %c60 = arith.constant 60 : index
    %770 = memref.load %arg1[%c60] : memref<216xf32, #tpu.memory_space<smem>>
    %771 = vector.broadcast %770 : f32 to vector<16x16xf32>
    %772 = arith.mulf %771, %769 : vector<16x16xf32>
    %773 = arith.addf %760, %772 : vector<16x16xf32>
    %c132 = arith.constant 132 : index
    %774 = memref.load %arg1[%c132] : memref<216xf32, #tpu.memory_space<smem>>
    %775 = vector.broadcast %774 : f32 to vector<16x16xf32>
    %776 = arith.mulf %775, %769 : vector<16x16xf32>
    %777 = arith.addf %764, %776 : vector<16x16xf32>
    %c204 = arith.constant 204 : index
    %778 = memref.load %arg1[%c204] : memref<216xf32, #tpu.memory_space<smem>>
    %779 = vector.broadcast %778 : f32 to vector<16x16xf32>
    %780 = arith.mulf %779, %769 : vector<16x16xf32>
    %781 = arith.addf %768, %780 : vector<16x16xf32>
    %782 = vector.extract_strided_slice %741 {offsets = [0, 1], sizes = [18, 16], strides = [1, 1]} : vector<18x18xf32> to vector<18x16xf32>
    %783 = vector.extract_strided_slice %782 {offsets = [0, 0], sizes = [16, 16], strides = [1, 1]} : vector<18x16xf32> to vector<16x16xf32>
    %c55 = arith.constant 55 : index
    %784 = memref.load %arg1[%c55] : memref<216xf32, #tpu.memory_space<smem>>
    %785 = vector.broadcast %784 : f32 to vector<16x16xf32>
    %786 = arith.mulf %785, %783 : vector<16x16xf32>
    %787 = arith.addf %773, %786 : vector<16x16xf32>
    %c127 = arith.constant 127 : index
    %788 = memref.load %arg1[%c127] : memref<216xf32, #tpu.memory_space<smem>>
    %789 = vector.broadcast %788 : f32 to vector<16x16xf32>
    %790 = arith.mulf %789, %783 : vector<16x16xf32>
    %791 = arith.addf %777, %790 : vector<16x16xf32>
    %c199 = arith.constant 199 : index
    %792 = memref.load %arg1[%c199] : memref<216xf32, #tpu.memory_space<smem>>
    %793 = vector.broadcast %792 : f32 to vector<16x16xf32>
    %794 = arith.mulf %793, %783 : vector<16x16xf32>
    %795 = arith.addf %781, %794 : vector<16x16xf32>
    %796 = vector.extract_strided_slice %782 {offsets = [1, 0], sizes = [16, 16], strides = [1, 1]} : vector<18x16xf32> to vector<16x16xf32>
    %c58 = arith.constant 58 : index
    %797 = memref.load %arg1[%c58] : memref<216xf32, #tpu.memory_space<smem>>
    %798 = vector.broadcast %797 : f32 to vector<16x16xf32>
    %799 = arith.mulf %798, %796 : vector<16x16xf32>
    %800 = arith.addf %787, %799 : vector<16x16xf32>
    %c130 = arith.constant 130 : index
    %801 = memref.load %arg1[%c130] : memref<216xf32, #tpu.memory_space<smem>>
    %802 = vector.broadcast %801 : f32 to vector<16x16xf32>
    %803 = arith.mulf %802, %796 : vector<16x16xf32>
    %804 = arith.addf %791, %803 : vector<16x16xf32>
    %c202 = arith.constant 202 : index
    %805 = memref.load %arg1[%c202] : memref<216xf32, #tpu.memory_space<smem>>
    %806 = vector.broadcast %805 : f32 to vector<16x16xf32>
    %807 = arith.mulf %806, %796 : vector<16x16xf32>
    %808 = arith.addf %795, %807 : vector<16x16xf32>
    %809 = vector.extract_strided_slice %782 {offsets = [2, 0], sizes = [16, 16], strides = [1, 1]} : vector<18x16xf32> to vector<16x16xf32>
    %c61 = arith.constant 61 : index
    %810 = memref.load %arg1[%c61] : memref<216xf32, #tpu.memory_space<smem>>
    %811 = vector.broadcast %810 : f32 to vector<16x16xf32>
    %812 = arith.mulf %811, %809 : vector<16x16xf32>
    %813 = arith.addf %800, %812 : vector<16x16xf32>
    %c133 = arith.constant 133 : index
    %814 = memref.load %arg1[%c133] : memref<216xf32, #tpu.memory_space<smem>>
    %815 = vector.broadcast %814 : f32 to vector<16x16xf32>
    %816 = arith.mulf %815, %809 : vector<16x16xf32>
    %817 = arith.addf %804, %816 : vector<16x16xf32>
    %c205 = arith.constant 205 : index
    %818 = memref.load %arg1[%c205] : memref<216xf32, #tpu.memory_space<smem>>
    %819 = vector.broadcast %818 : f32 to vector<16x16xf32>
    %820 = arith.mulf %819, %809 : vector<16x16xf32>
    %821 = arith.addf %808, %820 : vector<16x16xf32>
    %822 = vector.extract_strided_slice %741 {offsets = [0, 2], sizes = [18, 16], strides = [1, 1]} : vector<18x18xf32> to vector<18x16xf32>
    %823 = vector.extract_strided_slice %822 {offsets = [0, 0], sizes = [16, 16], strides = [1, 1]} : vector<18x16xf32> to vector<16x16xf32>
    %c56 = arith.constant 56 : index
    %824 = memref.load %arg1[%c56] : memref<216xf32, #tpu.memory_space<smem>>
    %825 = vector.broadcast %824 : f32 to vector<16x16xf32>
    %826 = arith.mulf %825, %823 : vector<16x16xf32>
    %827 = arith.addf %813, %826 : vector<16x16xf32>
    %c128 = arith.constant 128 : index
    %828 = memref.load %arg1[%c128] : memref<216xf32, #tpu.memory_space<smem>>
    %829 = vector.broadcast %828 : f32 to vector<16x16xf32>
    %830 = arith.mulf %829, %823 : vector<16x16xf32>
    %831 = arith.addf %817, %830 : vector<16x16xf32>
    %c200 = arith.constant 200 : index
    %832 = memref.load %arg1[%c200] : memref<216xf32, #tpu.memory_space<smem>>
    %833 = vector.broadcast %832 : f32 to vector<16x16xf32>
    %834 = arith.mulf %833, %823 : vector<16x16xf32>
    %835 = arith.addf %821, %834 : vector<16x16xf32>
    %836 = vector.extract_strided_slice %822 {offsets = [1, 0], sizes = [16, 16], strides = [1, 1]} : vector<18x16xf32> to vector<16x16xf32>
    %c59 = arith.constant 59 : index
    %837 = memref.load %arg1[%c59] : memref<216xf32, #tpu.memory_space<smem>>
    %838 = vector.broadcast %837 : f32 to vector<16x16xf32>
    %839 = arith.mulf %838, %836 : vector<16x16xf32>
    %840 = arith.addf %827, %839 : vector<16x16xf32>
    %c131 = arith.constant 131 : index
    %841 = memref.load %arg1[%c131] : memref<216xf32, #tpu.memory_space<smem>>
    %842 = vector.broadcast %841 : f32 to vector<16x16xf32>
    %843 = arith.mulf %842, %836 : vector<16x16xf32>
    %844 = arith.addf %831, %843 : vector<16x16xf32>
    %c203 = arith.constant 203 : index
    %845 = memref.load %arg1[%c203] : memref<216xf32, #tpu.memory_space<smem>>
    %846 = vector.broadcast %845 : f32 to vector<16x16xf32>
    %847 = arith.mulf %846, %836 : vector<16x16xf32>
    %848 = arith.addf %835, %847 : vector<16x16xf32>
    %849 = vector.extract_strided_slice %822 {offsets = [2, 0], sizes = [16, 16], strides = [1, 1]} : vector<18x16xf32> to vector<16x16xf32>
    %c62 = arith.constant 62 : index
    %850 = memref.load %arg1[%c62] : memref<216xf32, #tpu.memory_space<smem>>
    %851 = vector.broadcast %850 : f32 to vector<16x16xf32>
    %852 = arith.mulf %851, %849 : vector<16x16xf32>
    %853 = arith.addf %840, %852 : vector<16x16xf32>
    %c134 = arith.constant 134 : index
    %854 = memref.load %arg1[%c134] : memref<216xf32, #tpu.memory_space<smem>>
    %855 = vector.broadcast %854 : f32 to vector<16x16xf32>
    %856 = arith.mulf %855, %849 : vector<16x16xf32>
    %857 = arith.addf %844, %856 : vector<16x16xf32>
    %c206 = arith.constant 206 : index
    %858 = memref.load %arg1[%c206] : memref<216xf32, #tpu.memory_space<smem>>
    %859 = vector.broadcast %858 : f32 to vector<16x16xf32>
    %860 = arith.mulf %859, %849 : vector<16x16xf32>
    %861 = arith.addf %848, %860 : vector<16x16xf32>
    %c7_34 = arith.constant 7 : index
    %c0_35 = arith.constant 0 : index
    %c0_36 = arith.constant 0 : index
    %862 = vector.load %arg4[%c7_34, %c0_35, %c0_36] : memref<8x18x18xf32, #tpu.memory_space<vmem>>, vector<1x18x18xf32>
    %863 = vector.shape_cast %862 : vector<1x18x18xf32> to vector<18x18xf32>
    %864 = vector.extract_strided_slice %863 {offsets = [0, 0], sizes = [18, 16], strides = [1, 1]} : vector<18x18xf32> to vector<18x16xf32>
    %865 = vector.extract_strided_slice %864 {offsets = [0, 0], sizes = [16, 16], strides = [1, 1]} : vector<18x16xf32> to vector<16x16xf32>
    %c63 = arith.constant 63 : index
    %866 = memref.load %arg1[%c63] : memref<216xf32, #tpu.memory_space<smem>>
    %867 = vector.broadcast %866 : f32 to vector<16x16xf32>
    %868 = arith.mulf %867, %865 : vector<16x16xf32>
    %869 = arith.addf %853, %868 : vector<16x16xf32>
    %c135 = arith.constant 135 : index
    %870 = memref.load %arg1[%c135] : memref<216xf32, #tpu.memory_space<smem>>
    %871 = vector.broadcast %870 : f32 to vector<16x16xf32>
    %872 = arith.mulf %871, %865 : vector<16x16xf32>
    %873 = arith.addf %857, %872 : vector<16x16xf32>
    %c207 = arith.constant 207 : index
    %874 = memref.load %arg1[%c207] : memref<216xf32, #tpu.memory_space<smem>>
    %875 = vector.broadcast %874 : f32 to vector<16x16xf32>
    %876 = arith.mulf %875, %865 : vector<16x16xf32>
    %877 = arith.addf %861, %876 : vector<16x16xf32>
    %878 = vector.extract_strided_slice %864 {offsets = [1, 0], sizes = [16, 16], strides = [1, 1]} : vector<18x16xf32> to vector<16x16xf32>
    %c66 = arith.constant 66 : index
    %879 = memref.load %arg1[%c66] : memref<216xf32, #tpu.memory_space<smem>>
    %880 = vector.broadcast %879 : f32 to vector<16x16xf32>
    %881 = arith.mulf %880, %878 : vector<16x16xf32>
    %882 = arith.addf %869, %881 : vector<16x16xf32>
    %c138 = arith.constant 138 : index
    %883 = memref.load %arg1[%c138] : memref<216xf32, #tpu.memory_space<smem>>
    %884 = vector.broadcast %883 : f32 to vector<16x16xf32>
    %885 = arith.mulf %884, %878 : vector<16x16xf32>
    %886 = arith.addf %873, %885 : vector<16x16xf32>
    %c210 = arith.constant 210 : index
    %887 = memref.load %arg1[%c210] : memref<216xf32, #tpu.memory_space<smem>>
    %888 = vector.broadcast %887 : f32 to vector<16x16xf32>
    %889 = arith.mulf %888, %878 : vector<16x16xf32>
    %890 = arith.addf %877, %889 : vector<16x16xf32>
    %891 = vector.extract_strided_slice %864 {offsets = [2, 0], sizes = [16, 16], strides = [1, 1]} : vector<18x16xf32> to vector<16x16xf32>
    %c69 = arith.constant 69 : index
    %892 = memref.load %arg1[%c69] : memref<216xf32, #tpu.memory_space<smem>>
    %893 = vector.broadcast %892 : f32 to vector<16x16xf32>
    %894 = arith.mulf %893, %891 : vector<16x16xf32>
    %895 = arith.addf %882, %894 : vector<16x16xf32>
    %c141 = arith.constant 141 : index
    %896 = memref.load %arg1[%c141] : memref<216xf32, #tpu.memory_space<smem>>
    %897 = vector.broadcast %896 : f32 to vector<16x16xf32>
    %898 = arith.mulf %897, %891 : vector<16x16xf32>
    %899 = arith.addf %886, %898 : vector<16x16xf32>
    %c213 = arith.constant 213 : index
    %900 = memref.load %arg1[%c213] : memref<216xf32, #tpu.memory_space<smem>>
    %901 = vector.broadcast %900 : f32 to vector<16x16xf32>
    %902 = arith.mulf %901, %891 : vector<16x16xf32>
    %903 = arith.addf %890, %902 : vector<16x16xf32>
    %904 = vector.extract_strided_slice %863 {offsets = [0, 1], sizes = [18, 16], strides = [1, 1]} : vector<18x18xf32> to vector<18x16xf32>
    %905 = vector.extract_strided_slice %904 {offsets = [0, 0], sizes = [16, 16], strides = [1, 1]} : vector<18x16xf32> to vector<16x16xf32>
    %c64 = arith.constant 64 : index
    %906 = memref.load %arg1[%c64] : memref<216xf32, #tpu.memory_space<smem>>
    %907 = vector.broadcast %906 : f32 to vector<16x16xf32>
    %908 = arith.mulf %907, %905 : vector<16x16xf32>
    %909 = arith.addf %895, %908 : vector<16x16xf32>
    %c136 = arith.constant 136 : index
    %910 = memref.load %arg1[%c136] : memref<216xf32, #tpu.memory_space<smem>>
    %911 = vector.broadcast %910 : f32 to vector<16x16xf32>
    %912 = arith.mulf %911, %905 : vector<16x16xf32>
    %913 = arith.addf %899, %912 : vector<16x16xf32>
    %c208 = arith.constant 208 : index
    %914 = memref.load %arg1[%c208] : memref<216xf32, #tpu.memory_space<smem>>
    %915 = vector.broadcast %914 : f32 to vector<16x16xf32>
    %916 = arith.mulf %915, %905 : vector<16x16xf32>
    %917 = arith.addf %903, %916 : vector<16x16xf32>
    %918 = vector.extract_strided_slice %904 {offsets = [1, 0], sizes = [16, 16], strides = [1, 1]} : vector<18x16xf32> to vector<16x16xf32>
    %c67 = arith.constant 67 : index
    %919 = memref.load %arg1[%c67] : memref<216xf32, #tpu.memory_space<smem>>
    %920 = vector.broadcast %919 : f32 to vector<16x16xf32>
    %921 = arith.mulf %920, %918 : vector<16x16xf32>
    %922 = arith.addf %909, %921 : vector<16x16xf32>
    %c139 = arith.constant 139 : index
    %923 = memref.load %arg1[%c139] : memref<216xf32, #tpu.memory_space<smem>>
    %924 = vector.broadcast %923 : f32 to vector<16x16xf32>
    %925 = arith.mulf %924, %918 : vector<16x16xf32>
    %926 = arith.addf %913, %925 : vector<16x16xf32>
    %c211 = arith.constant 211 : index
    %927 = memref.load %arg1[%c211] : memref<216xf32, #tpu.memory_space<smem>>
    %928 = vector.broadcast %927 : f32 to vector<16x16xf32>
    %929 = arith.mulf %928, %918 : vector<16x16xf32>
    %930 = arith.addf %917, %929 : vector<16x16xf32>
    %931 = vector.extract_strided_slice %904 {offsets = [2, 0], sizes = [16, 16], strides = [1, 1]} : vector<18x16xf32> to vector<16x16xf32>
    %c70 = arith.constant 70 : index
    %932 = memref.load %arg1[%c70] : memref<216xf32, #tpu.memory_space<smem>>
    %933 = vector.broadcast %932 : f32 to vector<16x16xf32>
    %934 = arith.mulf %933, %931 : vector<16x16xf32>
    %935 = arith.addf %922, %934 : vector<16x16xf32>
    %c142 = arith.constant 142 : index
    %936 = memref.load %arg1[%c142] : memref<216xf32, #tpu.memory_space<smem>>
    %937 = vector.broadcast %936 : f32 to vector<16x16xf32>
    %938 = arith.mulf %937, %931 : vector<16x16xf32>
    %939 = arith.addf %926, %938 : vector<16x16xf32>
    %c214 = arith.constant 214 : index
    %940 = memref.load %arg1[%c214] : memref<216xf32, #tpu.memory_space<smem>>
    %941 = vector.broadcast %940 : f32 to vector<16x16xf32>
    %942 = arith.mulf %941, %931 : vector<16x16xf32>
    %943 = arith.addf %930, %942 : vector<16x16xf32>
    %944 = vector.extract_strided_slice %863 {offsets = [0, 2], sizes = [18, 16], strides = [1, 1]} : vector<18x18xf32> to vector<18x16xf32>
    %945 = vector.extract_strided_slice %944 {offsets = [0, 0], sizes = [16, 16], strides = [1, 1]} : vector<18x16xf32> to vector<16x16xf32>
    %c65 = arith.constant 65 : index
    %946 = memref.load %arg1[%c65] : memref<216xf32, #tpu.memory_space<smem>>
    %947 = vector.broadcast %946 : f32 to vector<16x16xf32>
    %948 = arith.mulf %947, %945 : vector<16x16xf32>
    %949 = arith.addf %935, %948 : vector<16x16xf32>
    %c137 = arith.constant 137 : index
    %950 = memref.load %arg1[%c137] : memref<216xf32, #tpu.memory_space<smem>>
    %951 = vector.broadcast %950 : f32 to vector<16x16xf32>
    %952 = arith.mulf %951, %945 : vector<16x16xf32>
    %953 = arith.addf %939, %952 : vector<16x16xf32>
    %c209 = arith.constant 209 : index
    %954 = memref.load %arg1[%c209] : memref<216xf32, #tpu.memory_space<smem>>
    %955 = vector.broadcast %954 : f32 to vector<16x16xf32>
    %956 = arith.mulf %955, %945 : vector<16x16xf32>
    %957 = arith.addf %943, %956 : vector<16x16xf32>
    %958 = vector.extract_strided_slice %944 {offsets = [1, 0], sizes = [16, 16], strides = [1, 1]} : vector<18x16xf32> to vector<16x16xf32>
    %c68 = arith.constant 68 : index
    %959 = memref.load %arg1[%c68] : memref<216xf32, #tpu.memory_space<smem>>
    %960 = vector.broadcast %959 : f32 to vector<16x16xf32>
    %961 = arith.mulf %960, %958 : vector<16x16xf32>
    %962 = arith.addf %949, %961 : vector<16x16xf32>
    %c140 = arith.constant 140 : index
    %963 = memref.load %arg1[%c140] : memref<216xf32, #tpu.memory_space<smem>>
    %964 = vector.broadcast %963 : f32 to vector<16x16xf32>
    %965 = arith.mulf %964, %958 : vector<16x16xf32>
    %966 = arith.addf %953, %965 : vector<16x16xf32>
    %c212 = arith.constant 212 : index
    %967 = memref.load %arg1[%c212] : memref<216xf32, #tpu.memory_space<smem>>
    %968 = vector.broadcast %967 : f32 to vector<16x16xf32>
    %969 = arith.mulf %968, %958 : vector<16x16xf32>
    %970 = arith.addf %957, %969 : vector<16x16xf32>
    %971 = vector.extract_strided_slice %944 {offsets = [2, 0], sizes = [16, 16], strides = [1, 1]} : vector<18x16xf32> to vector<16x16xf32>
    %c71 = arith.constant 71 : index
    %972 = memref.load %arg1[%c71] : memref<216xf32, #tpu.memory_space<smem>>
    %973 = vector.broadcast %972 : f32 to vector<16x16xf32>
    %974 = arith.mulf %973, %971 : vector<16x16xf32>
    %975 = arith.addf %962, %974 : vector<16x16xf32>
    %c143 = arith.constant 143 : index
    %976 = memref.load %arg1[%c143] : memref<216xf32, #tpu.memory_space<smem>>
    %977 = vector.broadcast %976 : f32 to vector<16x16xf32>
    %978 = arith.mulf %977, %971 : vector<16x16xf32>
    %979 = arith.addf %966, %978 : vector<16x16xf32>
    %c215 = arith.constant 215 : index
    %980 = memref.load %arg1[%c215] : memref<216xf32, #tpu.memory_space<smem>>
    %981 = vector.broadcast %980 : f32 to vector<16x16xf32>
    %982 = arith.mulf %981, %971 : vector<16x16xf32>
    %983 = arith.addf %970, %982 : vector<16x16xf32>
    %984 = math.tanh %975 : vector<16x16xf32>
    %c0_37 = arith.constant 0 : index
    %c0_38 = arith.constant 0 : index
    %c0_39 = arith.constant 0 : index
    %c0_40 = arith.constant 0 : index
    %985 = vector.load %arg3[%c0_37, %c0_38, %c0_39, %c0_40] : memref<1x3x16x16xf32, #tpu.memory_space<vmem>>, vector<1x1x16x16xf32>
    %986 = vector.shape_cast %985 : vector<1x1x16x16xf32> to vector<16x16xf32>
    %987 = vector.shape_cast %984 : vector<16x16xf32> to vector<1x1x16x16xf32>
    tpu.vector_store %arg3[%c0_37, %c0_38, %c0_39, %c0_40], %987 {strides = array<i32>} : memref<1x3x16x16xf32, #tpu.memory_space<vmem>>, vector<1x1x16x16xf32>,
    %988 = math.tanh %979 : vector<16x16xf32>
    %c0_41 = arith.constant 0 : index
    %c1_42 = arith.constant 1 : index
    %c0_43 = arith.constant 0 : index
    %c0_44 = arith.constant 0 : index
    %989 = vector.load %arg3[%c0_41, %c1_42, %c0_43, %c0_44] : memref<1x3x16x16xf32, #tpu.memory_space<vmem>>, vector<1x1x16x16xf32>
    %990 = vector.shape_cast %989 : vector<1x1x16x16xf32> to vector<16x16xf32>
    %991 = vector.shape_cast %988 : vector<16x16xf32> to vector<1x1x16x16xf32>
    tpu.vector_store %arg3[%c0_41, %c1_42, %c0_43, %c0_44], %991 {strides = array<i32>} : memref<1x3x16x16xf32, #tpu.memory_space<vmem>>, vector<1x1x16x16xf32>,
    %992 = math.tanh %983 : vector<16x16xf32>
    %c0_45 = arith.constant 0 : index
    %c2_46 = arith.constant 2 : index
    %c0_47 = arith.constant 0 : index
    %c0_48 = arith.constant 0 : index
    %993 = vector.load %arg3[%c0_45, %c2_46, %c0_47, %c0_48] : memref<1x3x16x16xf32, #tpu.memory_space<vmem>>, vector<1x1x16x16xf32>
    %994 = vector.shape_cast %993 : vector<1x1x16x16xf32> to vector<16x16xf32>
    %995 = vector.shape_cast %992 : vector<16x16xf32> to vector<1x1x16x16xf32>
    tpu.vector_store %arg3[%c0_45, %c2_46, %c0_47, %c0_48], %995 {strides = array<i32>} : memref<1x3x16x16xf32, #tpu.memory_space<vmem>>, vector<1x1x16x16xf32>,
    return
  }
  func.func @transform_0(%arg0: i32) -> i32 {
    %c0_i32 = arith.constant 0 : i32
    %c0_i32_0 = arith.constant 0 : i32
    return %c0_i32 : i32
  }
  func.func @transform_1(%arg0: i32) -> (i32, i32, i32, i32) {
    %c0_i32 = arith.constant 0 : i32
    %c0_i32_0 = arith.constant 0 : i32
    %c0_i32_1 = arith.constant 0 : i32
    %c0_i32_2 = arith.constant 0 : i32
    return %arg0, %c0_i32, %c0_i32_0, %c0_i32_1 : i32, i32, i32, i32
  }
  func.func @transform_2(%arg0: i32) -> (i32, i32, i32, i32) {
    %c0_i32 = arith.constant 0 : i32
    %c0_i32_0 = arith.constant 0 : i32
    %c0_i32_1 = arith.constant 0 : i32
    %c0_i32_2 = arith.constant 0 : i32
    return %arg0, %c0_i32, %c0_i32_0, %c0_i32_1 : i32, i32, i32, i32
  }
}

</mosaic_0001>

<llo_original>
// kernel: tpu_custom_call.1
$region0: #{tpu_custom_call.1}
  #allocation0 [shape = 'u32[]', space=smem, size = 0x4, offset = 0x4, fixed_abs, tag = 'smem constant byte address 0x4 - core index']
  #allocation1 [shape = 'u32[144,128]{1,0:T(1,128)}', space=vmem, size = 0x12000, scoped, tag = 'internal scratch']
  #allocation2 [shape = 'f32[8,18,18]{2,1,0:T(8,128)}', space=vmem, size = 0x18000, scoped, tag = 'scratch operand']
  %s0 = inlined_call_operand.hbm [shape: f32[216], index: 0, kind: input, shape index: {}]
  %s1 = inlined_call_operand.hbm [shape: f32[2,8,16,16], index: 1, kind: input, shape index: {}]
  %s2 = inlined_call_operand.hbm [shape: f32[2,3,16,16], index: 2, kind: output, shape index: {}]
  %s3 = sld [smem:[#allocation0]]
  $region49: #{tpu_custom_call.1} parent=0
    _
  %s5 = ssub.s32 1, %s3
  %s6 = scalar_select 0, %s5, %s3
  $region1: #{tpu_custom_call.1} parent=0
    #allocation3 [shape = 'u8[1024]{0}', space=smem, size = 0x400, scoped, tag = 'input window, operand 0, single buffered']
    #allocation4 [shape = 's32[2]{0}', space=sflag, size = 0x8, scoped, tag = 'scoped memory for tpu_custom_call.1']
    #allocation5 [shape = 's32[2]{0}', space=sflag, size = 0x8, scoped, tag = 'scoped memory for tpu_custom_call.1']
    #allocation6 [shape = 's32[2]{0}', space=sflag, size = 0x8, scoped, tag = 'scoped memory for tpu_custom_call.1']
    #allocation7 [shape = 'u8[131072]{0}', space=vmem, size = 0x20000, scoped, tag = 'input window, operand 1']
    #allocation8 [shape = 'u8[49152]{0}', space=vmem, size = 0xc000, scoped, tag = 'output window, operand 0']
    %7 = vsyncpa [#allocation6], 0
    %8 = vsyncpa [#allocation4], 0
    %s9 = scalar_lea.sflag [#allocation4], 1
    %10 = vsyncpa %s9, 0
    %11 = vsyncpa [#allocation5], 0
    %s12 = scalar_lea.sflag [#allocation5], 1
    %13 = vsyncpa %s12, 0
    loop: start=0, step=1, limit=4
    $region2: #{tpu_custom_call.1} parent=1 // loop_pre_header
      _
    $region3: #{tpu_custom_call.1} parent=1 // loop_header
      %s15 = sphi 0, %s19
      %p16 = scmp.ge.s32.totalorder %s15, 4
      %s23 = sphi 0, %s23
      %s25 = sphi 0, %s23
      %s26 = sphi 0, %s25
      %s40 = sphi 0, %s26
      %s46 = sphi 0, %s48
      %s49 = sphi 0, %s46
      %s50 = sphi 0, %s49
      %s66 = sphi 0, %s50
      %s72 = sphi 0, %s74
      %s75 = sphi 0, %s72
      %s76 = sphi 0, %s75
      %s92 = sphi 0, %s76
    $region4: #{tpu_custom_call.1} parent=1 // loop_header_branch
      %18 = sbr.rel (%p16) target = $region8
    $region5: #{tpu_custom_call.1} parent=1 // loop_body
      %s20 = ssub.s32 %s15, 1
      %s21 = ssub.s32 %s15, 2
      %s22 = sadd.s32 %s15, 1
      %s24 = sadd.s32 %s23, 1
      %p27 = scmp.eq.s32.totalorder %s15, 1
      %p28 = scmp.ne.s32.totalorder %s23, %s25
      %p29 = scmp.eq.s32.totalorder %s15, 0
      %p30 = por %p28, %p29
      %p31 = scmp.ne.s32.totalorder %s23, %s25
      %p32 = scmp.eq.s32.totalorder %s20, 1
      %p33 = por %p31, %p32
      %p34 = scmp.ne.s32.totalorder %s25, %s26
      %p35 = scmp.eq.s32.totalorder %s20, 0
      %p36 = por %p34, %p35
      %p37 = scmp.ne.s32.totalorder %s25, %s26
      %p38 = scmp.eq.s32.totalorder %s21, 1
      %p39 = por %p37, %p38
      %p41 = scmp.ne.s32.totalorder %s26, %s40
      %p42 = scmp.eq.s32.totalorder %s21, 0
      %p43 = por %p41, %p42
      %s44 = ssub.s32 %s15, %s22
      %p45 = scmp.eq.s32.totalorder %s44, 0
      %s47 = sadd.s32 %s46, 1
      %s48 = scalar_select %p45, %s46, %s47
      %p51 = pneg %p45
      %p52 = scmp.eq.s32.totalorder %s15, 1
      %p53 = por %p51, %p52
      %p54 = scmp.ne.s32.totalorder %s46, %s49
      %p55 = scmp.eq.s32.totalorder %s15, 0
      %p56 = por %p54, %p55
      %p57 = scmp.ne.s32.totalorder %s46, %s49
      %p58 = scmp.eq.s32.totalorder %s20, 1
      %p59 = por %p57, %p58
      %p60 = scmp.ne.s32.totalorder %s49, %s50
      %p61 = scmp.eq.s32.totalorder %s20, 0
      %p62 = por %p60, %p61
      %p63 = scmp.ne.s32.totalorder %s49, %s50
      %p64 = scmp.eq.s32.totalorder %s21, 1
      %p65 = por %p63, %p64
      %p67 = scmp.ne.s32.totalorder %s50, %s66
      %p68 = scmp.eq.s32.totalorder %s21, 0
      %p69 = por %p67, %p68
      %s70 = ssub.s32 %s15, %s22
      %p71 = scmp.eq.s32.totalorder %s70, 0
      %s73 = sadd.s32 %s72, 1
      %s74 = scalar_select %p71, %s72, %s73
      %p77 = pneg %p71
      %p78 = scmp.eq.s32.totalorder %s15, 1
      %p79 = por %p77, %p78
      %p80 = scmp.ne.s32.totalorder %s72, %s75
      %p81 = scmp.eq.s32.totalorder %s15, 0
      %p82 = por %p80, %p81
      %p83 = scmp.ne.s32.totalorder %s72, %s75
      %p84 = scmp.eq.s32.totalorder %s20, 1
      %p85 = por %p83, %p84
      %p86 = scmp.ne.s32.totalorder %s75, %s76
      %p87 = scmp.eq.s32.totalorder %s20, 0
      %p88 = por %p86, %p87
      %p89 = scmp.ne.s32.totalorder %s75, %s76
      %p90 = scmp.eq.s32.totalorder %s21, 1
      %p91 = por %p89, %p90
      %p93 = scmp.ne.s32.totalorder %s76, %s92
      %p94 = scmp.eq.s32.totalorder %s21, 0
      %p95 = por %p93, %p94
      %p96 = scmp.le.s32.totalorder 1, %s15
      %p97 = scmp.lt.s32.totalorder %s15, 3
      %p98 = pnand %p96, %p97
      %p99 = pneg %p98
      // Predicated region
      $region9: #{tpu_custom_call.1} parent=5 // pred_check
        _
      $region10: #{tpu_custom_call.1} parent=5 // pred_check_branch
        %101 = sbr.rel (%p98) target = $region12
      $region11: #{tpu_custom_call.1} parent=5 // pred_region
        %s102 = ssub.s32 %s15, 1
        // Predicated region
        $region13: #{tpu_custom_call.1} parent=11 // pred_check
          %p103 = pneg %p36
        $region14: #{tpu_custom_call.1} parent=11 // pred_check_branch
          %105 = sbr.rel (%p103) target = $region16
        $region15: #{tpu_custom_call.1} parent=11 // pred_region
          %s107 = ssub.s32 32, 32
          %108 = vsyncadd [#allocation6], %s107
          %111 = dma.hbm_to_smem %s0, 32, [#allocation3], [#allocation6]
        $region16: #{tpu_custom_call.1} parent=11 // pred_fallthru
          _
      $region12: #{tpu_custom_call.1} parent=5 // pred_fallthru
        _
      %p112 = scmp.lt.s32.totalorder %s15, 2
      // Predicated region
      $region17: #{tpu_custom_call.1} parent=5 // pred_check
        %p113 = pneg %p112
      $region18: #{tpu_custom_call.1} parent=5 // pred_check_branch
        %115 = sbr.rel (%p113) target = $region20
      $region19: #{tpu_custom_call.1} parent=5 // pred_region
        // Predicated region
        $region21: #{tpu_custom_call.1} parent=19 // pred_check
          %p116 = pneg %p56
        $region22: #{tpu_custom_call.1} parent=19 // pred_check_branch
          %118 = sbr.rel (%p116) target = $region24
        $region23: #{tpu_custom_call.1} parent=19 // pred_region
          %s119 = sand.u32 %s46, 1
          %s120 = scalar_lea.sflag [#allocation4], %s119
          %s121 = sand.u32 %s46, 1
          %s122 = smul.addr %s121, 128
          %s123 = scalar_lea.vmem [#allocation7], %s122
          %s125 = ssub.s32 2048, 2048
          %126 = vsyncadd %s120, %s125
          %s127 = smul.addr %s15, 16
          %s128 = smul.addr %s127, 128
          %s129 = scalar_lea.hbm %s1, %s128
          %s130 = sshll.u32 %s123, 4
          %s131 = int_to_ptr.vmem [resolvable:$true] %s130
          %136 = dma.hbm_to_vmem [thread:$0]  %s129, 2048, %s131, %s120, 128, 128, 8
        $region24: #{tpu_custom_call.1} parent=19 // pred_fallthru
          _
      $region20: #{tpu_custom_call.1} parent=5 // pred_fallthru
        _
      %p137 = scmp.le.s32.totalorder 1, %s15
      %p138 = scmp.lt.s32.totalorder %s15, 3
      %p139 = pnand %p137, %p138
      %p140 = pneg %p139
      // Predicated region
      $region25: #{tpu_custom_call.1} parent=5 // pred_check
        _
      $region26: #{tpu_custom_call.1} parent=5 // pred_check_branch
        %142 = sbr.rel (%p139) target = $region28
      $region27: #{tpu_custom_call.1} parent=5 // pred_region
        %s143 = ssub.s32 %s15, 1
        // Predicated region
        $region29: #{tpu_custom_call.1} parent=27 // pred_check
          %p144 = pneg %p36
        $region30: #{tpu_custom_call.1} parent=27 // pred_check_branch
          %146 = sbr.rel (%p144) target = $region32
        $region31: #{tpu_custom_call.1} parent=27 // pred_region
          %147 = dma.done [#allocation6], 32
        $region32: #{tpu_custom_call.1} parent=27 // pred_fallthru
          _
        %s148 = sand.u32 %s49, 1
        %s149 = scalar_lea.sflag [#allocation4], %s148
        %s150 = sand.u32 %s49, 1
        %s151 = smul.addr %s150, 128
        %s152 = scalar_lea.vmem [#allocation7], %s151
        // Predicated region
        $region33: #{tpu_custom_call.1} parent=27 // pred_check
          %p153 = pneg %p62
        $region34: #{tpu_custom_call.1} parent=27 // pred_check_branch
          %155 = sbr.rel (%p153) target = $region36
        $region35: #{tpu_custom_call.1} parent=27 // pred_region
          %156 = dma.done %s149, 2048
        $region36: #{tpu_custom_call.1} parent=27 // pred_fallthru
          _
        %157 = sfence
        %p158 = pneg %p36
        %p159 = pneg %p33
        %s160 = sand.u32 %s49, 1
        %s161 = scalar_lea.sflag [#allocation4], %s160
        %s162 = sand.u32 %s49, 1
        %s163 = smul.addr %s162, 128
        %s164 = scalar_lea.vmem [#allocation7], %s163
        %p165 = pneg %p62
        %p166 = pneg %p59
        %p167 = pneg %p88
        %p168 = pneg %p85
        %s169 = sand.u32 %s75, 1
        %s170 = scalar_lea.sflag [#allocation5], %s169
        %s171 = sand.u32 %s75, 1
        %s172 = smul.addr %s171, 48
        %s173 = scalar_lea.vmem [#allocation8], %s172
        %vm174 = vcmask 146432
        %175 = vst.msk [vmem:[#allocation2] sm:$0xff] %vm174, 0.0
        %176 = vst.msk [vmem:[#allocation2 + $0x8] sm:$0xff] %vm174, 0.0
        %vm177 = vcmask 140288
        %178 = vst.msk [vmem:[#allocation2 + $0x10] sm:$0x3] %vm177, 0.0
        %179 = vst.msk [vmem:[#allocation2 + $0x18] sm:$0xff] %vm174, 0.0
        %180 = vst.msk [vmem:[#allocation2 + $0x20] sm:$0xff] %vm174, 0.0
        %181 = vst.msk [vmem:[#allocation2 + $0x28] sm:$0x3] %vm177, 0.0
        %182 = vst.msk [vmem:[#allocation2 + $0x30] sm:$0xff] %vm174, 0.0
        %183 = vst.msk [vmem:[#allocation2 + $0x38] sm:$0xff] %vm174, 0.0
        %184 = vst.msk [vmem:[#allocation2 + $0x40] sm:$0x3] %vm177, 0.0
        %185 = vst.msk [vmem:[#allocation2 + $0x48] sm:$0xff] %vm174, 0.0
        %186 = vst.msk [vmem:[#allocation2 + $0x50] sm:$0xff] %vm174, 0.0
        %187 = vst.msk [vmem:[#allocation2 + $0x58] sm:$0x3] %vm177, 0.0
        %188 = vst.msk [vmem:[#allocation2 + $0x60] sm:$0xff] %vm174, 0.0
        %189 = vst.msk [vmem:[#allocation2 + $0x68] sm:$0xff] %vm174, 0.0
        %190 = vst.msk [vmem:[#allocation2 + $0x70] sm:$0x3] %vm177, 0.0
        %191 = vst.msk [vmem:[#allocation2 + $0x78] sm:$0xff] %vm174, 0.0
        %192 = vst.msk [vmem:[#allocation2 + $0x80] sm:$0xff] %vm174, 0.0
        %193 = vst.msk [vmem:[#allocation2 + $0x88] sm:$0x3] %vm177, 0.0
        %194 = vst.msk [vmem:[#allocation2 + $0x90] sm:$0xff] %vm174, 0.0
        %195 = vst.msk [vmem:[#allocation2 + $0x98] sm:$0xff] %vm174, 0.0
        %196 = vst.msk [vmem:[#allocation2 + $0xa0] sm:$0x3] %vm177, 0.0
        %197 = vst.msk [vmem:[#allocation2 + $0xa8] sm:$0xff] %vm174, 0.0
        %198 = vst.msk [vmem:[#allocation2 + $0xb0] sm:$0xff] %vm174, 0.0
        %199 = vst.msk [vmem:[#allocation2 + $0xb8] sm:$0x3] %vm177, 0.0
        %v200 = vld [vmem:[%s152] sm:$0xff]
        %v201 = vld [vmem:[%s152 + $0x8] sm:$0xff]
        %v202 = vld [vmem:[%s152 + $0x10] sm:$0xff]
        %v203 = vld [vmem:[%s152 + $0x18] sm:$0xff]
        %v204 = vld [vmem:[%s152 + $0x20] sm:$0xff]
        %v205 = vld [vmem:[%s152 + $0x28] sm:$0xff]
        %v206 = vld [vmem:[%s152 + $0x30] sm:$0xff]
        %v207 = vld [vmem:[%s152 + $0x38] sm:$0xff]
        %v208 = vld [vmem:[%s152 + $0x40] sm:$0xff]
        %v209 = vld [vmem:[%s152 + $0x48] sm:$0xff]
        %v210 = vld [vmem:[%s152 + $0x50] sm:$0xff]
        %v211 = vld [vmem:[%s152 + $0x58] sm:$0xff]
        %v212 = vld [vmem:[%s152 + $0x60] sm:$0xff]
        %v213 = vld [vmem:[%s152 + $0x68] sm:$0xff]
        %v214 = vld [vmem:[%s152 + $0x70] sm:$0xff]
        %v215 = vld [vmem:[%s152 + $0x78] sm:$0xff]
        %232 = vrot.lane.b32.xlu0 %v200, 1
        %v233 = vpop.permute.xlu0 %232
        %234 = vrot.lane.b32.xlu0 %v201, 1
        %v235 = vpop.permute.xlu0 %234
        %236 = vrot.lane.b32.xlu0 %v202, 1
        %v237 = vpop.permute.xlu0 %236
        %238 = vrot.lane.b32.xlu0 %v203, 1
        %v239 = vpop.permute.xlu0 %238
        %240 = vrot.lane.b32.xlu0 %v204, 1
        %v241 = vpop.permute.xlu0 %240
        %242 = vrot.lane.b32.xlu0 %v205, 1
        %v243 = vpop.permute.xlu0 %242
        %244 = vrot.lane.b32.xlu0 %v206, 1
        %v245 = vpop.permute.xlu0 %244
        %246 = vrot.lane.b32.xlu0 %v207, 1
        %v247 = vpop.permute.xlu0 %246
        %248 = vrot.lane.b32.xlu0 %v208, 1
        %v249 = vpop.permute.xlu0 %248
        %250 = vrot.lane.b32.xlu0 %v209, 1
        %v251 = vpop.permute.xlu0 %250
        %252 = vrot.lane.b32.xlu0 %v210, 1
        %v253 = vpop.permute.xlu0 %252
        %254 = vrot.lane.b32.xlu0 %v211, 1
        %v255 = vpop.permute.xlu0 %254
        %256 = vrot.lane.b32.xlu0 %v212, 1
        %v257 = vpop.permute.xlu0 %256
        %258 = vrot.lane.b32.xlu0 %v213, 1
        %v259 = vpop.permute.xlu0 %258
        %260 = vrot.lane.b32.xlu0 %v214, 1
        %v261 = vpop.permute.xlu0 %260
        %262 = vrot.lane.b32.xlu0 %v215, 1
        %v263 = vpop.permute.xlu0 %262
        %vm280 = vcmask 138248
        %281 = vst.msk [vmem:[#allocation2 + $0x1] sm:$0xff] %vm280, %v233
        %282 = vst.msk [vmem:[#allocation2 + $0x9] sm:$0xff] %vm280, %v235
        %283 = vst.msk [vmem:[#allocation2 + $0x19] sm:$0xff] %vm280, %v237
        %284 = vst.msk [vmem:[#allocation2 + $0x21] sm:$0xff] %vm280, %v239
        %285 = vst.msk [vmem:[#allocation2 + $0x31] sm:$0xff] %vm280, %v241
        %286 = vst.msk [vmem:[#allocation2 + $0x39] sm:$0xff] %vm280, %v243
        %287 = vst.msk [vmem:[#allocation2 + $0x49] sm:$0xff] %vm280, %v245
        %288 = vst.msk [vmem:[#allocation2 + $0x51] sm:$0xff] %vm280, %v247
        %289 = vst.msk [vmem:[#allocation2 + $0x61] sm:$0xff] %vm280, %v249
        %290 = vst.msk [vmem:[#allocation2 + $0x69] sm:$0xff] %vm280, %v251
        %291 = vst.msk [vmem:[#allocation2 + $0x79] sm:$0xff] %vm280, %v253
        %292 = vst.msk [vmem:[#allocation2 + $0x81] sm:$0xff] %vm280, %v255
        %293 = vst.msk [vmem:[#allocation2 + $0x91] sm:$0xff] %vm280, %v257
        %294 = vst.msk [vmem:[#allocation2 + $0x99] sm:$0xff] %vm280, %v259
        %295 = vst.msk [vmem:[#allocation2 + $0xa9] sm:$0xff] %vm280, %v261
        %296 = vst.msk [vmem:[#allocation2 + $0xb1] sm:$0xff] %vm280, %v263
        %v297 = vld [vmem:[#allocation2] sm:$0xff]
        %v298 = vld [vmem:[#allocation2 + $0x8] sm:$0xff]
        %v299 = vld [vmem:[#allocation2 + $0x10] sm:$0x3]
        %s300 = sld [smem:[#allocation3]]
        %v301 = vstv %s300
        %v302 = vmul.f32 %v301, %v297
        %v303 = vmul.f32 %v301, %v298
        %v304 = vadd.f32 %v302, 0.0
        %v305 = vadd.f32 %v303, 0.0
        %s306 = sld [smem:[#allocation3 + $0x48]]
        %v307 = vstv %s306
        %v308 = vmul.f32 %v307, %v297
        %v309 = vmul.f32 %v307, %v298
        %v310 = vadd.f32 %v308, 0.0
        %v311 = vadd.f32 %v309, 0.0
        %s312 = sld [smem:[#allocation3 + $0x90]]
        %v313 = vstv %s312
        %v314 = vmul.f32 %v313, %v297
        %v315 = vmul.f32 %v313, %v298
        %v316 = vadd.f32 %v314, 0.0
        %v317 = vadd.f32 %v315, 0.0
        %s318 = sld [smem:[#allocation3 + $0x3]]
        %v319 = vstv %s318
        %v320 = vmul.f32 %v319, %v297
        %v321 = vmul.f32 %v319, %v298
        %v322 = vmul.f32 %v319, %v299
        %vm326 = vcmask 1046528
        %v327 = vrot.slane %v320, 1
        %v328 = vrot.slane %v321, 1
        %v329 = vsel %vm326, %v327, %v328
        %v330 = vrot.slane %v322, 1
        %v331 = vsel %vm326, %v328, %v330
        %v334 = vadd.f32 %v304, %v329
        %v335 = vadd.f32 %v305, %v331
        %s336 = sld [smem:[#allocation3 + $0x4b]]
        %v337 = vstv %s336
        %v338 = vmul.f32 %v337, %v297
        %v339 = vmul.f32 %v337, %v298
        %v340 = vmul.f32 %v337, %v299
        %v344 = vrot.slane %v338, 1
        %v345 = vrot.slane %v339, 1
        %v346 = vsel %vm326, %v344, %v345
        %v347 = vrot.slane %v340, 1
        %v348 = vsel %vm326, %v345, %v347
        %v351 = vadd.f32 %v310, %v346
        %v352 = vadd.f32 %v311, %v348
        %s353 = sld [smem:[#allocation3 + $0x93]]
        %v354 = vstv %s353
        %v355 = vmul.f32 %v354, %v297
        %v356 = vmul.f32 %v354, %v298
        %v357 = vmul.f32 %v354, %v299
        %v361 = vrot.slane %v355, 1
        %v362 = vrot.slane %v356, 1
        %v363 = vsel %vm326, %v361, %v362
        %v364 = vrot.slane %v357, 1
        %v365 = vsel %vm326, %v362, %v364
        %v368 = vadd.f32 %v316, %v363
        %v369 = vadd.f32 %v317, %v365
        %s370 = sld [smem:[#allocation3 + $0x6]]
        %v371 = vstv %s370
        %v372 = vmul.f32 %v371, %v297
        %v373 = vmul.f32 %v371, %v298
        %v374 = vmul.f32 %v371, %v299
        %vm378 = vcmask 1045504
        %v379 = vrot.slane %v372, 2
        %v380 = vrot.slane %v373, 2
        %v381 = vsel %vm378, %v379, %v380
        %v382 = vrot.slane %v374, 2
        %v383 = vsel %vm378, %v380, %v382
        %v386 = vadd.f32 %v334, %v381
        %v387 = vadd.f32 %v335, %v383
        %s388 = sld [smem:[#allocation3 + $0x4e]]
        %v389 = vstv %s388
        %v390 = vmul.f32 %v389, %v297
        %v391 = vmul.f32 %v389, %v298
        %v392 = vmul.f32 %v389, %v299
        %v396 = vrot.slane %v390, 2
        %v397 = vrot.slane %v391, 2
        %v398 = vsel %vm378, %v396, %v397
        %v399 = vrot.slane %v392, 2
        %v400 = vsel %vm378, %v397, %v399
        %v403 = vadd.f32 %v351, %v398
        %v404 = vadd.f32 %v352, %v400
        %s405 = sld [smem:[#allocation3 + $0x96]]
        %v406 = vstv %s405
        %v407 = vmul.f32 %v406, %v297
        %v408 = vmul.f32 %v406, %v298
        %v409 = vmul.f32 %v406, %v299
        %v413 = vrot.slane %v407, 2
        %v414 = vrot.slane %v408, 2
        %v415 = vsel %vm378, %v413, %v414
        %v416 = vrot.slane %v409, 2
        %v417 = vsel %vm378, %v414, %v416
        %v420 = vadd.f32 %v368, %v415
        %v421 = vadd.f32 %v369, %v417
        %s422 = sld [smem:[#allocation3 + $0x1]]
        %v423 = vstv %s422
        %v424 = vmul.f32 %v423, %v297
        %v425 = vmul.f32 %v423, %v298
        %428 = vrot.lane.b32.xlu0 %v424, 127
        %v429 = vpop.permute.xlu0 %428
        %430 = vrot.lane.b32.xlu0 %v425, 127
        %v431 = vpop.permute.xlu0 %430
        %v434 = vadd.f32 %v386, %v429
        %v435 = vadd.f32 %v387, %v431
        %s436 = sld [smem:[#allocation3 + $0x49]]
        %v437 = vstv %s436
        %v438 = vmul.f32 %v437, %v297
        %v439 = vmul.f32 %v437, %v298
        %442 = vrot.lane.b32.xlu0 %v438, 127
        %v443 = vpop.permute.xlu0 %442
        %444 = vrot.lane.b32.xlu0 %v439, 127
        %v445 = vpop.permute.xlu0 %444
        %v448 = vadd.f32 %v403, %v443
        %v449 = vadd.f32 %v404, %v445
        %s450 = sld [smem:[#allocation3 + $0x91]]
        %v451 = vstv %s450
        %v452 = vmul.f32 %v451, %v297
        %v453 = vmul.f32 %v451, %v298
        %456 = vrot.lane.b32.xlu0 %v452, 127
        %v457 = vpop.permute.xlu0 %456
        %458 = vrot.lane.b32.xlu0 %v453, 127
        %v459 = vpop.permute.xlu0 %458
        %v462 = vadd.f32 %v420, %v457
        %v463 = vadd.f32 %v421, %v459
        %s464 = sld [smem:[#allocation3 + $0x4]]
        %v465 = vstv %s464
        %v466 = vmul.f32 %v465, %v297
        %v467 = vmul.f32 %v465, %v298
        %v468 = vmul.f32 %v465, %v299
        %v472 = vrot.slane %v466, 1
        %v473 = vrot.slane %v467, 1
        %v474 = vsel %vm326, %v472, %v473
        %v475 = vrot.slane %v468, 1
        %v476 = vsel %vm326, %v473, %v475
        %477 = vrot.lane.b32.xlu0 %v474, 127
        %v478 = vpop.permute.xlu0 %477
        %479 = vrot.lane.b32.xlu0 %v476, 127
        %v480 = vpop.permute.xlu0 %479
        %v483 = vadd.f32 %v434, %v478
        %v484 = vadd.f32 %v435, %v480
        %s485 = sld [smem:[#allocation3 + $0x4c]]
        %v486 = vstv %s485
        %v487 = vmul.f32 %v486, %v297
        %v488 = vmul.f32 %v486, %v298
        %v489 = vmul.f32 %v486, %v299
        %v493 = vrot.slane %v487, 1
        %v494 = vrot.slane %v488, 1
        %v495 = vsel %vm326, %v493, %v494
        %v496 = vrot.slane %v489, 1
        %v497 = vsel %vm326, %v494, %v496
        %498 = vrot.lane.b32.xlu0 %v495, 127
        %v499 = vpop.permute.xlu0 %498
        %500 = vrot.lane.b32.xlu0 %v497, 127
        %v501 = vpop.permute.xlu0 %500
        %v504 = vadd.f32 %v448, %v499
        %v505 = vadd.f32 %v449, %v501
        %s506 = sld [smem:[#allocation3 + $0x94]]
        %v507 = vstv %s506
        %v508 = vmul.f32 %v507, %v297
        %v509 = vmul.f32 %v507, %v298
        %v510 = vmul.f32 %v507, %v299
        %v514 = vrot.slane %v508, 1
        %v515 = vrot.slane %v509, 1
        %v516 = vsel %vm326, %v514, %v515
        %v517 = vrot.slane %v510, 1
        %v518 = vsel %vm326, %v515, %v517
        %519 = vrot.lane.b32.xlu0 %v516, 127
        %v520 = vpop.permute.xlu0 %519
        %521 = vrot.lane.b32.xlu0 %v518, 127
        %v522 = vpop.permute.xlu0 %521
        %v525 = vadd.f32 %v462, %v520
        %v526 = vadd.f32 %v463, %v522
        %s527 = sld [smem:[#allocation3 + $0x7]]
        %v528 = vstv %s527
        %v529 = vmul.f32 %v528, %v297
        %v530 = vmul.f32 %v528, %v298
        %v531 = vmul.f32 %v528, %v299
        %v535 = vrot.slane %v529, 2
        %v536 = vrot.slane %v530, 2
        %v537 = vsel %vm378, %v535, %v536
        %v538 = vrot.slane %v531, 2
        %v539 = vsel %vm378, %v536, %v538
        %540 = vrot.lane.b32.xlu0 %v537, 127
        %v541 = vpop.permute.xlu0 %540
        %542 = vrot.lane.b32.xlu0 %v539, 127
        %v543 = vpop.permute.xlu0 %542
        %v546 = vadd.f32 %v483, %v541
        %v547 = vadd.f32 %v484, %v543
        %s548 = sld [smem:[#allocation3 + $0x4f]]
        %v549 = vstv %s548
        %v550 = vmul.f32 %v549, %v297
        %v551 = vmul.f32 %v549, %v298
        %v552 = vmul.f32 %v549, %v299
        %v556 = vrot.slane %v550, 2
        %v557 = vrot.slane %v551, 2
        %v558 = vsel %vm378, %v556, %v557
        %v559 = vrot.slane %v552, 2
        %v560 = vsel %vm378, %v557, %v559
        %561 = vrot.lane.b32.xlu0 %v558, 127
        %v562 = vpop.permute.xlu0 %561
        %563 = vrot.lane.b32.xlu0 %v560, 127
        %v564 = vpop.permute.xlu0 %563
        %v567 = vadd.f32 %v504, %v562
        %v568 = vadd.f32 %v505, %v564
        %s569 = sld [smem:[#allocation3 + $0x97]]
        %v570 = vstv %s569
        %v571 = vmul.f32 %v570, %v297
        %v572 = vmul.f32 %v570, %v298
        %v573 = vmul.f32 %v570, %v299
        %v577 = vrot.slane %v571, 2
        %v578 = vrot.slane %v572, 2
        %v579 = vsel %vm378, %v577, %v578
        %v580 = vrot.slane %v573, 2
        %v581 = vsel %vm378, %v578, %v580
        %582 = vrot.lane.b32.xlu0 %v579, 127
        %v583 = vpop.permute.xlu0 %582
        %584 = vrot.lane.b32.xlu0 %v581, 127
        %v585 = vpop.permute.xlu0 %584
        %v588 = vadd.f32 %v525, %v583
        %v589 = vadd.f32 %v526, %v585
        %s590 = sld [smem:[#allocation3 + $0x2]]
        %v591 = vstv %s590
        %v592 = vmul.f32 %v591, %v297
        %v593 = vmul.f32 %v591, %v298
        %596 = vrot.lane.b32.xlu0 %v592, 126
        %v597 = vpop.permute.xlu0 %596
        %598 = vrot.lane.b32.xlu0 %v593, 126
        %v599 = vpop.permute.xlu0 %598
        %v602 = vadd.f32 %v546, %v597
        %v603 = vadd.f32 %v547, %v599
        %s604 = sld [smem:[#allocation3 + $0x4a]]
        %v605 = vstv %s604
        %v606 = vmul.f32 %v605, %v297
        %v607 = vmul.f32 %v605, %v298
        %610 = vrot.lane.b32.xlu0 %v606, 126
        %v611 = vpop.permute.xlu0 %610
        %612 = vrot.lane.b32.xlu0 %v607, 126
        %v613 = vpop.permute.xlu0 %612
        %v616 = vadd.f32 %v567, %v611
        %v617 = vadd.f32 %v568, %v613
        %s618 = sld [smem:[#allocation3 + $0x92]]
        %v619 = vstv %s618
        %v620 = vmul.f32 %v619, %v297
        %v621 = vmul.f32 %v619, %v298
        %624 = vrot.lane.b32.xlu0 %v620, 126
        %v625 = vpop.permute.xlu0 %624
        %626 = vrot.lane.b32.xlu0 %v621, 126
        %v627 = vpop.permute.xlu0 %626
        %v630 = vadd.f32 %v588, %v625
        %v631 = vadd.f32 %v589, %v627
        %s632 = sld [smem:[#allocation3 + $0x5]]
        %v633 = vstv %s632
        %v634 = vmul.f32 %v633, %v297
        %v635 = vmul.f32 %v633, %v298
        %v636 = vmul.f32 %v633, %v299
        %v640 = vrot.slane %v634, 1
        %v641 = vrot.slane %v635, 1
        %v642 = vsel %vm326, %v640, %v641
        %v643 = vrot.slane %v636, 1
        %v644 = vsel %vm326, %v641, %v643
        %645 = vrot.lane.b32.xlu0 %v642, 126
        %v646 = vpop.permute.xlu0 %645
        %647 = vrot.lane.b32.xlu0 %v644, 126
        %v648 = vpop.permute.xlu0 %647
        %v651 = vadd.f32 %v602, %v646
        %v652 = vadd.f32 %v603, %v648
        %s653 = sld [smem:[#allocation3 + $0x4d]]
        %v654 = vstv %s653
        %v655 = vmul.f32 %v654, %v297
        %v656 = vmul.f32 %v654, %v298
        %v657 = vmul.f32 %v654, %v299
        %v661 = vrot.slane %v655, 1
        %v662 = vrot.slane %v656, 1
        %v663 = vsel %vm326, %v661, %v662
        %v664 = vrot.slane %v657, 1
        %v665 = vsel %vm326, %v662, %v664
        %666 = vrot.lane.b32.xlu0 %v663, 126
        %v667 = vpop.permute.xlu0 %666
        %668 = vrot.lane.b32.xlu0 %v665, 126
        %v669 = vpop.permute.xlu0 %668
        %v672 = vadd.f32 %v616, %v667
        %v673 = vadd.f32 %v617, %v669
        %s674 = sld [smem:[#allocation3 + $0x95]]
        %v675 = vstv %s674
        %v676 = vmul.f32 %v675, %v297
        %v677 = vmul.f32 %v675, %v298
        %v678 = vmul.f32 %v675, %v299
        %v682 = vrot.slane %v676, 1
        %v683 = vrot.slane %v677, 1
        %v684 = vsel %vm326, %v682, %v683
        %v685 = vrot.slane %v678, 1
        %v686 = vsel %vm326, %v683, %v685
        %687 = vrot.lane.b32.xlu0 %v684, 126
        %v688 = vpop.permute.xlu0 %687
        %689 = vrot.lane.b32.xlu0 %v686, 126
        %v690 = vpop.permute.xlu0 %689
        %v693 = vadd.f32 %v630, %v688
        %v694 = vadd.f32 %v631, %v690
        %s695 = sld [smem:[#allocation3 + $0x8]]
        %v696 = vstv %s695
        %v697 = vmul.f32 %v696, %v297
        %v698 = vmul.f32 %v696, %v298
        %v699 = vmul.f32 %v696, %v299
        %v703 = vrot.slane %v697, 2
        %v704 = vrot.slane %v698, 2
        %v705 = vsel %vm378, %v703, %v704
        %v706 = vrot.slane %v699, 2
        %v707 = vsel %vm378, %v704, %v706
        %708 = vrot.lane.b32.xlu0 %v705, 126
        %v709 = vpop.permute.xlu0 %708
        %710 = vrot.lane.b32.xlu0 %v707, 126
        %v711 = vpop.permute.xlu0 %710
        %v714 = vadd.f32 %v651, %v709
        %v715 = vadd.f32 %v652, %v711
        %s716 = sld [smem:[#allocation3 + $0x50]]
        %v717 = vstv %s716
        %v718 = vmul.f32 %v717, %v297
        %v719 = vmul.f32 %v717, %v298
        %v720 = vmul.f32 %v717, %v299
        %v724 = vrot.slane %v718, 2
        %v725 = vrot.slane %v719, 2
        %v726 = vsel %vm378, %v724, %v725
        %v727 = vrot.slane %v720, 2
        %v728 = vsel %vm378, %v725, %v727
        %729 = vrot.lane.b32.xlu0 %v726, 126
        %v730 = vpop.permute.xlu0 %729
        %731 = vrot.lane.b32.xlu0 %v728, 126
        %v732 = vpop.permute.xlu0 %731
        %v735 = vadd.f32 %v672, %v730
        %v736 = vadd.f32 %v673, %v732
        %s737 = sld [smem:[#allocation3 + $0x98]]
        %v738 = vstv %s737
        %v739 = vmul.f32 %v738, %v297
        %v740 = vmul.f32 %v738, %v298
        %v741 = vmul.f32 %v738, %v299
        %v745 = vrot.slane %v739, 2
        %v746 = vrot.slane %v740, 2
        %v747 = vsel %vm378, %v745, %v746
        %v748 = vrot.slane %v741, 2
        %v749 = vsel %vm378, %v746, %v748
        %750 = vrot.lane.b32.xlu0 %v747, 126
        %v751 = vpop.permute.xlu0 %750
        %752 = vrot.lane.b32.xlu0 %v749, 126
        %v753 = vpop.permute.xlu0 %752
        %v756 = vadd.f32 %v693, %v751
        %v757 = vadd.f32 %v694, %v753
        %s758 = scalar_lea.vmem [#allocation2], 24
        %v759 = vld [vmem:[%s758] sm:$0xff]
        %v760 = vld [vmem:[%s758 + $0x8] sm:$0xff]
        %v761 = vld [vmem:[%s758 + $0x10] sm:$0x3]
        %s762 = sld [smem:[#allocation3 + $0x9]]
        %v763 = vstv %s762
        %v764 = vmul.f32 %v763, %v759
        %v765 = vmul.f32 %v763, %v760
        %v766 = vadd.f32 %v714, %v764
        %v767 = vadd.f32 %v715, %v765
        %s768 = sld [smem:[#allocation3 + $0x51]]
        %v769 = vstv %s768
        %v770 = vmul.f32 %v769, %v759
        %v771 = vmul.f32 %v769, %v760
        %v772 = vadd.f32 %v735, %v770
        %v773 = vadd.f32 %v736, %v771
        %s774 = sld [smem:[#allocation3 + $0x99]]
        %v775 = vstv %s774
        %v776 = vmul.f32 %v775, %v759
        %v777 = vmul.f32 %v775, %v760
        %v778 = vadd.f32 %v756, %v776
        %v779 = vadd.f32 %v757, %v777
        %s780 = sld [smem:[#allocation3 + $0xc]]
        %v781 = vstv %s780
        %v782 = vmul.f32 %v781, %v759
        %v783 = vmul.f32 %v781, %v760
        %v784 = vmul.f32 %v781, %v761
        %v788 = vrot.slane %v782, 1
        %v789 = vrot.slane %v783, 1
        %v790 = vsel %vm326, %v788, %v789
        %v791 = vrot.slane %v784, 1
        %v792 = vsel %vm326, %v789, %v791
        %v795 = vadd.f32 %v766, %v790
        %v796 = vadd.f32 %v767, %v792
        %s797 = sld [smem:[#allocation3 + $0x54]]
        %v798 = vstv %s797
        %v799 = vmul.f32 %v798, %v759
        %v800 = vmul.f32 %v798, %v760
        %v801 = vmul.f32 %v798, %v761
        %v805 = vrot.slane %v799, 1
        %v806 = vrot.slane %v800, 1
        %v807 = vsel %vm326, %v805, %v806
        %v808 = vrot.slane %v801, 1
        %v809 = vsel %vm326, %v806, %v808
        %v812 = vadd.f32 %v772, %v807
        %v813 = vadd.f32 %v773, %v809
        %s814 = sld [smem:[#allocation3 + $0x9c]]
        %v815 = vstv %s814
        %v816 = vmul.f32 %v815, %v759
        %v817 = vmul.f32 %v815, %v760
        %v818 = vmul.f32 %v815, %v761
        %v822 = vrot.slane %v816, 1
        %v823 = vrot.slane %v817, 1
        %v824 = vsel %vm326, %v822, %v823
        %v825 = vrot.slane %v818, 1
        %v826 = vsel %vm326, %v823, %v825
        %v829 = vadd.f32 %v778, %v824
        %v830 = vadd.f32 %v779, %v826
        %s831 = sld [smem:[#allocation3 + $0xf]]
        %v832 = vstv %s831
        %v833 = vmul.f32 %v832, %v759
        %v834 = vmul.f32 %v832, %v760
        %v835 = vmul.f32 %v832, %v761
        %v839 = vrot.slane %v833, 2
        %v840 = vrot.slane %v834, 2
        %v841 = vsel %vm378, %v839, %v840
        %v842 = vrot.slane %v835, 2
        %v843 = vsel %vm378, %v840, %v842
        %v846 = vadd.f32 %v795, %v841
        %v847 = vadd.f32 %v796, %v843
        %s848 = sld [smem:[#allocation3 + $0x57]]
        %v849 = vstv %s848
        %v850 = vmul.f32 %v849, %v759
        %v851 = vmul.f32 %v849, %v760
        %v852 = vmul.f32 %v849, %v761
        %v856 = vrot.slane %v850, 2
        %v857 = vrot.slane %v851, 2
        %v858 = vsel %vm378, %v856, %v857
        %v859 = vrot.slane %v852, 2
        %v860 = vsel %vm378, %v857, %v859
        %v863 = vadd.f32 %v812, %v858
        %v864 = vadd.f32 %v813, %v860
        %s865 = sld [smem:[#allocation3 + $0x9f]]
        %v866 = vstv %s865
        %v867 = vmul.f32 %v866, %v759
        %v868 = vmul.f32 %v866, %v760
        %v869 = vmul.f32 %v866, %v761
        %v873 = vrot.slane %v867, 2
        %v874 = vrot.slane %v868, 2
        %v875 = vsel %vm378, %v873, %v874
        %v876 = vrot.slane %v869, 2
        %v877 = vsel %vm378, %v874, %v876
        %v880 = vadd.f32 %v829, %v875
        %v881 = vadd.f32 %v830, %v877
        %s882 = sld [smem:[#allocation3 + $0xa]]
        %v883 = vstv %s882
        %v884 = vmul.f32 %v883, %v759
        %v885 = vmul.f32 %v883, %v760
        %888 = vrot.lane.b32.xlu0 %v884, 127
        %v889 = vpop.permute.xlu0 %888
        %890 = vrot.lane.b32.xlu0 %v885, 127
        %v891 = vpop.permute.xlu0 %890
        %v894 = vadd.f32 %v846, %v889
        %v895 = vadd.f32 %v847, %v891
        %s896 = sld [smem:[#allocation3 + $0x52]]
        %v897 = vstv %s896
        %v898 = vmul.f32 %v897, %v759
        %v899 = vmul.f32 %v897, %v760
        %902 = vrot.lane.b32.xlu0 %v898, 127
        %v903 = vpop.permute.xlu0 %902
        %904 = vrot.lane.b32.xlu0 %v899, 127
        %v905 = vpop.permute.xlu0 %904
        %v908 = vadd.f32 %v863, %v903
        %v909 = vadd.f32 %v864, %v905
        %s910 = sld [smem:[#allocation3 + $0x9a]]
        %v911 = vstv %s910
        %v912 = vmul.f32 %v911, %v759
        %v913 = vmul.f32 %v911, %v760
        %916 = vrot.lane.b32.xlu0 %v912, 127
        %v917 = vpop.permute.xlu0 %916
        %918 = vrot.lane.b32.xlu0 %v913, 127
        %v919 = vpop.permute.xlu0 %918
        %v922 = vadd.f32 %v880, %v917
        %v923 = vadd.f32 %v881, %v919
        %s924 = sld [smem:[#allocation3 + $0xd]]
        %v925 = vstv %s924
        %v926 = vmul.f32 %v925, %v759
        %v927 = vmul.f32 %v925, %v760
        %v928 = vmul.f32 %v925, %v761
        %v932 = vrot.slane %v926, 1
        %v933 = vrot.slane %v927, 1
        %v934 = vsel %vm326, %v932, %v933
        %v935 = vrot.slane %v928, 1
        %v936 = vsel %vm326, %v933, %v935
        %937 = vrot.lane.b32.xlu0 %v934, 127
        %v938 = vpop.permute.xlu0 %937
        %939 = vrot.lane.b32.xlu0 %v936, 127
        %v940 = vpop.permute.xlu0 %939
        %v943 = vadd.f32 %v894, %v938
        %v944 = vadd.f32 %v895, %v940
        %s945 = sld [smem:[#allocation3 + $0x55]]
        %v946 = vstv %s945
        %v947 = vmul.f32 %v946, %v759
        %v948 = vmul.f32 %v946, %v760
        %v949 = vmul.f32 %v946, %v761
        %v953 = vrot.slane %v947, 1
        %v954 = vrot.slane %v948, 1
        %v955 = vsel %vm326, %v953, %v954
        %v956 = vrot.slane %v949, 1
        %v957 = vsel %vm326, %v954, %v956
        %958 = vrot.lane.b32.xlu0 %v955, 127
        %v959 = vpop.permute.xlu0 %958
        %960 = vrot.lane.b32.xlu0 %v957, 127
        %v961 = vpop.permute.xlu0 %960
        %v964 = vadd.f32 %v908, %v959
        %v965 = vadd.f32 %v909, %v961
        %s966 = sld [smem:[#allocation3 + $0x9d]]
        %v967 = vstv %s966
        %v968 = vmul.f32 %v967, %v759
        %v969 = vmul.f32 %v967, %v760
        %v970 = vmul.f32 %v967, %v761
        %v974 = vrot.slane %v968, 1
        %v975 = vrot.slane %v969, 1
        %v976 = vsel %vm326, %v974, %v975
        %v977 = vrot.slane %v970, 1
        %v978 = vsel %vm326, %v975, %v977
        %979 = vrot.lane.b32.xlu0 %v976, 127
        %v980 = vpop.permute.xlu0 %979
        %981 = vrot.lane.b32.xlu0 %v978, 127
        %v982 = vpop.permute.xlu0 %981
        %v985 = vadd.f32 %v922, %v980
        %v986 = vadd.f32 %v923, %v982
        %s987 = sld [smem:[#allocation3 + $0x10]]
        %v988 = vstv %s987
        %v989 = vmul.f32 %v988, %v759
        %v990 = vmul.f32 %v988, %v760
        %v991 = vmul.f32 %v988, %v761
        %v995 = vrot.slane %v989, 2
        %v996 = vrot.slane %v990, 2
        %v997 = vsel %vm378, %v995, %v996
        %v998 = vrot.slane %v991, 2
        %v999 = vsel %vm378, %v996, %v998
        %1000 = vrot.lane.b32.xlu0 %v997, 127
        %v1001 = vpop.permute.xlu0 %1000
        %1002 = vrot.lane.b32.xlu0 %v999, 127
        %v1003 = vpop.permute.xlu0 %1002
        %v1006 = vadd.f32 %v943, %v1001
        %v1007 = vadd.f32 %v944, %v1003
        %s1008 = sld [smem:[#allocation3 + $0x58]]
        %v1009 = vstv %s1008
        %v1010 = vmul.f32 %v1009, %v759
        %v1011 = vmul.f32 %v1009, %v760
        %v1012 = vmul.f32 %v1009, %v761
        %v1016 = vrot.slane %v1010, 2
        %v1017 = vrot.slane %v1011, 2
        %v1018 = vsel %vm378, %v1016, %v1017
        %v1019 = vrot.slane %v1012, 2
        %v1020 = vsel %vm378, %v1017, %v1019
        %1021 = vrot.lane.b32.xlu0 %v1018, 127
        %v1022 = vpop.permute.xlu0 %1021
        %1023 = vrot.lane.b32.xlu0 %v1020, 127
        %v1024 = vpop.permute.xlu0 %1023
        %v1027 = vadd.f32 %v964, %v1022
        %v1028 = vadd.f32 %v965, %v1024
        %s1029 = sld [smem:[#allocation3 + $0xa0]]
        %v1030 = vstv %s1029
        %v1031 = vmul.f32 %v1030, %v759
        %v1032 = vmul.f32 %v1030, %v760
        %v1033 = vmul.f32 %v1030, %v761
        %v1037 = vrot.slane %v1031, 2
        %v1038 = vrot.slane %v1032, 2
        %v1039 = vsel %vm378, %v1037, %v1038
        %v1040 = vrot.slane %v1033, 2
        %v1041 = vsel %vm378, %v1038, %v1040
        %1042 = vrot.lane.b32.xlu0 %v1039, 127
        %v1043 = vpop.permute.xlu0 %1042
        %1044 = vrot.lane.b32.xlu0 %v1041, 127
        %v1045 = vpop.permute.xlu0 %1044
        %v1048 = vadd.f32 %v985, %v1043
        %v1049 = vadd.f32 %v986, %v1045
        %s1050 = sld [smem:[#allocation3 + $0xb]]
        %v1051 = vstv %s1050
        %v1052 = vmul.f32 %v1051, %v759
        %v1053 = vmul.f32 %v1051, %v760
        %1056 = vrot.lane.b32.xlu0 %v1052, 126
        %v1057 = vpop.permute.xlu0 %1056
        %1058 = vrot.lane.b32.xlu0 %v1053, 126
        %v1059 = vpop.permute.xlu0 %1058
        %v1062 = vadd.f32 %v1006, %v1057
        %v1063 = vadd.f32 %v1007, %v1059
        %s1064 = sld [smem:[#allocation3 + $0x53]]
        %v1065 = vstv %s1064
        %v1066 = vmul.f32 %v1065, %v759
        %v1067 = vmul.f32 %v1065, %v760
        %1070 = vrot.lane.b32.xlu0 %v1066, 126
        %v1071 = vpop.permute.xlu0 %1070
        %1072 = vrot.lane.b32.xlu0 %v1067, 126
        %v1073 = vpop.permute.xlu0 %1072
        %v1076 = vadd.f32 %v1027, %v1071
        %v1077 = vadd.f32 %v1028, %v1073
        %s1078 = sld [smem:[#allocation3 + $0x9b]]
        %v1079 = vstv %s1078
        %v1080 = vmul.f32 %v1079, %v759
        %v1081 = vmul.f32 %v1079, %v760
        %1084 = vrot.lane.b32.xlu0 %v1080, 126
        %v1085 = vpop.permute.xlu0 %1084
        %1086 = vrot.lane.b32.xlu0 %v1081, 126
        %v1087 = vpop.permute.xlu0 %1086
        %v1090 = vadd.f32 %v1048, %v1085
        %v1091 = vadd.f32 %v1049, %v1087
        %s1092 = sld [smem:[#allocation3 + $0xe]]
        %v1093 = vstv %s1092
        %v1094 = vmul.f32 %v1093, %v759
        %v1095 = vmul.f32 %v1093, %v760
        %v1096 = vmul.f32 %v1093, %v761
        %v1100 = vrot.slane %v1094, 1
        %v1101 = vrot.slane %v1095, 1
        %v1102 = vsel %vm326, %v1100, %v1101
        %v1103 = vrot.slane %v1096, 1
        %v1104 = vsel %vm326, %v1101, %v1103
        %1105 = vrot.lane.b32.xlu0 %v1102, 126
        %v1106 = vpop.permute.xlu0 %1105
        %1107 = vrot.lane.b32.xlu0 %v1104, 126
        %v1108 = vpop.permute.xlu0 %1107
        %v1111 = vadd.f32 %v1062, %v1106
        %v1112 = vadd.f32 %v1063, %v1108
        %s1113 = sld [smem:[#allocation3 + $0x56]]
        %v1114 = vstv %s1113
        %v1115 = vmul.f32 %v1114, %v759
        %v1116 = vmul.f32 %v1114, %v760
        %v1117 = vmul.f32 %v1114, %v761
        %v1121 = vrot.slane %v1115, 1
        %v1122 = vrot.slane %v1116, 1
        %v1123 = vsel %vm326, %v1121, %v1122
        %v1124 = vrot.slane %v1117, 1
        %v1125 = vsel %vm326, %v1122, %v1124
        %1126 = vrot.lane.b32.xlu0 %v1123, 126
        %v1127 = vpop.permute.xlu0 %1126
        %1128 = vrot.lane.b32.xlu0 %v1125, 126
        %v1129 = vpop.permute.xlu0 %1128
        %v1132 = vadd.f32 %v1076, %v1127
        %v1133 = vadd.f32 %v1077, %v1129
        %s1134 = sld [smem:[#allocation3 + $0x9e]]
        %v1135 = vstv %s1134
        %v1136 = vmul.f32 %v1135, %v759
        %v1137 = vmul.f32 %v1135, %v760
        %v1138 = vmul.f32 %v1135, %v761
        %v1142 = vrot.slane %v1136, 1
        %v1143 = vrot.slane %v1137, 1
        %v1144 = vsel %vm326, %v1142, %v1143
        %v1145 = vrot.slane %v1138, 1
        %v1146 = vsel %vm326, %v1143, %v1145
        %1147 = vrot.lane.b32.xlu0 %v1144, 126
        %v1148 = vpop.permute.xlu0 %1147
        %1149 = vrot.lane.b32.xlu0 %v1146, 126
        %v1150 = vpop.permute.xlu0 %1149
        %v1153 = vadd.f32 %v1090, %v1148
        %v1154 = vadd.f32 %v1091, %v1150
        %s1155 = sld [smem:[#allocation3 + $0x11]]
        %v1156 = vstv %s1155
        %v1157 = vmul.f32 %v1156, %v759
        %v1158 = vmul.f32 %v1156, %v760
        %v1159 = vmul.f32 %v1156, %v761
        %v1163 = vrot.slane %v1157, 2
        %v1164 = vrot.slane %v1158, 2
        %v1165 = vsel %vm378, %v1163, %v1164
        %v1166 = vrot.slane %v1159, 2
        %v1167 = vsel %vm378, %v1164, %v1166
        %1168 = vrot.lane.b32.xlu0 %v1165, 126
        %v1169 = vpop.permute.xlu0 %1168
        %1170 = vrot.lane.b32.xlu0 %v1167, 126
        %v1171 = vpop.permute.xlu0 %1170
        %v1174 = vadd.f32 %v1111, %v1169
        %v1175 = vadd.f32 %v1112, %v1171
        %s1176 = sld [smem:[#allocation3 + $0x59]]
        %v1177 = vstv %s1176
        %v1178 = vmul.f32 %v1177, %v759
        %v1179 = vmul.f32 %v1177, %v760
        %v1180 = vmul.f32 %v1177, %v761
        %v1184 = vrot.slane %v1178, 2
        %v1185 = vrot.slane %v1179, 2
        %v1186 = vsel %vm378, %v1184, %v1185
        %v1187 = vrot.slane %v1180, 2
        %v1188 = vsel %vm378, %v1185, %v1187
        %1189 = vrot.lane.b32.xlu0 %v1186, 126
        %v1190 = vpop.permute.xlu0 %1189
        %1191 = vrot.lane.b32.xlu0 %v1188, 126
        %v1192 = vpop.permute.xlu0 %1191
        %v1195 = vadd.f32 %v1132, %v1190
        %v1196 = vadd.f32 %v1133, %v1192
        %s1197 = sld [smem:[#allocation3 + $0xa1]]
        %v1198 = vstv %s1197
        %v1199 = vmul.f32 %v1198, %v759
        %v1200 = vmul.f32 %v1198, %v760
        %v1201 = vmul.f32 %v1198, %v761
        %v1205 = vrot.slane %v1199, 2
        %v1206 = vrot.slane %v1200, 2
        %v1207 = vsel %vm378, %v1205, %v1206
        %v1208 = vrot.slane %v1201, 2
        %v1209 = vsel %vm378, %v1206, %v1208
        %1210 = vrot.lane.b32.xlu0 %v1207, 126
        %v1211 = vpop.permute.xlu0 %1210
        %1212 = vrot.lane.b32.xlu0 %v1209, 126
        %v1213 = vpop.permute.xlu0 %1212
        %v1216 = vadd.f32 %v1153, %v1211
        %v1217 = vadd.f32 %v1154, %v1213
        %s1218 = scalar_lea.vmem [#allocation2], 48
        %v1219 = vld [vmem:[%s1218] sm:$0xff]
        %v1220 = vld [vmem:[%s1218 + $0x8] sm:$0xff]
        %v1221 = vld [vmem:[%s1218 + $0x10] sm:$0x3]
        %s1222 = sld [smem:[#allocation3 + $0x12]]
        %v1223 = vstv %s1222
        %v1224 = vmul.f32 %v1223, %v1219
        %v1225 = vmul.f32 %v1223, %v1220
        %v1226 = vadd.f32 %v1174, %v1224
        %v1227 = vadd.f32 %v1175, %v1225
        %s1228 = sld [smem:[#allocation3 + $0x5a]]
        %v1229 = vstv %s1228
        %v1230 = vmul.f32 %v1229, %v1219
        %v1231 = vmul.f32 %v1229, %v1220
        %v1232 = vadd.f32 %v1195, %v1230
        %v1233 = vadd.f32 %v1196, %v1231
        %s1234 = sld [smem:[#allocation3 + $0xa2]]
        %v1235 = vstv %s1234
        %v1236 = vmul.f32 %v1235, %v1219
        %v1237 = vmul.f32 %v1235, %v1220
        %v1238 = vadd.f32 %v1216, %v1236
        %v1239 = vadd.f32 %v1217, %v1237
        %s1240 = sld [smem:[#allocation3 + $0x15]]
        %v1241 = vstv %s1240
        %v1242 = vmul.f32 %v1241, %v1219
        %v1243 = vmul.f32 %v1241, %v1220
        %v1244 = vmul.f32 %v1241, %v1221
        %v1248 = vrot.slane %v1242, 1
        %v1249 = vrot.slane %v1243, 1
        %v1250 = vsel %vm326, %v1248, %v1249
        %v1251 = vrot.slane %v1244, 1
        %v1252 = vsel %vm326, %v1249, %v1251
        %v1255 = vadd.f32 %v1226, %v1250
        %v1256 = vadd.f32 %v1227, %v1252
        %s1257 = sld [smem:[#allocation3 + $0x5d]]
        %v1258 = vstv %s1257
        %v1259 = vmul.f32 %v1258, %v1219
        %v1260 = vmul.f32 %v1258, %v1220
        %v1261 = vmul.f32 %v1258, %v1221
        %v1265 = vrot.slane %v1259, 1
        %v1266 = vrot.slane %v1260, 1
        %v1267 = vsel %vm326, %v1265, %v1266
        %v1268 = vrot.slane %v1261, 1
        %v1269 = vsel %vm326, %v1266, %v1268
        %v1272 = vadd.f32 %v1232, %v1267
        %v1273 = vadd.f32 %v1233, %v1269
        %s1274 = sld [smem:[#allocation3 + $0xa5]]
        %v1275 = vstv %s1274
        %v1276 = vmul.f32 %v1275, %v1219
        %v1277 = vmul.f32 %v1275, %v1220
        %v1278 = vmul.f32 %v1275, %v1221
        %v1282 = vrot.slane %v1276, 1
        %v1283 = vrot.slane %v1277, 1
        %v1284 = vsel %vm326, %v1282, %v1283
        %v1285 = vrot.slane %v1278, 1
        %v1286 = vsel %vm326, %v1283, %v1285
        %v1289 = vadd.f32 %v1238, %v1284
        %v1290 = vadd.f32 %v1239, %v1286
        %s1291 = sld [smem:[#allocation3 + $0x18]]
        %v1292 = vstv %s1291
        %v1293 = vmul.f32 %v1292, %v1219
        %v1294 = vmul.f32 %v1292, %v1220
        %v1295 = vmul.f32 %v1292, %v1221
        %v1299 = vrot.slane %v1293, 2
        %v1300 = vrot.slane %v1294, 2
        %v1301 = vsel %vm378, %v1299, %v1300
        %v1302 = vrot.slane %v1295, 2
        %v1303 = vsel %vm378, %v1300, %v1302
        %v1306 = vadd.f32 %v1255, %v1301
        %v1307 = vadd.f32 %v1256, %v1303
        %s1308 = sld [smem:[#allocation3 + $0x60]]
        %v1309 = vstv %s1308
        %v1310 = vmul.f32 %v1309, %v1219
        %v1311 = vmul.f32 %v1309, %v1220
        %v1312 = vmul.f32 %v1309, %v1221
        %v1316 = vrot.slane %v1310, 2
        %v1317 = vrot.slane %v1311, 2
        %v1318 = vsel %vm378, %v1316, %v1317
        %v1319 = vrot.slane %v1312, 2
        %v1320 = vsel %vm378, %v1317, %v1319
        %v1323 = vadd.f32 %v1272, %v1318
        %v1324 = vadd.f32 %v1273, %v1320
        %s1325 = sld [smem:[#allocation3 + $0xa8]]
        %v1326 = vstv %s1325
        %v1327 = vmul.f32 %v1326, %v1219
        %v1328 = vmul.f32 %v1326, %v1220
        %v1329 = vmul.f32 %v1326, %v1221
        %v1333 = vrot.slane %v1327, 2
        %v1334 = vrot.slane %v1328, 2
        %v1335 = vsel %vm378, %v1333, %v1334
        %v1336 = vrot.slane %v1329, 2
        %v1337 = vsel %vm378, %v1334, %v1336
        %v1340 = vadd.f32 %v1289, %v1335
        %v1341 = vadd.f32 %v1290, %v1337
        %s1342 = sld [smem:[#allocation3 + $0x13]]
        %v1343 = vstv %s1342
        %v1344 = vmul.f32 %v1343, %v1219
        %v1345 = vmul.f32 %v1343, %v1220
        %1348 = vrot.lane.b32.xlu0 %v1344, 127
        %v1349 = vpop.permute.xlu0 %1348
        %1350 = vrot.lane.b32.xlu0 %v1345, 127
        %v1351 = vpop.permute.xlu0 %1350
        %v1354 = vadd.f32 %v1306, %v1349
        %v1355 = vadd.f32 %v1307, %v1351
        %s1356 = sld [smem:[#allocation3 + $0x5b]]
        %v1357 = vstv %s1356
        %v1358 = vmul.f32 %v1357, %v1219
        %v1359 = vmul.f32 %v1357, %v1220
        %1362 = vrot.lane.b32.xlu0 %v1358, 127
        %v1363 = vpop.permute.xlu0 %1362
        %1364 = vrot.lane.b32.xlu0 %v1359, 127
        %v1365 = vpop.permute.xlu0 %1364
        %v1368 = vadd.f32 %v1323, %v1363
        %v1369 = vadd.f32 %v1324, %v1365
        %s1370 = sld [smem:[#allocation3 + $0xa3]]
        %v1371 = vstv %s1370
        %v1372 = vmul.f32 %v1371, %v1219
        %v1373 = vmul.f32 %v1371, %v1220
        %1376 = vrot.lane.b32.xlu0 %v1372, 127
        %v1377 = vpop.permute.xlu0 %1376
        %1378 = vrot.lane.b32.xlu0 %v1373, 127
        %v1379 = vpop.permute.xlu0 %1378
        %v1382 = vadd.f32 %v1340, %v1377
        %v1383 = vadd.f32 %v1341, %v1379
        %s1384 = sld [smem:[#allocation3 + $0x16]]
        %v1385 = vstv %s1384
        %v1386 = vmul.f32 %v1385, %v1219
        %v1387 = vmul.f32 %v1385, %v1220
        %v1388 = vmul.f32 %v1385, %v1221
        %v1392 = vrot.slane %v1386, 1
        %v1393 = vrot.slane %v1387, 1
        %v1394 = vsel %vm326, %v1392, %v1393
        %v1395 = vrot.slane %v1388, 1
        %v1396 = vsel %vm326, %v1393, %v1395
        %1397 = vrot.lane.b32.xlu0 %v1394, 127
        %v1398 = vpop.permute.xlu0 %1397
        %1399 = vrot.lane.b32.xlu0 %v1396, 127
        %v1400 = vpop.permute.xlu0 %1399
        %v1403 = vadd.f32 %v1354, %v1398
        %v1404 = vadd.f32 %v1355, %v1400
        %s1405 = sld [smem:[#allocation3 + $0x5e]]
        %v1406 = vstv %s1405
        %v1407 = vmul.f32 %v1406, %v1219
        %v1408 = vmul.f32 %v1406, %v1220
        %v1409 = vmul.f32 %v1406, %v1221
        %v1413 = vrot.slane %v1407, 1
        %v1414 = vrot.slane %v1408, 1
        %v1415 = vsel %vm326, %v1413, %v1414
        %v1416 = vrot.slane %v1409, 1
        %v1417 = vsel %vm326, %v1414, %v1416
        %1418 = vrot.lane.b32.xlu0 %v1415, 127
        %v1419 = vpop.permute.xlu0 %1418
        %1420 = vrot.lane.b32.xlu0 %v1417, 127
        %v1421 = vpop.permute.xlu0 %1420
        %v1424 = vadd.f32 %v1368, %v1419
        %v1425 = vadd.f32 %v1369, %v1421
        %s1426 = sld [smem:[#allocation3 + $0xa6]]
        %v1427 = vstv %s1426
        %v1428 = vmul.f32 %v1427, %v1219
        %v1429 = vmul.f32 %v1427, %v1220
        %v1430 = vmul.f32 %v1427, %v1221
        %v1434 = vrot.slane %v1428, 1
        %v1435 = vrot.slane %v1429, 1
        %v1436 = vsel %vm326, %v1434, %v1435
        %v1437 = vrot.slane %v1430, 1
        %v1438 = vsel %vm326, %v1435, %v1437
        %1439 = vrot.lane.b32.xlu0 %v1436, 127
        %v1440 = vpop.permute.xlu0 %1439
        %1441 = vrot.lane.b32.xlu0 %v1438, 127
        %v1442 = vpop.permute.xlu0 %1441
        %v1445 = vadd.f32 %v1382, %v1440
        %v1446 = vadd.f32 %v1383, %v1442
        %s1447 = sld [smem:[#allocation3 + $0x19]]
        %v1448 = vstv %s1447
        %v1449 = vmul.f32 %v1448, %v1219
        %v1450 = vmul.f32 %v1448, %v1220
        %v1451 = vmul.f32 %v1448, %v1221
        %v1455 = vrot.slane %v1449, 2
        %v1456 = vrot.slane %v1450, 2
        %v1457 = vsel %vm378, %v1455, %v1456
        %v1458 = vrot.slane %v1451, 2
        %v1459 = vsel %vm378, %v1456, %v1458
        %1460 = vrot.lane.b32.xlu0 %v1457, 127
        %v1461 = vpop.permute.xlu0 %1460
        %1462 = vrot.lane.b32.xlu0 %v1459, 127
        %v1463 = vpop.permute.xlu0 %1462
        %v1466 = vadd.f32 %v1403, %v1461
        %v1467 = vadd.f32 %v1404, %v1463
        %s1468 = sld [smem:[#allocation3 + $0x61]]
        %v1469 = vstv %s1468
        %v1470 = vmul.f32 %v1469, %v1219
        %v1471 = vmul.f32 %v1469, %v1220
        %v1472 = vmul.f32 %v1469, %v1221
        %v1476 = vrot.slane %v1470, 2
        %v1477 = vrot.slane %v1471, 2
        %v1478 = vsel %vm378, %v1476, %v1477
        %v1479 = vrot.slane %v1472, 2
        %v1480 = vsel %vm378, %v1477, %v1479
        %1481 = vrot.lane.b32.xlu0 %v1478, 127
        %v1482 = vpop.permute.xlu0 %1481
        %1483 = vrot.lane.b32.xlu0 %v1480, 127
        %v1484 = vpop.permute.xlu0 %1483
        %v1487 = vadd.f32 %v1424, %v1482
        %v1488 = vadd.f32 %v1425, %v1484
        %s1489 = sld [smem:[#allocation3 + $0xa9]]
        %v1490 = vstv %s1489
        %v1491 = vmul.f32 %v1490, %v1219
        %v1492 = vmul.f32 %v1490, %v1220
        %v1493 = vmul.f32 %v1490, %v1221
        %v1497 = vrot.slane %v1491, 2
        %v1498 = vrot.slane %v1492, 2
        %v1499 = vsel %vm378, %v1497, %v1498
        %v1500 = vrot.slane %v1493, 2
        %v1501 = vsel %vm378, %v1498, %v1500
        %1502 = vrot.lane.b32.xlu0 %v1499, 127
        %v1503 = vpop.permute.xlu0 %1502
        %1504 = vrot.lane.b32.xlu0 %v1501, 127
        %v1505 = vpop.permute.xlu0 %1504
        %v1508 = vadd.f32 %v1445, %v1503
        %v1509 = vadd.f32 %v1446, %v1505
        %s1510 = sld [smem:[#allocation3 + $0x14]]
        %v1511 = vstv %s1510
        %v1512 = vmul.f32 %v1511, %v1219
        %v1513 = vmul.f32 %v1511, %v1220
        %1516 = vrot.lane.b32.xlu0 %v1512, 126
        %v1517 = vpop.permute.xlu0 %1516
        %1518 = vrot.lane.b32.xlu0 %v1513, 126
        %v1519 = vpop.permute.xlu0 %1518
        %v1522 = vadd.f32 %v1466, %v1517
        %v1523 = vadd.f32 %v1467, %v1519
        %s1524 = sld [smem:[#allocation3 + $0x5c]]
        %v1525 = vstv %s1524
        %v1526 = vmul.f32 %v1525, %v1219
        %v1527 = vmul.f32 %v1525, %v1220
        %1530 = vrot.lane.b32.xlu0 %v1526, 126
        %v1531 = vpop.permute.xlu0 %1530
        %1532 = vrot.lane.b32.xlu0 %v1527, 126
        %v1533 = vpop.permute.xlu0 %1532
        %v1536 = vadd.f32 %v1487, %v1531
        %v1537 = vadd.f32 %v1488, %v1533
        %s1538 = sld [smem:[#allocation3 + $0xa4]]
        %v1539 = vstv %s1538
        %v1540 = vmul.f32 %v1539, %v1219
        %v1541 = vmul.f32 %v1539, %v1220
        %1544 = vrot.lane.b32.xlu0 %v1540, 126
        %v1545 = vpop.permute.xlu0 %1544
        %1546 = vrot.lane.b32.xlu0 %v1541, 126
        %v1547 = vpop.permute.xlu0 %1546
        %v1550 = vadd.f32 %v1508, %v1545
        %v1551 = vadd.f32 %v1509, %v1547
        %s1552 = sld [smem:[#allocation3 + $0x17]]
        %v1553 = vstv %s1552
        %v1554 = vmul.f32 %v1553, %v1219
        %v1555 = vmul.f32 %v1553, %v1220
        %v1556 = vmul.f32 %v1553, %v1221
        %v1560 = vrot.slane %v1554, 1
        %v1561 = vrot.slane %v1555, 1
        %v1562 = vsel %vm326, %v1560, %v1561
        %v1563 = vrot.slane %v1556, 1
        %v1564 = vsel %vm326, %v1561, %v1563
        %1565 = vrot.lane.b32.xlu0 %v1562, 126
        %v1566 = vpop.permute.xlu0 %1565
        %1567 = vrot.lane.b32.xlu0 %v1564, 126
        %v1568 = vpop.permute.xlu0 %1567
        %v1571 = vadd.f32 %v1522, %v1566
        %v1572 = vadd.f32 %v1523, %v1568
        %s1573 = sld [smem:[#allocation3 + $0x5f]]
        %v1574 = vstv %s1573
        %v1575 = vmul.f32 %v1574, %v1219
        %v1576 = vmul.f32 %v1574, %v1220
        %v1577 = vmul.f32 %v1574, %v1221
        %v1581 = vrot.slane %v1575, 1
        %v1582 = vrot.slane %v1576, 1
        %v1583 = vsel %vm326, %v1581, %v1582
        %v1584 = vrot.slane %v1577, 1
        %v1585 = vsel %vm326, %v1582, %v1584
        %1586 = vrot.lane.b32.xlu0 %v1583, 126
        %v1587 = vpop.permute.xlu0 %1586
        %1588 = vrot.lane.b32.xlu0 %v1585, 126
        %v1589 = vpop.permute.xlu0 %1588
        %v1592 = vadd.f32 %v1536, %v1587
        %v1593 = vadd.f32 %v1537, %v1589
        %s1594 = sld [smem:[#allocation3 + $0xa7]]
        %v1595 = vstv %s1594
        %v1596 = vmul.f32 %v1595, %v1219
        %v1597 = vmul.f32 %v1595, %v1220
        %v1598 = vmul.f32 %v1595, %v1221
        %v1602 = vrot.slane %v1596, 1
        %v1603 = vrot.slane %v1597, 1
        %v1604 = vsel %vm326, %v1602, %v1603
        %v1605 = vrot.slane %v1598, 1
        %v1606 = vsel %vm326, %v1603, %v1605
        %1607 = vrot.lane.b32.xlu0 %v1604, 126
        %v1608 = vpop.permute.xlu0 %1607
        %1609 = vrot.lane.b32.xlu0 %v1606, 126
        %v1610 = vpop.permute.xlu0 %1609
        %v1613 = vadd.f32 %v1550, %v1608
        %v1614 = vadd.f32 %v1551, %v1610
        %s1615 = sld [smem:[#allocation3 + $0x1a]]
        %v1616 = vstv %s1615
        %v1617 = vmul.f32 %v1616, %v1219
        %v1618 = vmul.f32 %v1616, %v1220
        %v1619 = vmul.f32 %v1616, %v1221
        %v1623 = vrot.slane %v1617, 2
        %v1624 = vrot.slane %v1618, 2
        %v1625 = vsel %vm378, %v1623, %v1624
        %v1626 = vrot.slane %v1619, 2
        %v1627 = vsel %vm378, %v1624, %v1626
        %1628 = vrot.lane.b32.xlu0 %v1625, 126
        %v1629 = vpop.permute.xlu0 %1628
        %1630 = vrot.lane.b32.xlu0 %v1627, 126
        %v1631 = vpop.permute.xlu0 %1630
        %v1634 = vadd.f32 %v1571, %v1629
        %v1635 = vadd.f32 %v1572, %v1631
        %s1636 = sld [smem:[#allocation3 + $0x62]]
        %v1637 = vstv %s1636
        %v1638 = vmul.f32 %v1637, %v1219
        %v1639 = vmul.f32 %v1637, %v1220
        %v1640 = vmul.f32 %v1637, %v1221
        %v1644 = vrot.slane %v1638, 2
        %v1645 = vrot.slane %v1639, 2
        %v1646 = vsel %vm378, %v1644, %v1645
        %v1647 = vrot.slane %v1640, 2
        %v1648 = vsel %vm378, %v1645, %v1647
        %1649 = vrot.lane.b32.xlu0 %v1646, 126
        %v1650 = vpop.permute.xlu0 %1649
        %1651 = vrot.lane.b32.xlu0 %v1648, 126
        %v1652 = vpop.permute.xlu0 %1651
        %v1655 = vadd.f32 %v1592, %v1650
        %v1656 = vadd.f32 %v1593, %v1652
        %s1657 = sld [smem:[#allocation3 + $0xaa]]
        %v1658 = vstv %s1657
        %v1659 = vmul.f32 %v1658, %v1219
        %v1660 = vmul.f32 %v1658, %v1220
        %v1661 = vmul.f32 %v1658, %v1221
        %v1665 = vrot.slane %v1659, 2
        %v1666 = vrot.slane %v1660, 2
        %v1667 = vsel %vm378, %v1665, %v1666
        %v1668 = vrot.slane %v1661, 2
        %v1669 = vsel %vm378, %v1666, %v1668
        %1670 = vrot.lane.b32.xlu0 %v1667, 126
        %v1671 = vpop.permute.xlu0 %1670
        %1672 = vrot.lane.b32.xlu0 %v1669, 126
        %v1673 = vpop.permute.xlu0 %1672
        %v1676 = vadd.f32 %v1613, %v1671
        %v1677 = vadd.f32 %v1614, %v1673
        %s1678 = scalar_lea.vmem [#allocation2], 72
        %v1679 = vld [vmem:[%s1678] sm:$0xff]
        %v1680 = vld [vmem:[%s1678 + $0x8] sm:$0xff]
        %v1681 = vld [vmem:[%s1678 + $0x10] sm:$0x3]
        %s1682 = sld [smem:[#allocation3 + $0x1b]]
        %v1683 = vstv %s1682
        %v1684 = vmul.f32 %v1683, %v1679
        %v1685 = vmul.f32 %v1683, %v1680
        %v1686 = vadd.f32 %v1634, %v1684
        %v1687 = vadd.f32 %v1635, %v1685
        %s1688 = sld [smem:[#allocation3 + $0x63]]
        %v1689 = vstv %s1688
        %v1690 = vmul.f32 %v1689, %v1679
        %v1691 = vmul.f32 %v1689, %v1680
        %v1692 = vadd.f32 %v1655, %v1690
        %v1693 = vadd.f32 %v1656, %v1691
        %s1694 = sld [smem:[#allocation3 + $0xab]]
        %v1695 = vstv %s1694
        %v1696 = vmul.f32 %v1695, %v1679
        %v1697 = vmul.f32 %v1695, %v1680
        %v1698 = vadd.f32 %v1676, %v1696
        %v1699 = vadd.f32 %v1677, %v1697
        %s1700 = sld [smem:[#allocation3 + $0x1e]]
        %v1701 = vstv %s1700
        %v1702 = vmul.f32 %v1701, %v1679
        %v1703 = vmul.f32 %v1701, %v1680
        %v1704 = vmul.f32 %v1701, %v1681
        %v1708 = vrot.slane %v1702, 1
        %v1709 = vrot.slane %v1703, 1
        %v1710 = vsel %vm326, %v1708, %v1709
        %v1711 = vrot.slane %v1704, 1
        %v1712 = vsel %vm326, %v1709, %v1711
        %v1715 = vadd.f32 %v1686, %v1710
        %v1716 = vadd.f32 %v1687, %v1712
        %s1717 = sld [smem:[#allocation3 + $0x66]]
        %v1718 = vstv %s1717
        %v1719 = vmul.f32 %v1718, %v1679
        %v1720 = vmul.f32 %v1718, %v1680
        %v1721 = vmul.f32 %v1718, %v1681
        %v1725 = vrot.slane %v1719, 1
        %v1726 = vrot.slane %v1720, 1
        %v1727 = vsel %vm326, %v1725, %v1726
        %v1728 = vrot.slane %v1721, 1
        %v1729 = vsel %vm326, %v1726, %v1728
        %v1732 = vadd.f32 %v1692, %v1727
        %v1733 = vadd.f32 %v1693, %v1729
        %s1734 = sld [smem:[#allocation3 + $0xae]]
        %v1735 = vstv %s1734
        %v1736 = vmul.f32 %v1735, %v1679
        %v1737 = vmul.f32 %v1735, %v1680
        %v1738 = vmul.f32 %v1735, %v1681
        %v1742 = vrot.slane %v1736, 1
        %v1743 = vrot.slane %v1737, 1
        %v1744 = vsel %vm326, %v1742, %v1743
        %v1745 = vrot.slane %v1738, 1
        %v1746 = vsel %vm326, %v1743, %v1745
        %v1749 = vadd.f32 %v1698, %v1744
        %v1750 = vadd.f32 %v1699, %v1746
        %s1751 = sld [smem:[#allocation3 + $0x21]]
        %v1752 = vstv %s1751
        %v1753 = vmul.f32 %v1752, %v1679
        %v1754 = vmul.f32 %v1752, %v1680
        %v1755 = vmul.f32 %v1752, %v1681
        %v1759 = vrot.slane %v1753, 2
        %v1760 = vrot.slane %v1754, 2
        %v1761 = vsel %vm378, %v1759, %v1760
        %v1762 = vrot.slane %v1755, 2
        %v1763 = vsel %vm378, %v1760, %v1762
        %v1766 = vadd.f32 %v1715, %v1761
        %v1767 = vadd.f32 %v1716, %v1763
        %s1768 = sld [smem:[#allocation3 + $0x69]]
        %v1769 = vstv %s1768
        %v1770 = vmul.f32 %v1769, %v1679
        %v1771 = vmul.f32 %v1769, %v1680
        %v1772 = vmul.f32 %v1769, %v1681
        %v1776 = vrot.slane %v1770, 2
        %v1777 = vrot.slane %v1771, 2
        %v1778 = vsel %vm378, %v1776, %v1777
        %v1779 = vrot.slane %v1772, 2
        %v1780 = vsel %vm378, %v1777, %v1779
        %v1783 = vadd.f32 %v1732, %v1778
        %v1784 = vadd.f32 %v1733, %v1780
        %s1785 = sld [smem:[#allocation3 + $0xb1]]
        %v1786 = vstv %s1785
        %v1787 = vmul.f32 %v1786, %v1679
        %v1788 = vmul.f32 %v1786, %v1680
        %v1789 = vmul.f32 %v1786, %v1681
        %v1793 = vrot.slane %v1787, 2
        %v1794 = vrot.slane %v1788, 2
        %v1795 = vsel %vm378, %v1793, %v1794
        %v1796 = vrot.slane %v1789, 2
        %v1797 = vsel %vm378, %v1794, %v1796
        %v1800 = vadd.f32 %v1749, %v1795
        %v1801 = vadd.f32 %v1750, %v1797
        %s1802 = sld [smem:[#allocation3 + $0x1c]]
        %v1803 = vstv %s1802
        %v1804 = vmul.f32 %v1803, %v1679
        %v1805 = vmul.f32 %v1803, %v1680
        %1808 = vrot.lane.b32.xlu0 %v1804, 127
        %v1809 = vpop.permute.xlu0 %1808
        %1810 = vrot.lane.b32.xlu0 %v1805, 127
        %v1811 = vpop.permute.xlu0 %1810
        %v1814 = vadd.f32 %v1766, %v1809
        %v1815 = vadd.f32 %v1767, %v1811
        %s1816 = sld [smem:[#allocation3 + $0x64]]
        %v1817 = vstv %s1816
        %v1818 = vmul.f32 %v1817, %v1679
        %v1819 = vmul.f32 %v1817, %v1680
        %1822 = vrot.lane.b32.xlu0 %v1818, 127
        %v1823 = vpop.permute.xlu0 %1822
        %1824 = vrot.lane.b32.xlu0 %v1819, 127
        %v1825 = vpop.permute.xlu0 %1824
        %v1828 = vadd.f32 %v1783, %v1823
        %v1829 = vadd.f32 %v1784, %v1825
        %s1830 = sld [smem:[#allocation3 + $0xac]]
        %v1831 = vstv %s1830
        %v1832 = vmul.f32 %v1831, %v1679
        %v1833 = vmul.f32 %v1831, %v1680
        %1836 = vrot.lane.b32.xlu0 %v1832, 127
        %v1837 = vpop.permute.xlu0 %1836
        %1838 = vrot.lane.b32.xlu0 %v1833, 127
        %v1839 = vpop.permute.xlu0 %1838
        %v1842 = vadd.f32 %v1800, %v1837
        %v1843 = vadd.f32 %v1801, %v1839
        %s1844 = sld [smem:[#allocation3 + $0x1f]]
        %v1845 = vstv %s1844
        %v1846 = vmul.f32 %v1845, %v1679
        %v1847 = vmul.f32 %v1845, %v1680
        %v1848 = vmul.f32 %v1845, %v1681
        %v1852 = vrot.slane %v1846, 1
        %v1853 = vrot.slane %v1847, 1
        %v1854 = vsel %vm326, %v1852, %v1853
        %v1855 = vrot.slane %v1848, 1
        %v1856 = vsel %vm326, %v1853, %v1855
        %1857 = vrot.lane.b32.xlu0 %v1854, 127
        %v1858 = vpop.permute.xlu0 %1857
        %1859 = vrot.lane.b32.xlu0 %v1856, 127
        %v1860 = vpop.permute.xlu0 %1859
        %v1863 = vadd.f32 %v1814, %v1858
        %v1864 = vadd.f32 %v1815, %v1860
        %s1865 = sld [smem:[#allocation3 + $0x67]]
        %v1866 = vstv %s1865
        %v1867 = vmul.f32 %v1866, %v1679
        %v1868 = vmul.f32 %v1866, %v1680
        %v1869 = vmul.f32 %v1866, %v1681
        %v1873 = vrot.slane %v1867, 1
        %v1874 = vrot.slane %v1868, 1
        %v1875 = vsel %vm326, %v1873, %v1874
        %v1876 = vrot.slane %v1869, 1
        %v1877 = vsel %vm326, %v1874, %v1876
        %1878 = vrot.lane.b32.xlu0 %v1875, 127
        %v1879 = vpop.permute.xlu0 %1878
        %1880 = vrot.lane.b32.xlu0 %v1877, 127
        %v1881 = vpop.permute.xlu0 %1880
        %v1884 = vadd.f32 %v1828, %v1879
        %v1885 = vadd.f32 %v1829, %v1881
        %s1886 = sld [smem:[#allocation3 + $0xaf]]
        %v1887 = vstv %s1886
        %v1888 = vmul.f32 %v1887, %v1679
        %v1889 = vmul.f32 %v1887, %v1680
        %v1890 = vmul.f32 %v1887, %v1681
        %v1894 = vrot.slane %v1888, 1
        %v1895 = vrot.slane %v1889, 1
        %v1896 = vsel %vm326, %v1894, %v1895
        %v1897 = vrot.slane %v1890, 1
        %v1898 = vsel %vm326, %v1895, %v1897
        %1899 = vrot.lane.b32.xlu0 %v1896, 127
        %v1900 = vpop.permute.xlu0 %1899
        %1901 = vrot.lane.b32.xlu0 %v1898, 127
        %v1902 = vpop.permute.xlu0 %1901
        %v1905 = vadd.f32 %v1842, %v1900
        %v1906 = vadd.f32 %v1843, %v1902
        %s1907 = sld [smem:[#allocation3 + $0x22]]
        %v1908 = vstv %s1907
        %v1909 = vmul.f32 %v1908, %v1679
        %v1910 = vmul.f32 %v1908, %v1680
        %v1911 = vmul.f32 %v1908, %v1681
        %v1915 = vrot.slane %v1909, 2
        %v1916 = vrot.slane %v1910, 2
        %v1917 = vsel %vm378, %v1915, %v1916
        %v1918 = vrot.slane %v1911, 2
        %v1919 = vsel %vm378, %v1916, %v1918
        %1920 = vrot.lane.b32.xlu0 %v1917, 127
        %v1921 = vpop.permute.xlu0 %1920
        %1922 = vrot.lane.b32.xlu0 %v1919, 127
        %v1923 = vpop.permute.xlu0 %1922
        %v1926 = vadd.f32 %v1863, %v1921
        %v1927 = vadd.f32 %v1864, %v1923
        %s1928 = sld [smem:[#allocation3 + $0x6a]]
        %v1929 = vstv %s1928
        %v1930 = vmul.f32 %v1929, %v1679
        %v1931 = vmul.f32 %v1929, %v1680
        %v1932 = vmul.f32 %v1929, %v1681
        %v1936 = vrot.slane %v1930, 2
        %v1937 = vrot.slane %v1931, 2
        %v1938 = vsel %vm378, %v1936, %v1937
        %v1939 = vrot.slane %v1932, 2
        %v1940 = vsel %vm378, %v1937, %v1939
        %1941 = vrot.lane.b32.xlu0 %v1938, 127
        %v1942 = vpop.permute.xlu0 %1941
        %1943 = vrot.lane.b32.xlu0 %v1940, 127
        %v1944 = vpop.permute.xlu0 %1943
        %v1947 = vadd.f32 %v1884, %v1942
        %v1948 = vadd.f32 %v1885, %v1944
        %s1949 = sld [smem:[#allocation3 + $0xb2]]
        %v1950 = vstv %s1949
        %v1951 = vmul.f32 %v1950, %v1679
        %v1952 = vmul.f32 %v1950, %v1680
        %v1953 = vmul.f32 %v1950, %v1681
        %v1957 = vrot.slane %v1951, 2
        %v1958 = vrot.slane %v1952, 2
        %v1959 = vsel %vm378, %v1957, %v1958
        %v1960 = vrot.slane %v1953, 2
        %v1961 = vsel %vm378, %v1958, %v1960
        %1962 = vrot.lane.b32.xlu0 %v1959, 127
        %v1963 = vpop.permute.xlu0 %1962
        %1964 = vrot.lane.b32.xlu0 %v1961, 127
        %v1965 = vpop.permute.xlu0 %1964
        %v1968 = vadd.f32 %v1905, %v1963
        %v1969 = vadd.f32 %v1906, %v1965
        %s1970 = sld [smem:[#allocation3 + $0x1d]]
        %v1971 = vstv %s1970
        %v1972 = vmul.f32 %v1971, %v1679
        %v1973 = vmul.f32 %v1971, %v1680
        %1976 = vrot.lane.b32.xlu0 %v1972, 126
        %v1977 = vpop.permute.xlu0 %1976
        %1978 = vrot.lane.b32.xlu0 %v1973, 126
        %v1979 = vpop.permute.xlu0 %1978
        %v1982 = vadd.f32 %v1926, %v1977
        %v1983 = vadd.f32 %v1927, %v1979
        %s1984 = sld [smem:[#allocation3 + $0x65]]
        %v1985 = vstv %s1984
        %v1986 = vmul.f32 %v1985, %v1679
        %v1987 = vmul.f32 %v1985, %v1680
        %1990 = vrot.lane.b32.xlu0 %v1986, 126
        %v1991 = vpop.permute.xlu0 %1990
        %1992 = vrot.lane.b32.xlu0 %v1987, 126
        %v1993 = vpop.permute.xlu0 %1992
        %v1996 = vadd.f32 %v1947, %v1991
        %v1997 = vadd.f32 %v1948, %v1993
        %s1998 = sld [smem:[#allocation3 + $0xad]]
        %v1999 = vstv %s1998
        %v2000 = vmul.f32 %v1999, %v1679
        %v2001 = vmul.f32 %v1999, %v1680
        %2004 = vrot.lane.b32.xlu0 %v2000, 126
        %v2005 = vpop.permute.xlu0 %2004
        %2006 = vrot.lane.b32.xlu0 %v2001, 126
        %v2007 = vpop.permute.xlu0 %2006
        %v2010 = vadd.f32 %v1968, %v2005
        %v2011 = vadd.f32 %v1969, %v2007
        %s2012 = sld [smem:[#allocation3 + $0x20]]
        %v2013 = vstv %s2012
        %v2014 = vmul.f32 %v2013, %v1679
        %v2015 = vmul.f32 %v2013, %v1680
        %v2016 = vmul.f32 %v2013, %v1681
        %v2020 = vrot.slane %v2014, 1
        %v2021 = vrot.slane %v2015, 1
        %v2022 = vsel %vm326, %v2020, %v2021
        %v2023 = vrot.slane %v2016, 1
        %v2024 = vsel %vm326, %v2021, %v2023
        %2025 = vrot.lane.b32.xlu0 %v2022, 126
        %v2026 = vpop.permute.xlu0 %2025
        %2027 = vrot.lane.b32.xlu0 %v2024, 126
        %v2028 = vpop.permute.xlu0 %2027
        %v2031 = vadd.f32 %v1982, %v2026
        %v2032 = vadd.f32 %v1983, %v2028
        %s2033 = sld [smem:[#allocation3 + $0x68]]
        %v2034 = vstv %s2033
        %v2035 = vmul.f32 %v2034, %v1679
        %v2036 = vmul.f32 %v2034, %v1680
        %v2037 = vmul.f32 %v2034, %v1681
        %v2041 = vrot.slane %v2035, 1
        %v2042 = vrot.slane %v2036, 1
        %v2043 = vsel %vm326, %v2041, %v2042
        %v2044 = vrot.slane %v2037, 1
        %v2045 = vsel %vm326, %v2042, %v2044
        %2046 = vrot.lane.b32.xlu0 %v2043, 126
        %v2047 = vpop.permute.xlu0 %2046
        %2048 = vrot.lane.b32.xlu0 %v2045, 126
        %v2049 = vpop.permute.xlu0 %2048
        %v2052 = vadd.f32 %v1996, %v2047
        %v2053 = vadd.f32 %v1997, %v2049
        %s2054 = sld [smem:[#allocation3 + $0xb0]]
        %v2055 = vstv %s2054
        %v2056 = vmul.f32 %v2055, %v1679
        %v2057 = vmul.f32 %v2055, %v1680
        %v2058 = vmul.f32 %v2055, %v1681
        %v2062 = vrot.slane %v2056, 1
        %v2063 = vrot.slane %v2057, 1
        %v2064 = vsel %vm326, %v2062, %v2063
        %v2065 = vrot.slane %v2058, 1
        %v2066 = vsel %vm326, %v2063, %v2065
        %2067 = vrot.lane.b32.xlu0 %v2064, 126
        %v2068 = vpop.permute.xlu0 %2067
        %2069 = vrot.lane.b32.xlu0 %v2066, 126
        %v2070 = vpop.permute.xlu0 %2069
        %v2073 = vadd.f32 %v2010, %v2068
        %v2074 = vadd.f32 %v2011, %v2070
        %s2075 = sld [smem:[#allocation3 + $0x23]]
        %v2076 = vstv %s2075
        %v2077 = vmul.f32 %v2076, %v1679
        %v2078 = vmul.f32 %v2076, %v1680
        %v2079 = vmul.f32 %v2076, %v1681
        %v2083 = vrot.slane %v2077, 2
        %v2084 = vrot.slane %v2078, 2
        %v2085 = vsel %vm378, %v2083, %v2084
        %v2086 = vrot.slane %v2079, 2
        %v2087 = vsel %vm378, %v2084, %v2086
        %2088 = vrot.lane.b32.xlu0 %v2085, 126
        %v2089 = vpop.permute.xlu0 %2088
        %2090 = vrot.lane.b32.xlu0 %v2087, 126
        %v2091 = vpop.permute.xlu0 %2090
        %v2094 = vadd.f32 %v2031, %v2089
        %v2095 = vadd.f32 %v2032, %v2091
        %s2096 = sld [smem:[#allocation3 + $0x6b]]
        %v2097 = vstv %s2096
        %v2098 = vmul.f32 %v2097, %v1679
        %v2099 = vmul.f32 %v2097, %v1680
        %v2100 = vmul.f32 %v2097, %v1681
        %v2104 = vrot.slane %v2098, 2
        %v2105 = vrot.slane %v2099, 2
        %v2106 = vsel %vm378, %v2104, %v2105
        %v2107 = vrot.slane %v2100, 2
        %v2108 = vsel %vm378, %v2105, %v2107
        %2109 = vrot.lane.b32.xlu0 %v2106, 126
        %v2110 = vpop.permute.xlu0 %2109
        %2111 = vrot.lane.b32.xlu0 %v2108, 126
        %v2112 = vpop.permute.xlu0 %2111
        %v2115 = vadd.f32 %v2052, %v2110
        %v2116 = vadd.f32 %v2053, %v2112
        %s2117 = sld [smem:[#allocation3 + $0xb3]]
        %v2118 = vstv %s2117
        %v2119 = vmul.f32 %v2118, %v1679
        %v2120 = vmul.f32 %v2118, %v1680
        %v2121 = vmul.f32 %v2118, %v1681
        %v2125 = vrot.slane %v2119, 2
        %v2126 = vrot.slane %v2120, 2
        %v2127 = vsel %vm378, %v2125, %v2126
        %v2128 = vrot.slane %v2121, 2
        %v2129 = vsel %vm378, %v2126, %v2128
        %2130 = vrot.lane.b32.xlu0 %v2127, 126
        %v2131 = vpop.permute.xlu0 %2130
        %2132 = vrot.lane.b32.xlu0 %v2129, 126
        %v2133 = vpop.permute.xlu0 %2132
        %v2136 = vadd.f32 %v2073, %v2131
        %v2137 = vadd.f32 %v2074, %v2133
        %s2138 = scalar_lea.vmem [#allocation2], 96
        %v2139 = vld [vmem:[%s2138] sm:$0xff]
        %v2140 = vld [vmem:[%s2138 + $0x8] sm:$0xff]
        %v2141 = vld [vmem:[%s2138 + $0x10] sm:$0x3]
        %s2142 = sld [smem:[#allocation3 + $0x24]]
        %v2143 = vstv %s2142
        %v2144 = vmul.f32 %v2143, %v2139
        %v2145 = vmul.f32 %v2143, %v2140
        %v2146 = vadd.f32 %v2094, %v2144
        %v2147 = vadd.f32 %v2095, %v2145
        %s2148 = sld [smem:[#allocation3 + $0x6c]]
        %v2149 = vstv %s2148
        %v2150 = vmul.f32 %v2149, %v2139
        %v2151 = vmul.f32 %v2149, %v2140
        %v2152 = vadd.f32 %v2115, %v2150
        %v2153 = vadd.f32 %v2116, %v2151
        %s2154 = sld [smem:[#allocation3 + $0xb4]]
        %v2155 = vstv %s2154
        %v2156 = vmul.f32 %v2155, %v2139
        %v2157 = vmul.f32 %v2155, %v2140
        %v2158 = vadd.f32 %v2136, %v2156
        %v2159 = vadd.f32 %v2137, %v2157
        %s2160 = sld [smem:[#allocation3 + $0x27]]
        %v2161 = vstv %s2160
        %v2162 = vmul.f32 %v2161, %v2139
        %v2163 = vmul.f32 %v2161, %v2140
        %v2164 = vmul.f32 %v2161, %v2141
        %v2168 = vrot.slane %v2162, 1
        %v2169 = vrot.slane %v2163, 1
        %v2170 = vsel %vm326, %v2168, %v2169
        %v2171 = vrot.slane %v2164, 1
        %v2172 = vsel %vm326, %v2169, %v2171
        %v2175 = vadd.f32 %v2146, %v2170
        %v2176 = vadd.f32 %v2147, %v2172
        %s2177 = sld [smem:[#allocation3 + $0x6f]]
        %v2178 = vstv %s2177
        %v2179 = vmul.f32 %v2178, %v2139
        %v2180 = vmul.f32 %v2178, %v2140
        %v2181 = vmul.f32 %v2178, %v2141
        %v2185 = vrot.slane %v2179, 1
        %v2186 = vrot.slane %v2180, 1
        %v2187 = vsel %vm326, %v2185, %v2186
        %v2188 = vrot.slane %v2181, 1
        %v2189 = vsel %vm326, %v2186, %v2188
        %v2192 = vadd.f32 %v2152, %v2187
        %v2193 = vadd.f32 %v2153, %v2189
        %s2194 = sld [smem:[#allocation3 + $0xb7]]
        %v2195 = vstv %s2194
        %v2196 = vmul.f32 %v2195, %v2139
        %v2197 = vmul.f32 %v2195, %v2140
        %v2198 = vmul.f32 %v2195, %v2141
        %v2202 = vrot.slane %v2196, 1
        %v2203 = vrot.slane %v2197, 1
        %v2204 = vsel %vm326, %v2202, %v2203
        %v2205 = vrot.slane %v2198, 1
        %v2206 = vsel %vm326, %v2203, %v2205
        %v2209 = vadd.f32 %v2158, %v2204
        %v2210 = vadd.f32 %v2159, %v2206
        %s2211 = sld [smem:[#allocation3 + $0x2a]]
        %v2212 = vstv %s2211
        %v2213 = vmul.f32 %v2212, %v2139
        %v2214 = vmul.f32 %v2212, %v2140
        %v2215 = vmul.f32 %v2212, %v2141
        %v2219 = vrot.slane %v2213, 2
        %v2220 = vrot.slane %v2214, 2
        %v2221 = vsel %vm378, %v2219, %v2220
        %v2222 = vrot.slane %v2215, 2
        %v2223 = vsel %vm378, %v2220, %v2222
        %v2226 = vadd.f32 %v2175, %v2221
        %v2227 = vadd.f32 %v2176, %v2223
        %s2228 = sld [smem:[#allocation3 + $0x72]]
        %v2229 = vstv %s2228
        %v2230 = vmul.f32 %v2229, %v2139
        %v2231 = vmul.f32 %v2229, %v2140
        %v2232 = vmul.f32 %v2229, %v2141
        %v2236 = vrot.slane %v2230, 2
        %v2237 = vrot.slane %v2231, 2
        %v2238 = vsel %vm378, %v2236, %v2237
        %v2239 = vrot.slane %v2232, 2
        %v2240 = vsel %vm378, %v2237, %v2239
        %v2243 = vadd.f32 %v2192, %v2238
        %v2244 = vadd.f32 %v2193, %v2240
        %s2245 = sld [smem:[#allocation3 + $0xba]]
        %v2246 = vstv %s2245
        %v2247 = vmul.f32 %v2246, %v2139
        %v2248 = vmul.f32 %v2246, %v2140
        %v2249 = vmul.f32 %v2246, %v2141
        %v2253 = vrot.slane %v2247, 2
        %v2254 = vrot.slane %v2248, 2
        %v2255 = vsel %vm378, %v2253, %v2254
        %v2256 = vrot.slane %v2249, 2
        %v2257 = vsel %vm378, %v2254, %v2256
        %v2260 = vadd.f32 %v2209, %v2255
        %v2261 = vadd.f32 %v2210, %v2257
        %s2262 = sld [smem:[#allocation3 + $0x25]]
        %v2263 = vstv %s2262
        %v2264 = vmul.f32 %v2263, %v2139
        %v2265 = vmul.f32 %v2263, %v2140
        %2268 = vrot.lane.b32.xlu0 %v2264, 127
        %v2269 = vpop.permute.xlu0 %2268
        %2270 = vrot.lane.b32.xlu0 %v2265, 127
        %v2271 = vpop.permute.xlu0 %2270
        %v2274 = vadd.f32 %v2226, %v2269
        %v2275 = vadd.f32 %v2227, %v2271
        %s2276 = sld [smem:[#allocation3 + $0x6d]]
        %v2277 = vstv %s2276
        %v2278 = vmul.f32 %v2277, %v2139
        %v2279 = vmul.f32 %v2277, %v2140
        %2282 = vrot.lane.b32.xlu0 %v2278, 127
        %v2283 = vpop.permute.xlu0 %2282
        %2284 = vrot.lane.b32.xlu0 %v2279, 127
        %v2285 = vpop.permute.xlu0 %2284
        %v2288 = vadd.f32 %v2243, %v2283
        %v2289 = vadd.f32 %v2244, %v2285
        %s2290 = sld [smem:[#allocation3 + $0xb5]]
        %v2291 = vstv %s2290
        %v2292 = vmul.f32 %v2291, %v2139
        %v2293 = vmul.f32 %v2291, %v2140
        %2296 = vrot.lane.b32.xlu0 %v2292, 127
        %v2297 = vpop.permute.xlu0 %2296
        %2298 = vrot.lane.b32.xlu0 %v2293, 127
        %v2299 = vpop.permute.xlu0 %2298
        %v2302 = vadd.f32 %v2260, %v2297
        %v2303 = vadd.f32 %v2261, %v2299
        %s2304 = sld [smem:[#allocation3 + $0x28]]
        %v2305 = vstv %s2304
        %v2306 = vmul.f32 %v2305, %v2139
        %v2307 = vmul.f32 %v2305, %v2140
        %v2308 = vmul.f32 %v2305, %v2141
        %v2312 = vrot.slane %v2306, 1
        %v2313 = vrot.slane %v2307, 1
        %v2314 = vsel %vm326, %v2312, %v2313
        %v2315 = vrot.slane %v2308, 1
        %v2316 = vsel %vm326, %v2313, %v2315
        %2317 = vrot.lane.b32.xlu0 %v2314, 127
        %v2318 = vpop.permute.xlu0 %2317
        %2319 = vrot.lane.b32.xlu0 %v2316, 127
        %v2320 = vpop.permute.xlu0 %2319
        %v2323 = vadd.f32 %v2274, %v2318
        %v2324 = vadd.f32 %v2275, %v2320
        %s2325 = sld [smem:[#allocation3 + $0x70]]
        %v2326 = vstv %s2325
        %v2327 = vmul.f32 %v2326, %v2139
        %v2328 = vmul.f32 %v2326, %v2140
        %v2329 = vmul.f32 %v2326, %v2141
        %v2333 = vrot.slane %v2327, 1
        %v2334 = vrot.slane %v2328, 1
        %v2335 = vsel %vm326, %v2333, %v2334
        %v2336 = vrot.slane %v2329, 1
        %v2337 = vsel %vm326, %v2334, %v2336
        %2338 = vrot.lane.b32.xlu0 %v2335, 127
        %v2339 = vpop.permute.xlu0 %2338
        %2340 = vrot.lane.b32.xlu0 %v2337, 127
        %v2341 = vpop.permute.xlu0 %2340
        %v2344 = vadd.f32 %v2288, %v2339
        %v2345 = vadd.f32 %v2289, %v2341
        %s2346 = sld [smem:[#allocation3 + $0xb8]]
        %v2347 = vstv %s2346
        %v2348 = vmul.f32 %v2347, %v2139
        %v2349 = vmul.f32 %v2347, %v2140
        %v2350 = vmul.f32 %v2347, %v2141
        %v2354 = vrot.slane %v2348, 1
        %v2355 = vrot.slane %v2349, 1
        %v2356 = vsel %vm326, %v2354, %v2355
        %v2357 = vrot.slane %v2350, 1
        %v2358 = vsel %vm326, %v2355, %v2357
        %2359 = vrot.lane.b32.xlu0 %v2356, 127
        %v2360 = vpop.permute.xlu0 %2359
        %2361 = vrot.lane.b32.xlu0 %v2358, 127
        %v2362 = vpop.permute.xlu0 %2361
        %v2365 = vadd.f32 %v2302, %v2360
        %v2366 = vadd.f32 %v2303, %v2362
        %s2367 = sld [smem:[#allocation3 + $0x2b]]
        %v2368 = vstv %s2367
        %v2369 = vmul.f32 %v2368, %v2139
        %v2370 = vmul.f32 %v2368, %v2140
        %v2371 = vmul.f32 %v2368, %v2141
        %v2375 = vrot.slane %v2369, 2
        %v2376 = vrot.slane %v2370, 2
        %v2377 = vsel %vm378, %v2375, %v2376
        %v2378 = vrot.slane %v2371, 2
        %v2379 = vsel %vm378, %v2376, %v2378
        %2380 = vrot.lane.b32.xlu0 %v2377, 127
        %v2381 = vpop.permute.xlu0 %2380
        %2382 = vrot.lane.b32.xlu0 %v2379, 127
        %v2383 = vpop.permute.xlu0 %2382
        %v2386 = vadd.f32 %v2323, %v2381
        %v2387 = vadd.f32 %v2324, %v2383
        %s2388 = sld [smem:[#allocation3 + $0x73]]
        %v2389 = vstv %s2388
        %v2390 = vmul.f32 %v2389, %v2139
        %v2391 = vmul.f32 %v2389, %v2140
        %v2392 = vmul.f32 %v2389, %v2141
        %v2396 = vrot.slane %v2390, 2
        %v2397 = vrot.slane %v2391, 2
        %v2398 = vsel %vm378, %v2396, %v2397
        %v2399 = vrot.slane %v2392, 2
        %v2400 = vsel %vm378, %v2397, %v2399
        %2401 = vrot.lane.b32.xlu0 %v2398, 127
        %v2402 = vpop.permute.xlu0 %2401
        %2403 = vrot.lane.b32.xlu0 %v2400, 127
        %v2404 = vpop.permute.xlu0 %2403
        %v2407 = vadd.f32 %v2344, %v2402
        %v2408 = vadd.f32 %v2345, %v2404
        %s2409 = sld [smem:[#allocation3 + $0xbb]]
        %v2410 = vstv %s2409
        %v2411 = vmul.f32 %v2410, %v2139
        %v2412 = vmul.f32 %v2410, %v2140
        %v2413 = vmul.f32 %v2410, %v2141
        %v2417 = vrot.slane %v2411, 2
        %v2418 = vrot.slane %v2412, 2
        %v2419 = vsel %vm378, %v2417, %v2418
        %v2420 = vrot.slane %v2413, 2
        %v2421 = vsel %vm378, %v2418, %v2420
        %2422 = vrot.lane.b32.xlu0 %v2419, 127
        %v2423 = vpop.permute.xlu0 %2422
        %2424 = vrot.lane.b32.xlu0 %v2421, 127
        %v2425 = vpop.permute.xlu0 %2424
        %v2428 = vadd.f32 %v2365, %v2423
        %v2429 = vadd.f32 %v2366, %v2425
        %s2430 = sld [smem:[#allocation3 + $0x26]]
        %v2431 = vstv %s2430
        %v2432 = vmul.f32 %v2431, %v2139
        %v2433 = vmul.f32 %v2431, %v2140
        %2436 = vrot.lane.b32.xlu0 %v2432, 126
        %v2437 = vpop.permute.xlu0 %2436
        %2438 = vrot.lane.b32.xlu0 %v2433, 126
        %v2439 = vpop.permute.xlu0 %2438
        %v2442 = vadd.f32 %v2386, %v2437
        %v2443 = vadd.f32 %v2387, %v2439
        %s2444 = sld [smem:[#allocation3 + $0x6e]]
        %v2445 = vstv %s2444
        %v2446 = vmul.f32 %v2445, %v2139
        %v2447 = vmul.f32 %v2445, %v2140
        %2450 = vrot.lane.b32.xlu0 %v2446, 126
        %v2451 = vpop.permute.xlu0 %2450
        %2452 = vrot.lane.b32.xlu0 %v2447, 126
        %v2453 = vpop.permute.xlu0 %2452
        %v2456 = vadd.f32 %v2407, %v2451
        %v2457 = vadd.f32 %v2408, %v2453
        %s2458 = sld [smem:[#allocation3 + $0xb6]]
        %v2459 = vstv %s2458
        %v2460 = vmul.f32 %v2459, %v2139
        %v2461 = vmul.f32 %v2459, %v2140
        %2464 = vrot.lane.b32.xlu0 %v2460, 126
        %v2465 = vpop.permute.xlu0 %2464
        %2466 = vrot.lane.b32.xlu0 %v2461, 126
        %v2467 = vpop.permute.xlu0 %2466
        %v2470 = vadd.f32 %v2428, %v2465
        %v2471 = vadd.f32 %v2429, %v2467
        %s2472 = sld [smem:[#allocation3 + $0x29]]
        %v2473 = vstv %s2472
        %v2474 = vmul.f32 %v2473, %v2139
        %v2475 = vmul.f32 %v2473, %v2140
        %v2476 = vmul.f32 %v2473, %v2141
        %v2480 = vrot.slane %v2474, 1
        %v2481 = vrot.slane %v2475, 1
        %v2482 = vsel %vm326, %v2480, %v2481
        %v2483 = vrot.slane %v2476, 1
        %v2484 = vsel %vm326, %v2481, %v2483
        %2485 = vrot.lane.b32.xlu0 %v2482, 126
        %v2486 = vpop.permute.xlu0 %2485
        %2487 = vrot.lane.b32.xlu0 %v2484, 126
        %v2488 = vpop.permute.xlu0 %2487
        %v2491 = vadd.f32 %v2442, %v2486
        %v2492 = vadd.f32 %v2443, %v2488
        %s2493 = sld [smem:[#allocation3 + $0x71]]
        %v2494 = vstv %s2493
        %v2495 = vmul.f32 %v2494, %v2139
        %v2496 = vmul.f32 %v2494, %v2140
        %v2497 = vmul.f32 %v2494, %v2141
        %v2501 = vrot.slane %v2495, 1
        %v2502 = vrot.slane %v2496, 1
        %v2503 = vsel %vm326, %v2501, %v2502
        %v2504 = vrot.slane %v2497, 1
        %v2505 = vsel %vm326, %v2502, %v2504
        %2506 = vrot.lane.b32.xlu0 %v2503, 126
        %v2507 = vpop.permute.xlu0 %2506
        %2508 = vrot.lane.b32.xlu0 %v2505, 126
        %v2509 = vpop.permute.xlu0 %2508
        %v2512 = vadd.f32 %v2456, %v2507
        %v2513 = vadd.f32 %v2457, %v2509
        %s2514 = sld [smem:[#allocation3 + $0xb9]]
        %v2515 = vstv %s2514
        %v2516 = vmul.f32 %v2515, %v2139
        %v2517 = vmul.f32 %v2515, %v2140
        %v2518 = vmul.f32 %v2515, %v2141
        %v2522 = vrot.slane %v2516, 1
        %v2523 = vrot.slane %v2517, 1
        %v2524 = vsel %vm326, %v2522, %v2523
        %v2525 = vrot.slane %v2518, 1
        %v2526 = vsel %vm326, %v2523, %v2525
        %2527 = vrot.lane.b32.xlu0 %v2524, 126
        %v2528 = vpop.permute.xlu0 %2527
        %2529 = vrot.lane.b32.xlu0 %v2526, 126
        %v2530 = vpop.permute.xlu0 %2529
        %v2533 = vadd.f32 %v2470, %v2528
        %v2534 = vadd.f32 %v2471, %v2530
        %s2535 = sld [smem:[#allocation3 + $0x2c]]
        %v2536 = vstv %s2535
        %v2537 = vmul.f32 %v2536, %v2139
        %v2538 = vmul.f32 %v2536, %v2140
        %v2539 = vmul.f32 %v2536, %v2141
        %v2543 = vrot.slane %v2537, 2
        %v2544 = vrot.slane %v2538, 2
        %v2545 = vsel %vm378, %v2543, %v2544
        %v2546 = vrot.slane %v2539, 2
        %v2547 = vsel %vm378, %v2544, %v2546
        %2548 = vrot.lane.b32.xlu0 %v2545, 126
        %v2549 = vpop.permute.xlu0 %2548
        %2550 = vrot.lane.b32.xlu0 %v2547, 126
        %v2551 = vpop.permute.xlu0 %2550
        %v2554 = vadd.f32 %v2491, %v2549
        %v2555 = vadd.f32 %v2492, %v2551
        %s2556 = sld [smem:[#allocation3 + $0x74]]
        %v2557 = vstv %s2556
        %v2558 = vmul.f32 %v2557, %v2139
        %v2559 = vmul.f32 %v2557, %v2140
        %v2560 = vmul.f32 %v2557, %v2141
        %v2564 = vrot.slane %v2558, 2
        %v2565 = vrot.slane %v2559, 2
        %v2566 = vsel %vm378, %v2564, %v2565
        %v2567 = vrot.slane %v2560, 2
        %v2568 = vsel %vm378, %v2565, %v2567
        %2569 = vrot.lane.b32.xlu0 %v2566, 126
        %v2570 = vpop.permute.xlu0 %2569
        %2571 = vrot.lane.b32.xlu0 %v2568, 126
        %v2572 = vpop.permute.xlu0 %2571
        %v2575 = vadd.f32 %v2512, %v2570
        %v2576 = vadd.f32 %v2513, %v2572
        %s2577 = sld [smem:[#allocation3 + $0xbc]]
        %v2578 = vstv %s2577
        %v2579 = vmul.f32 %v2578, %v2139
        %v2580 = vmul.f32 %v2578, %v2140
        %v2581 = vmul.f32 %v2578, %v2141
        %v2585 = vrot.slane %v2579, 2
        %v2586 = vrot.slane %v2580, 2
        %v2587 = vsel %vm378, %v2585, %v2586
        %v2588 = vrot.slane %v2581, 2
        %v2589 = vsel %vm378, %v2586, %v2588
        %2590 = vrot.lane.b32.xlu0 %v2587, 126
        %v2591 = vpop.permute.xlu0 %2590
        %2592 = vrot.lane.b32.xlu0 %v2589, 126
        %v2593 = vpop.permute.xlu0 %2592
        %v2596 = vadd.f32 %v2533, %v2591
        %v2597 = vadd.f32 %v2534, %v2593
        %s2598 = scalar_lea.vmem [#allocation2], 120
        %v2599 = vld [vmem:[%s2598] sm:$0xff]
        %v2600 = vld [vmem:[%s2598 + $0x8] sm:$0xff]
        %v2601 = vld [vmem:[%s2598 + $0x10] sm:$0x3]
        %s2602 = sld [smem:[#allocation3 + $0x2d]]
        %v2603 = vstv %s2602
        %v2604 = vmul.f32 %v2603, %v2599
        %v2605 = vmul.f32 %v2603, %v2600
        %v2606 = vadd.f32 %v2554, %v2604
        %v2607 = vadd.f32 %v2555, %v2605
        %s2608 = sld [smem:[#allocation3 + $0x75]]
        %v2609 = vstv %s2608
        %v2610 = vmul.f32 %v2609, %v2599
        %v2611 = vmul.f32 %v2609, %v2600
        %v2612 = vadd.f32 %v2575, %v2610
        %v2613 = vadd.f32 %v2576, %v2611
        %s2614 = sld [smem:[#allocation3 + $0xbd]]
        %v2615 = vstv %s2614
        %v2616 = vmul.f32 %v2615, %v2599
        %v2617 = vmul.f32 %v2615, %v2600
        %v2618 = vadd.f32 %v2596, %v2616
        %v2619 = vadd.f32 %v2597, %v2617
        %s2620 = sld [smem:[#allocation3 + $0x30]]
        %v2621 = vstv %s2620
        %v2622 = vmul.f32 %v2621, %v2599
        %v2623 = vmul.f32 %v2621, %v2600
        %v2624 = vmul.f32 %v2621, %v2601
        %v2628 = vrot.slane %v2622, 1
        %v2629 = vrot.slane %v2623, 1
        %v2630 = vsel %vm326, %v2628, %v2629
        %v2631 = vrot.slane %v2624, 1
        %v2632 = vsel %vm326, %v2629, %v2631
        %v2635 = vadd.f32 %v2606, %v2630
        %v2636 = vadd.f32 %v2607, %v2632
        %s2637 = sld [smem:[#allocation3 + $0x78]]
        %v2638 = vstv %s2637
        %v2639 = vmul.f32 %v2638, %v2599
        %v2640 = vmul.f32 %v2638, %v2600
        %v2641 = vmul.f32 %v2638, %v2601
        %v2645 = vrot.slane %v2639, 1
        %v2646 = vrot.slane %v2640, 1
        %v2647 = vsel %vm326, %v2645, %v2646
        %v2648 = vrot.slane %v2641, 1
        %v2649 = vsel %vm326, %v2646, %v2648
        %v2652 = vadd.f32 %v2612, %v2647
        %v2653 = vadd.f32 %v2613, %v2649
        %s2654 = sld [smem:[#allocation3 + $0xc0]]
        %v2655 = vstv %s2654
        %v2656 = vmul.f32 %v2655, %v2599
        %v2657 = vmul.f32 %v2655, %v2600
        %v2658 = vmul.f32 %v2655, %v2601
        %v2662 = vrot.slane %v2656, 1
        %v2663 = vrot.slane %v2657, 1
        %v2664 = vsel %vm326, %v2662, %v2663
        %v2665 = vrot.slane %v2658, 1
        %v2666 = vsel %vm326, %v2663, %v2665
        %v2669 = vadd.f32 %v2618, %v2664
        %v2670 = vadd.f32 %v2619, %v2666
        %s2671 = sld [smem:[#allocation3 + $0x33]]
        %v2672 = vstv %s2671
        %v2673 = vmul.f32 %v2672, %v2599
        %v2674 = vmul.f32 %v2672, %v2600
        %v2675 = vmul.f32 %v2672, %v2601
        %v2679 = vrot.slane %v2673, 2
        %v2680 = vrot.slane %v2674, 2
        %v2681 = vsel %vm378, %v2679, %v2680
        %v2682 = vrot.slane %v2675, 2
        %v2683 = vsel %vm378, %v2680, %v2682
        %v2686 = vadd.f32 %v2635, %v2681
        %v2687 = vadd.f32 %v2636, %v2683
        %s2688 = sld [smem:[#allocation3 + $0x7b]]
        %v2689 = vstv %s2688
        %v2690 = vmul.f32 %v2689, %v2599
        %v2691 = vmul.f32 %v2689, %v2600
        %v2692 = vmul.f32 %v2689, %v2601
        %v2696 = vrot.slane %v2690, 2
        %v2697 = vrot.slane %v2691, 2
        %v2698 = vsel %vm378, %v2696, %v2697
        %v2699 = vrot.slane %v2692, 2
        %v2700 = vsel %vm378, %v2697, %v2699
        %v2703 = vadd.f32 %v2652, %v2698
        %v2704 = vadd.f32 %v2653, %v2700
        %s2705 = sld [smem:[#allocation3 + $0xc3]]
        %v2706 = vstv %s2705
        %v2707 = vmul.f32 %v2706, %v2599
        %v2708 = vmul.f32 %v2706, %v2600
        %v2709 = vmul.f32 %v2706, %v2601
        %v2713 = vrot.slane %v2707, 2
        %v2714 = vrot.slane %v2708, 2
        %v2715 = vsel %vm378, %v2713, %v2714
        %v2716 = vrot.slane %v2709, 2
        %v2717 = vsel %vm378, %v2714, %v2716
        %v2720 = vadd.f32 %v2669, %v2715
        %v2721 = vadd.f32 %v2670, %v2717
        %s2722 = sld [smem:[#allocation3 + $0x2e]]
        %v2723 = vstv %s2722
        %v2724 = vmul.f32 %v2723, %v2599
        %v2725 = vmul.f32 %v2723, %v2600
        %2728 = vrot.lane.b32.xlu0 %v2724, 127
        %v2729 = vpop.permute.xlu0 %2728
        %2730 = vrot.lane.b32.xlu0 %v2725, 127
        %v2731 = vpop.permute.xlu0 %2730
        %v2734 = vadd.f32 %v2686, %v2729
        %v2735 = vadd.f32 %v2687, %v2731
        %s2736 = sld [smem:[#allocation3 + $0x76]]
        %v2737 = vstv %s2736
        %v2738 = vmul.f32 %v2737, %v2599
        %v2739 = vmul.f32 %v2737, %v2600
        %2742 = vrot.lane.b32.xlu0 %v2738, 127
        %v2743 = vpop.permute.xlu0 %2742
        %2744 = vrot.lane.b32.xlu0 %v2739, 127
        %v2745 = vpop.permute.xlu0 %2744
        %v2748 = vadd.f32 %v2703, %v2743
        %v2749 = vadd.f32 %v2704, %v2745
        %s2750 = sld [smem:[#allocation3 + $0xbe]]
        %v2751 = vstv %s2750
        %v2752 = vmul.f32 %v2751, %v2599
        %v2753 = vmul.f32 %v2751, %v2600
        %2756 = vrot.lane.b32.xlu0 %v2752, 127
        %v2757 = vpop.permute.xlu0 %2756
        %2758 = vrot.lane.b32.xlu0 %v2753, 127
        %v2759 = vpop.permute.xlu0 %2758
        %v2762 = vadd.f32 %v2720, %v2757
        %v2763 = vadd.f32 %v2721, %v2759
        %s2764 = sld [smem:[#allocation3 + $0x31]]
        %v2765 = vstv %s2764
        %v2766 = vmul.f32 %v2765, %v2599
        %v2767 = vmul.f32 %v2765, %v2600
        %v2768 = vmul.f32 %v2765, %v2601
        %v2772 = vrot.slane %v2766, 1
        %v2773 = vrot.slane %v2767, 1
        %v2774 = vsel %vm326, %v2772, %v2773
        %v2775 = vrot.slane %v2768, 1
        %v2776 = vsel %vm326, %v2773, %v2775
        %2777 = vrot.lane.b32.xlu0 %v2774, 127
        %v2778 = vpop.permute.xlu0 %2777
        %2779 = vrot.lane.b32.xlu0 %v2776, 127
        %v2780 = vpop.permute.xlu0 %2779
        %v2783 = vadd.f32 %v2734, %v2778
        %v2784 = vadd.f32 %v2735, %v2780
        %s2785 = sld [smem:[#allocation3 + $0x79]]
        %v2786 = vstv %s2785
        %v2787 = vmul.f32 %v2786, %v2599
        %v2788 = vmul.f32 %v2786, %v2600
        %v2789 = vmul.f32 %v2786, %v2601
        %v2793 = vrot.slane %v2787, 1
        %v2794 = vrot.slane %v2788, 1
        %v2795 = vsel %vm326, %v2793, %v2794
        %v2796 = vrot.slane %v2789, 1
        %v2797 = vsel %vm326, %v2794, %v2796
        %2798 = vrot.lane.b32.xlu0 %v2795, 127
        %v2799 = vpop.permute.xlu0 %2798
        %2800 = vrot.lane.b32.xlu0 %v2797, 127
        %v2801 = vpop.permute.xlu0 %2800
        %v2804 = vadd.f32 %v2748, %v2799
        %v2805 = vadd.f32 %v2749, %v2801
        %s2806 = sld [smem:[#allocation3 + $0xc1]]
        %v2807 = vstv %s2806
        %v2808 = vmul.f32 %v2807, %v2599
        %v2809 = vmul.f32 %v2807, %v2600
        %v2810 = vmul.f32 %v2807, %v2601
        %v2814 = vrot.slane %v2808, 1
        %v2815 = vrot.slane %v2809, 1
        %v2816 = vsel %vm326, %v2814, %v2815
        %v2817 = vrot.slane %v2810, 1
        %v2818 = vsel %vm326, %v2815, %v2817
        %2819 = vrot.lane.b32.xlu0 %v2816, 127
        %v2820 = vpop.permute.xlu0 %2819
        %2821 = vrot.lane.b32.xlu0 %v2818, 127
        %v2822 = vpop.permute.xlu0 %2821
        %v2825 = vadd.f32 %v2762, %v2820
        %v2826 = vadd.f32 %v2763, %v2822
        %s2827 = sld [smem:[#allocation3 + $0x34]]
        %v2828 = vstv %s2827
        %v2829 = vmul.f32 %v2828, %v2599
        %v2830 = vmul.f32 %v2828, %v2600
        %v2831 = vmul.f32 %v2828, %v2601
        %v2835 = vrot.slane %v2829, 2
        %v2836 = vrot.slane %v2830, 2
        %v2837 = vsel %vm378, %v2835, %v2836
        %v2838 = vrot.slane %v2831, 2
        %v2839 = vsel %vm378, %v2836, %v2838
        %2840 = vrot.lane.b32.xlu0 %v2837, 127
        %v2841 = vpop.permute.xlu0 %2840
        %2842 = vrot.lane.b32.xlu0 %v2839, 127
        %v2843 = vpop.permute.xlu0 %2842
        %v2846 = vadd.f32 %v2783, %v2841
        %v2847 = vadd.f32 %v2784, %v2843
        %s2848 = sld [smem:[#allocation3 + $0x7c]]
        %v2849 = vstv %s2848
        %v2850 = vmul.f32 %v2849, %v2599
        %v2851 = vmul.f32 %v2849, %v2600
        %v2852 = vmul.f32 %v2849, %v2601
        %v2856 = vrot.slane %v2850, 2
        %v2857 = vrot.slane %v2851, 2
        %v2858 = vsel %vm378, %v2856, %v2857
        %v2859 = vrot.slane %v2852, 2
        %v2860 = vsel %vm378, %v2857, %v2859
        %2861 = vrot.lane.b32.xlu0 %v2858, 127
        %v2862 = vpop.permute.xlu0 %2861
        %2863 = vrot.lane.b32.xlu0 %v2860, 127
        %v2864 = vpop.permute.xlu0 %2863
        %v2867 = vadd.f32 %v2804, %v2862
        %v2868 = vadd.f32 %v2805, %v2864
        %s2869 = sld [smem:[#allocation3 + $0xc4]]
        %v2870 = vstv %s2869
        %v2871 = vmul.f32 %v2870, %v2599
        %v2872 = vmul.f32 %v2870, %v2600
        %v2873 = vmul.f32 %v2870, %v2601
        %v2877 = vrot.slane %v2871, 2
        %v2878 = vrot.slane %v2872, 2
        %v2879 = vsel %vm378, %v2877, %v2878
        %v2880 = vrot.slane %v2873, 2
        %v2881 = vsel %vm378, %v2878, %v2880
        %2882 = vrot.lane.b32.xlu0 %v2879, 127
        %v2883 = vpop.permute.xlu0 %2882
        %2884 = vrot.lane.b32.xlu0 %v2881, 127
        %v2885 = vpop.permute.xlu0 %2884
        %v2888 = vadd.f32 %v2825, %v2883
        %v2889 = vadd.f32 %v2826, %v2885
        %s2890 = sld [smem:[#allocation3 + $0x2f]]
        %v2891 = vstv %s2890
        %v2892 = vmul.f32 %v2891, %v2599
        %v2893 = vmul.f32 %v2891, %v2600
        %2896 = vrot.lane.b32.xlu0 %v2892, 126
        %v2897 = vpop.permute.xlu0 %2896
        %2898 = vrot.lane.b32.xlu0 %v2893, 126
        %v2899 = vpop.permute.xlu0 %2898
        %v2902 = vadd.f32 %v2846, %v2897
        %v2903 = vadd.f32 %v2847, %v2899
        %s2904 = sld [smem:[#allocation3 + $0x77]]
        %v2905 = vstv %s2904
        %v2906 = vmul.f32 %v2905, %v2599
        %v2907 = vmul.f32 %v2905, %v2600
        %2910 = vrot.lane.b32.xlu0 %v2906, 126
        %v2911 = vpop.permute.xlu0 %2910
        %2912 = vrot.lane.b32.xlu0 %v2907, 126
        %v2913 = vpop.permute.xlu0 %2912
        %v2916 = vadd.f32 %v2867, %v2911
        %v2917 = vadd.f32 %v2868, %v2913
        %s2918 = sld [smem:[#allocation3 + $0xbf]]
        %v2919 = vstv %s2918
        %v2920 = vmul.f32 %v2919, %v2599
        %v2921 = vmul.f32 %v2919, %v2600
        %2924 = vrot.lane.b32.xlu0 %v2920, 126
        %v2925 = vpop.permute.xlu0 %2924
        %2926 = vrot.lane.b32.xlu0 %v2921, 126
        %v2927 = vpop.permute.xlu0 %2926
        %v2930 = vadd.f32 %v2888, %v2925
        %v2931 = vadd.f32 %v2889, %v2927
        %s2932 = sld [smem:[#allocation3 + $0x32]]
        %v2933 = vstv %s2932
        %v2934 = vmul.f32 %v2933, %v2599
        %v2935 = vmul.f32 %v2933, %v2600
        %v2936 = vmul.f32 %v2933, %v2601
        %v2940 = vrot.slane %v2934, 1
        %v2941 = vrot.slane %v2935, 1
        %v2942 = vsel %vm326, %v2940, %v2941
        %v2943 = vrot.slane %v2936, 1
        %v2944 = vsel %vm326, %v2941, %v2943
        %2945 = vrot.lane.b32.xlu0 %v2942, 126
        %v2946 = vpop.permute.xlu0 %2945
        %2947 = vrot.lane.b32.xlu0 %v2944, 126
        %v2948 = vpop.permute.xlu0 %2947
        %v2951 = vadd.f32 %v2902, %v2946
        %v2952 = vadd.f32 %v2903, %v2948
        %s2953 = sld [smem:[#allocation3 + $0x7a]]
        %v2954 = vstv %s2953
        %v2955 = vmul.f32 %v2954, %v2599
        %v2956 = vmul.f32 %v2954, %v2600
        %v2957 = vmul.f32 %v2954, %v2601
        %v2961 = vrot.slane %v2955, 1
        %v2962 = vrot.slane %v2956, 1
        %v2963 = vsel %vm326, %v2961, %v2962
        %v2964 = vrot.slane %v2957, 1
        %v2965 = vsel %vm326, %v2962, %v2964
        %2966 = vrot.lane.b32.xlu0 %v2963, 126
        %v2967 = vpop.permute.xlu0 %2966
        %2968 = vrot.lane.b32.xlu0 %v2965, 126
        %v2969 = vpop.permute.xlu0 %2968
        %v2972 = vadd.f32 %v2916, %v2967
        %v2973 = vadd.f32 %v2917, %v2969
        %s2974 = sld [smem:[#allocation3 + $0xc2]]
        %v2975 = vstv %s2974
        %v2976 = vmul.f32 %v2975, %v2599
        %v2977 = vmul.f32 %v2975, %v2600
        %v2978 = vmul.f32 %v2975, %v2601
        %v2982 = vrot.slane %v2976, 1
        %v2983 = vrot.slane %v2977, 1
        %v2984 = vsel %vm326, %v2982, %v2983
        %v2985 = vrot.slane %v2978, 1
        %v2986 = vsel %vm326, %v2983, %v2985
        %2987 = vrot.lane.b32.xlu0 %v2984, 126
        %v2988 = vpop.permute.xlu0 %2987
        %2989 = vrot.lane.b32.xlu0 %v2986, 126
        %v2990 = vpop.permute.xlu0 %2989
        %v2993 = vadd.f32 %v2930, %v2988
        %v2994 = vadd.f32 %v2931, %v2990
        %s2995 = sld [smem:[#allocation3 + $0x35]]
        %v2996 = vstv %s2995
        %v2997 = vmul.f32 %v2996, %v2599
        %v2998 = vmul.f32 %v2996, %v2600
        %v2999 = vmul.f32 %v2996, %v2601
        %v3003 = vrot.slane %v2997, 2
        %v3004 = vrot.slane %v2998, 2
        %v3005 = vsel %vm378, %v3003, %v3004
        %v3006 = vrot.slane %v2999, 2
        %v3007 = vsel %vm378, %v3004, %v3006
        %3008 = vrot.lane.b32.xlu0 %v3005, 126
        %v3009 = vpop.permute.xlu0 %3008
        %3010 = vrot.lane.b32.xlu0 %v3007, 126
        %v3011 = vpop.permute.xlu0 %3010
        %v3014 = vadd.f32 %v2951, %v3009
        %v3015 = vadd.f32 %v2952, %v3011
        %s3016 = sld [smem:[#allocation3 + $0x7d]]
        %v3017 = vstv %s3016
        %v3018 = vmul.f32 %v3017, %v2599
        %v3019 = vmul.f32 %v3017, %v2600
        %v3020 = vmul.f32 %v3017, %v2601
        %v3024 = vrot.slane %v3018, 2
        %v3025 = vrot.slane %v3019, 2
        %v3026 = vsel %vm378, %v3024, %v3025
        %v3027 = vrot.slane %v3020, 2
        %v3028 = vsel %vm378, %v3025, %v3027
        %3029 = vrot.lane.b32.xlu0 %v3026, 126
        %v3030 = vpop.permute.xlu0 %3029
        %3031 = vrot.lane.b32.xlu0 %v3028, 126
        %v3032 = vpop.permute.xlu0 %3031
        %v3035 = vadd.f32 %v2972, %v3030
        %v3036 = vadd.f32 %v2973, %v3032
        %s3037 = sld [smem:[#allocation3 + $0xc5]]
        %v3038 = vstv %s3037
        %v3039 = vmul.f32 %v3038, %v2599
        %v3040 = vmul.f32 %v3038, %v2600
        %v3041 = vmul.f32 %v3038, %v2601
        %v3045 = vrot.slane %v3039, 2
        %v3046 = vrot.slane %v3040, 2
        %v3047 = vsel %vm378, %v3045, %v3046
        %v3048 = vrot.slane %v3041, 2
        %v3049 = vsel %vm378, %v3046, %v3048
        %3050 = vrot.lane.b32.xlu0 %v3047, 126
        %v3051 = vpop.permute.xlu0 %3050
        %3052 = vrot.lane.b32.xlu0 %v3049, 126
        %v3053 = vpop.permute.xlu0 %3052
        %v3056 = vadd.f32 %v2993, %v3051
        %v3057 = vadd.f32 %v2994, %v3053
        %s3058 = scalar_lea.vmem [#allocation2], 144
        %v3059 = vld [vmem:[%s3058] sm:$0xff]
        %v3060 = vld [vmem:[%s3058 + $0x8] sm:$0xff]
        %v3061 = vld [vmem:[%s3058 + $0x10] sm:$0x3]
        %s3062 = sld [smem:[#allocation3 + $0x36]]
        %v3063 = vstv %s3062
        %v3064 = vmul.f32 %v3063, %v3059
        %v3065 = vmul.f32 %v3063, %v3060
        %v3066 = vadd.f32 %v3014, %v3064
        %v3067 = vadd.f32 %v3015, %v3065
        %s3068 = sld [smem:[#allocation3 + $0x7e]]
        %v3069 = vstv %s3068
        %v3070 = vmul.f32 %v3069, %v3059
        %v3071 = vmul.f32 %v3069, %v3060
        %v3072 = vadd.f32 %v3035, %v3070
        %v3073 = vadd.f32 %v3036, %v3071
        %s3074 = sld [smem:[#allocation3 + $0xc6]]
        %v3075 = vstv %s3074
        %v3076 = vmul.f32 %v3075, %v3059
        %v3077 = vmul.f32 %v3075, %v3060
        %v3078 = vadd.f32 %v3056, %v3076
        %v3079 = vadd.f32 %v3057, %v3077
        %s3080 = sld [smem:[#allocation3 + $0x39]]
        %v3081 = vstv %s3080
        %v3082 = vmul.f32 %v3081, %v3059
        %v3083 = vmul.f32 %v3081, %v3060
        %v3084 = vmul.f32 %v3081, %v3061
        %v3088 = vrot.slane %v3082, 1
        %v3089 = vrot.slane %v3083, 1
        %v3090 = vsel %vm326, %v3088, %v3089
        %v3091 = vrot.slane %v3084, 1
        %v3092 = vsel %vm326, %v3089, %v3091
        %v3095 = vadd.f32 %v3066, %v3090
        %v3096 = vadd.f32 %v3067, %v3092
        %s3097 = sld [smem:[#allocation3 + $0x81]]
        %v3098 = vstv %s3097
        %v3099 = vmul.f32 %v3098, %v3059
        %v3100 = vmul.f32 %v3098, %v3060
        %v3101 = vmul.f32 %v3098, %v3061
        %v3105 = vrot.slane %v3099, 1
        %v3106 = vrot.slane %v3100, 1
        %v3107 = vsel %vm326, %v3105, %v3106
        %v3108 = vrot.slane %v3101, 1
        %v3109 = vsel %vm326, %v3106, %v3108
        %v3112 = vadd.f32 %v3072, %v3107
        %v3113 = vadd.f32 %v3073, %v3109
        %s3114 = sld [smem:[#allocation3 + $0xc9]]
        %v3115 = vstv %s3114
        %v3116 = vmul.f32 %v3115, %v3059
        %v3117 = vmul.f32 %v3115, %v3060
        %v3118 = vmul.f32 %v3115, %v3061
        %v3122 = vrot.slane %v3116, 1
        %v3123 = vrot.slane %v3117, 1
        %v3124 = vsel %vm326, %v3122, %v3123
        %v3125 = vrot.slane %v3118, 1
        %v3126 = vsel %vm326, %v3123, %v3125
        %v3129 = vadd.f32 %v3078, %v3124
        %v3130 = vadd.f32 %v3079, %v3126
        %s3131 = sld [smem:[#allocation3 + $0x3c]]
        %v3132 = vstv %s3131
        %v3133 = vmul.f32 %v3132, %v3059
        %v3134 = vmul.f32 %v3132, %v3060
        %v3135 = vmul.f32 %v3132, %v3061
        %v3139 = vrot.slane %v3133, 2
        %v3140 = vrot.slane %v3134, 2
        %v3141 = vsel %vm378, %v3139, %v3140
        %v3142 = vrot.slane %v3135, 2
        %v3143 = vsel %vm378, %v3140, %v3142
        %v3146 = vadd.f32 %v3095, %v3141
        %v3147 = vadd.f32 %v3096, %v3143
        %s3148 = sld [smem:[#allocation3 + $0x84]]
        %v3149 = vstv %s3148
        %v3150 = vmul.f32 %v3149, %v3059
        %v3151 = vmul.f32 %v3149, %v3060
        %v3152 = vmul.f32 %v3149, %v3061
        %v3156 = vrot.slane %v3150, 2
        %v3157 = vrot.slane %v3151, 2
        %v3158 = vsel %vm378, %v3156, %v3157
        %v3159 = vrot.slane %v3152, 2
        %v3160 = vsel %vm378, %v3157, %v3159
        %v3163 = vadd.f32 %v3112, %v3158
        %v3164 = vadd.f32 %v3113, %v3160
        %s3165 = sld [smem:[#allocation3 + $0xcc]]
        %v3166 = vstv %s3165
        %v3167 = vmul.f32 %v3166, %v3059
        %v3168 = vmul.f32 %v3166, %v3060
        %v3169 = vmul.f32 %v3166, %v3061
        %v3173 = vrot.slane %v3167, 2
        %v3174 = vrot.slane %v3168, 2
        %v3175 = vsel %vm378, %v3173, %v3174
        %v3176 = vrot.slane %v3169, 2
        %v3177 = vsel %vm378, %v3174, %v3176
        %v3180 = vadd.f32 %v3129, %v3175
        %v3181 = vadd.f32 %v3130, %v3177
        %s3182 = sld [smem:[#allocation3 + $0x37]]
        %v3183 = vstv %s3182
        %v3184 = vmul.f32 %v3183, %v3059
        %v3185 = vmul.f32 %v3183, %v3060
        %3188 = vrot.lane.b32.xlu0 %v3184, 127
        %v3189 = vpop.permute.xlu0 %3188
        %3190 = vrot.lane.b32.xlu0 %v3185, 127
        %v3191 = vpop.permute.xlu0 %3190
        %v3194 = vadd.f32 %v3146, %v3189
        %v3195 = vadd.f32 %v3147, %v3191
        %s3196 = sld [smem:[#allocation3 + $0x7f]]
        %v3197 = vstv %s3196
        %v3198 = vmul.f32 %v3197, %v3059
        %v3199 = vmul.f32 %v3197, %v3060
        %3202 = vrot.lane.b32.xlu0 %v3198, 127
        %v3203 = vpop.permute.xlu0 %3202
        %3204 = vrot.lane.b32.xlu0 %v3199, 127
        %v3205 = vpop.permute.xlu0 %3204
        %v3208 = vadd.f32 %v3163, %v3203
        %v3209 = vadd.f32 %v3164, %v3205
        %s3210 = sld [smem:[#allocation3 + $0xc7]]
        %v3211 = vstv %s3210
        %v3212 = vmul.f32 %v3211, %v3059
        %v3213 = vmul.f32 %v3211, %v3060
        %3216 = vrot.lane.b32.xlu0 %v3212, 127
        %v3217 = vpop.permute.xlu0 %3216
        %3218 = vrot.lane.b32.xlu0 %v3213, 127
        %v3219 = vpop.permute.xlu0 %3218
        %v3222 = vadd.f32 %v3180, %v3217
        %v3223 = vadd.f32 %v3181, %v3219
        %s3224 = sld [smem:[#allocation3 + $0x3a]]
        %v3225 = vstv %s3224
        %v3226 = vmul.f32 %v3225, %v3059
        %v3227 = vmul.f32 %v3225, %v3060
        %v3228 = vmul.f32 %v3225, %v3061
        %v3232 = vrot.slane %v3226, 1
        %v3233 = vrot.slane %v3227, 1
        %v3234 = vsel %vm326, %v3232, %v3233
        %v3235 = vrot.slane %v3228, 1
        %v3236 = vsel %vm326, %v3233, %v3235
        %3237 = vrot.lane.b32.xlu0 %v3234, 127
        %v3238 = vpop.permute.xlu0 %3237
        %3239 = vrot.lane.b32.xlu0 %v3236, 127
        %v3240 = vpop.permute.xlu0 %3239
        %v3243 = vadd.f32 %v3194, %v3238
        %v3244 = vadd.f32 %v3195, %v3240
        %s3245 = sld [smem:[#allocation3 + $0x82]]
        %v3246 = vstv %s3245
        %v3247 = vmul.f32 %v3246, %v3059
        %v3248 = vmul.f32 %v3246, %v3060
        %v3249 = vmul.f32 %v3246, %v3061
        %v3253 = vrot.slane %v3247, 1
        %v3254 = vrot.slane %v3248, 1
        %v3255 = vsel %vm326, %v3253, %v3254
        %v3256 = vrot.slane %v3249, 1
        %v3257 = vsel %vm326, %v3254, %v3256
        %3258 = vrot.lane.b32.xlu0 %v3255, 127
        %v3259 = vpop.permute.xlu0 %3258
        %3260 = vrot.lane.b32.xlu0 %v3257, 127
        %v3261 = vpop.permute.xlu0 %3260
        %v3264 = vadd.f32 %v3208, %v3259
        %v3265 = vadd.f32 %v3209, %v3261
        %s3266 = sld [smem:[#allocation3 + $0xca]]
        %v3267 = vstv %s3266
        %v3268 = vmul.f32 %v3267, %v3059
        %v3269 = vmul.f32 %v3267, %v3060
        %v3270 = vmul.f32 %v3267, %v3061
        %v3274 = vrot.slane %v3268, 1
        %v3275 = vrot.slane %v3269, 1
        %v3276 = vsel %vm326, %v3274, %v3275
        %v3277 = vrot.slane %v3270, 1
        %v3278 = vsel %vm326, %v3275, %v3277
        %3279 = vrot.lane.b32.xlu0 %v3276, 127
        %v3280 = vpop.permute.xlu0 %3279
        %3281 = vrot.lane.b32.xlu0 %v3278, 127
        %v3282 = vpop.permute.xlu0 %3281
        %v3285 = vadd.f32 %v3222, %v3280
        %v3286 = vadd.f32 %v3223, %v3282
        %s3287 = sld [smem:[#allocation3 + $0x3d]]
        %v3288 = vstv %s3287
        %v3289 = vmul.f32 %v3288, %v3059
        %v3290 = vmul.f32 %v3288, %v3060
        %v3291 = vmul.f32 %v3288, %v3061
        %v3295 = vrot.slane %v3289, 2
        %v3296 = vrot.slane %v3290, 2
        %v3297 = vsel %vm378, %v3295, %v3296
        %v3298 = vrot.slane %v3291, 2
        %v3299 = vsel %vm378, %v3296, %v3298
        %3300 = vrot.lane.b32.xlu0 %v3297, 127
        %v3301 = vpop.permute.xlu0 %3300
        %3302 = vrot.lane.b32.xlu0 %v3299, 127
        %v3303 = vpop.permute.xlu0 %3302
        %v3306 = vadd.f32 %v3243, %v3301
        %v3307 = vadd.f32 %v3244, %v3303
        %s3308 = sld [smem:[#allocation3 + $0x85]]
        %v3309 = vstv %s3308
        %v3310 = vmul.f32 %v3309, %v3059
        %v3311 = vmul.f32 %v3309, %v3060
        %v3312 = vmul.f32 %v3309, %v3061
        %v3316 = vrot.slane %v3310, 2
        %v3317 = vrot.slane %v3311, 2
        %v3318 = vsel %vm378, %v3316, %v3317
        %v3319 = vrot.slane %v3312, 2
        %v3320 = vsel %vm378, %v3317, %v3319
        %3321 = vrot.lane.b32.xlu0 %v3318, 127
        %v3322 = vpop.permute.xlu0 %3321
        %3323 = vrot.lane.b32.xlu0 %v3320, 127
        %v3324 = vpop.permute.xlu0 %3323
        %v3327 = vadd.f32 %v3264, %v3322
        %v3328 = vadd.f32 %v3265, %v3324
        %s3329 = sld [smem:[#allocation3 + $0xcd]]
        %v3330 = vstv %s3329
        %v3331 = vmul.f32 %v3330, %v3059
        %v3332 = vmul.f32 %v3330, %v3060
        %v3333 = vmul.f32 %v3330, %v3061
        %v3337 = vrot.slane %v3331, 2
        %v3338 = vrot.slane %v3332, 2
        %v3339 = vsel %vm378, %v3337, %v3338
        %v3340 = vrot.slane %v3333, 2
        %v3341 = vsel %vm378, %v3338, %v3340
        %3342 = vrot.lane.b32.xlu0 %v3339, 127
        %v3343 = vpop.permute.xlu0 %3342
        %3344 = vrot.lane.b32.xlu0 %v3341, 127
        %v3345 = vpop.permute.xlu0 %3344
        %v3348 = vadd.f32 %v3285, %v3343
        %v3349 = vadd.f32 %v3286, %v3345
        %s3350 = sld [smem:[#allocation3 + $0x38]]
        %v3351 = vstv %s3350
        %v3352 = vmul.f32 %v3351, %v3059
        %v3353 = vmul.f32 %v3351, %v3060
        %3356 = vrot.lane.b32.xlu0 %v3352, 126
        %v3357 = vpop.permute.xlu0 %3356
        %3358 = vrot.lane.b32.xlu0 %v3353, 126
        %v3359 = vpop.permute.xlu0 %3358
        %v3362 = vadd.f32 %v3306, %v3357
        %v3363 = vadd.f32 %v3307, %v3359
        %s3364 = sld [smem:[#allocation3 + $0x80]]
        %v3365 = vstv %s3364
        %v3366 = vmul.f32 %v3365, %v3059
        %v3367 = vmul.f32 %v3365, %v3060
        %3370 = vrot.lane.b32.xlu0 %v3366, 126
        %v3371 = vpop.permute.xlu0 %3370
        %3372 = vrot.lane.b32.xlu0 %v3367, 126
        %v3373 = vpop.permute.xlu0 %3372
        %v3376 = vadd.f32 %v3327, %v3371
        %v3377 = vadd.f32 %v3328, %v3373
        %s3378 = sld [smem:[#allocation3 + $0xc8]]
        %v3379 = vstv %s3378
        %v3380 = vmul.f32 %v3379, %v3059
        %v3381 = vmul.f32 %v3379, %v3060
        %3384 = vrot.lane.b32.xlu0 %v3380, 126
        %v3385 = vpop.permute.xlu0 %3384
        %3386 = vrot.lane.b32.xlu0 %v3381, 126
        %v3387 = vpop.permute.xlu0 %3386
        %v3390 = vadd.f32 %v3348, %v3385
        %v3391 = vadd.f32 %v3349, %v3387
        %s3392 = sld [smem:[#allocation3 + $0x3b]]
        %v3393 = vstv %s3392
        %v3394 = vmul.f32 %v3393, %v3059
        %v3395 = vmul.f32 %v3393, %v3060
        %v3396 = vmul.f32 %v3393, %v3061
        %v3400 = vrot.slane %v3394, 1
        %v3401 = vrot.slane %v3395, 1
        %v3402 = vsel %vm326, %v3400, %v3401
        %v3403 = vrot.slane %v3396, 1
        %v3404 = vsel %vm326, %v3401, %v3403
        %3405 = vrot.lane.b32.xlu0 %v3402, 126
        %v3406 = vpop.permute.xlu0 %3405
        %3407 = vrot.lane.b32.xlu0 %v3404, 126
        %v3408 = vpop.permute.xlu0 %3407
        %v3411 = vadd.f32 %v3362, %v3406
        %v3412 = vadd.f32 %v3363, %v3408
        %s3413 = sld [smem:[#allocation3 + $0x83]]
        %v3414 = vstv %s3413
        %v3415 = vmul.f32 %v3414, %v3059
        %v3416 = vmul.f32 %v3414, %v3060
        %v3417 = vmul.f32 %v3414, %v3061
        %v3421 = vrot.slane %v3415, 1
        %v3422 = vrot.slane %v3416, 1
        %v3423 = vsel %vm326, %v3421, %v3422
        %v3424 = vrot.slane %v3417, 1
        %v3425 = vsel %vm326, %v3422, %v3424
        %3426 = vrot.lane.b32.xlu0 %v3423, 126
        %v3427 = vpop.permute.xlu0 %3426
        %3428 = vrot.lane.b32.xlu0 %v3425, 126
        %v3429 = vpop.permute.xlu0 %3428
        %v3432 = vadd.f32 %v3376, %v3427
        %v3433 = vadd.f32 %v3377, %v3429
        %s3434 = sld [smem:[#allocation3 + $0xcb]]
        %v3435 = vstv %s3434
        %v3436 = vmul.f32 %v3435, %v3059
        %v3437 = vmul.f32 %v3435, %v3060
        %v3438 = vmul.f32 %v3435, %v3061
        %v3442 = vrot.slane %v3436, 1
        %v3443 = vrot.slane %v3437, 1
        %v3444 = vsel %vm326, %v3442, %v3443
        %v3445 = vrot.slane %v3438, 1
        %v3446 = vsel %vm326, %v3443, %v3445
        %3447 = vrot.lane.b32.xlu0 %v3444, 126
        %v3448 = vpop.permute.xlu0 %3447
        %3449 = vrot.lane.b32.xlu0 %v3446, 126
        %v3450 = vpop.permute.xlu0 %3449
        %v3453 = vadd.f32 %v3390, %v3448
        %v3454 = vadd.f32 %v3391, %v3450
        %s3455 = sld [smem:[#allocation3 + $0x3e]]
        %v3456 = vstv %s3455
        %v3457 = vmul.f32 %v3456, %v3059
        %v3458 = vmul.f32 %v3456, %v3060
        %v3459 = vmul.f32 %v3456, %v3061
        %v3463 = vrot.slane %v3457, 2
        %v3464 = vrot.slane %v3458, 2
        %v3465 = vsel %vm378, %v3463, %v3464
        %v3466 = vrot.slane %v3459, 2
        %v3467 = vsel %vm378, %v3464, %v3466
        %3468 = vrot.lane.b32.xlu0 %v3465, 126
        %v3469 = vpop.permute.xlu0 %3468
        %3470 = vrot.lane.b32.xlu0 %v3467, 126
        %v3471 = vpop.permute.xlu0 %3470
        %v3474 = vadd.f32 %v3411, %v3469
        %v3475 = vadd.f32 %v3412, %v3471
        %s3476 = sld [smem:[#allocation3 + $0x86]]
        %v3477 = vstv %s3476
        %v3478 = vmul.f32 %v3477, %v3059
        %v3479 = vmul.f32 %v3477, %v3060
        %v3480 = vmul.f32 %v3477, %v3061
        %v3484 = vrot.slane %v3478, 2
        %v3485 = vrot.slane %v3479, 2
        %v3486 = vsel %vm378, %v3484, %v3485
        %v3487 = vrot.slane %v3480, 2
        %v3488 = vsel %vm378, %v3485, %v3487
        %3489 = vrot.lane.b32.xlu0 %v3486, 126
        %v3490 = vpop.permute.xlu0 %3489
        %3491 = vrot.lane.b32.xlu0 %v3488, 126
        %v3492 = vpop.permute.xlu0 %3491
        %v3495 = vadd.f32 %v3432, %v3490
        %v3496 = vadd.f32 %v3433, %v3492
        %s3497 = sld [smem:[#allocation3 + $0xce]]
        %v3498 = vstv %s3497
        %v3499 = vmul.f32 %v3498, %v3059
        %v3500 = vmul.f32 %v3498, %v3060
        %v3501 = vmul.f32 %v3498, %v3061
        %v3505 = vrot.slane %v3499, 2
        %v3506 = vrot.slane %v3500, 2
        %v3507 = vsel %vm378, %v3505, %v3506
        %v3508 = vrot.slane %v3501, 2
        %v3509 = vsel %vm378, %v3506, %v3508
        %3510 = vrot.lane.b32.xlu0 %v3507, 126
        %v3511 = vpop.permute.xlu0 %3510
        %3512 = vrot.lane.b32.xlu0 %v3509, 126
        %v3513 = vpop.permute.xlu0 %3512
        %v3516 = vadd.f32 %v3453, %v3511
        %v3517 = vadd.f32 %v3454, %v3513
        %s3518 = scalar_lea.vmem [#allocation2], 168
        %v3519 = vld [vmem:[%s3518] sm:$0xff]
        %v3520 = vld [vmem:[%s3518 + $0x8] sm:$0xff]
        %v3521 = vld [vmem:[%s3518 + $0x10] sm:$0x3]
        %s3522 = sld [smem:[#allocation3 + $0x3f]]
        %v3523 = vstv %s3522
        %v3524 = vmul.f32 %v3523, %v3519
        %v3525 = vmul.f32 %v3523, %v3520
        %v3526 = vadd.f32 %v3474, %v3524
        %v3527 = vadd.f32 %v3475, %v3525
        %s3528 = sld [smem:[#allocation3 + $0x87]]
        %v3529 = vstv %s3528
        %v3530 = vmul.f32 %v3529, %v3519
        %v3531 = vmul.f32 %v3529, %v3520
        %v3532 = vadd.f32 %v3495, %v3530
        %v3533 = vadd.f32 %v3496, %v3531
        %s3534 = sld [smem:[#allocation3 + $0xcf]]
        %v3535 = vstv %s3534
        %v3536 = vmul.f32 %v3535, %v3519
        %v3537 = vmul.f32 %v3535, %v3520
        %v3538 = vadd.f32 %v3516, %v3536
        %v3539 = vadd.f32 %v3517, %v3537
        %s3540 = sld [smem:[#allocation3 + $0x42]]
        %v3541 = vstv %s3540
        %v3542 = vmul.f32 %v3541, %v3519
        %v3543 = vmul.f32 %v3541, %v3520
        %v3544 = vmul.f32 %v3541, %v3521
        %v3548 = vrot.slane %v3542, 1
        %v3549 = vrot.slane %v3543, 1
        %v3550 = vsel %vm326, %v3548, %v3549
        %v3551 = vrot.slane %v3544, 1
        %v3552 = vsel %vm326, %v3549, %v3551
        %v3555 = vadd.f32 %v3526, %v3550
        %v3556 = vadd.f32 %v3527, %v3552
        %s3557 = sld [smem:[#allocation3 + $0x8a]]
        %v3558 = vstv %s3557
        %v3559 = vmul.f32 %v3558, %v3519
        %v3560 = vmul.f32 %v3558, %v3520
        %v3561 = vmul.f32 %v3558, %v3521
        %v3565 = vrot.slane %v3559, 1
        %v3566 = vrot.slane %v3560, 1
        %v3567 = vsel %vm326, %v3565, %v3566
        %v3568 = vrot.slane %v3561, 1
        %v3569 = vsel %vm326, %v3566, %v3568
        %v3572 = vadd.f32 %v3532, %v3567
        %v3573 = vadd.f32 %v3533, %v3569
        %s3574 = sld [smem:[#allocation3 + $0xd2]]
        %v3575 = vstv %s3574
        %v3576 = vmul.f32 %v3575, %v3519
        %v3577 = vmul.f32 %v3575, %v3520
        %v3578 = vmul.f32 %v3575, %v3521
        %v3582 = vrot.slane %v3576, 1
        %v3583 = vrot.slane %v3577, 1
        %v3584 = vsel %vm326, %v3582, %v3583
        %v3585 = vrot.slane %v3578, 1
        %v3586 = vsel %vm326, %v3583, %v3585
        %v3589 = vadd.f32 %v3538, %v3584
        %v3590 = vadd.f32 %v3539, %v3586
        %s3591 = sld [smem:[#allocation3 + $0x45]]
        %v3592 = vstv %s3591
        %v3593 = vmul.f32 %v3592, %v3519
        %v3594 = vmul.f32 %v3592, %v3520
        %v3595 = vmul.f32 %v3592, %v3521
        %v3599 = vrot.slane %v3593, 2
        %v3600 = vrot.slane %v3594, 2
        %v3601 = vsel %vm378, %v3599, %v3600
        %v3602 = vrot.slane %v3595, 2
        %v3603 = vsel %vm378, %v3600, %v3602
        %v3606 = vadd.f32 %v3555, %v3601
        %v3607 = vadd.f32 %v3556, %v3603
        %s3608 = sld [smem:[#allocation3 + $0x8d]]
        %v3609 = vstv %s3608
        %v3610 = vmul.f32 %v3609, %v3519
        %v3611 = vmul.f32 %v3609, %v3520
        %v3612 = vmul.f32 %v3609, %v3521
        %v3616 = vrot.slane %v3610, 2
        %v3617 = vrot.slane %v3611, 2
        %v3618 = vsel %vm378, %v3616, %v3617
        %v3619 = vrot.slane %v3612, 2
        %v3620 = vsel %vm378, %v3617, %v3619
        %v3623 = vadd.f32 %v3572, %v3618
        %v3624 = vadd.f32 %v3573, %v3620
        %s3625 = sld [smem:[#allocation3 + $0xd5]]
        %v3626 = vstv %s3625
        %v3627 = vmul.f32 %v3626, %v3519
        %v3628 = vmul.f32 %v3626, %v3520
        %v3629 = vmul.f32 %v3626, %v3521
        %v3633 = vrot.slane %v3627, 2
        %v3634 = vrot.slane %v3628, 2
        %v3635 = vsel %vm378, %v3633, %v3634
        %v3636 = vrot.slane %v3629, 2
        %v3637 = vsel %vm378, %v3634, %v3636
        %v3640 = vadd.f32 %v3589, %v3635
        %v3641 = vadd.f32 %v3590, %v3637
        %s3642 = sld [smem:[#allocation3 + $0x40]]
        %v3643 = vstv %s3642
        %v3644 = vmul.f32 %v3643, %v3519
        %v3645 = vmul.f32 %v3643, %v3520
        %3648 = vrot.lane.b32.xlu0 %v3644, 127
        %v3649 = vpop.permute.xlu0 %3648
        %3650 = vrot.lane.b32.xlu0 %v3645, 127
        %v3651 = vpop.permute.xlu0 %3650
        %v3654 = vadd.f32 %v3606, %v3649
        %v3655 = vadd.f32 %v3607, %v3651
        %s3656 = sld [smem:[#allocation3 + $0x88]]
        %v3657 = vstv %s3656
        %v3658 = vmul.f32 %v3657, %v3519
        %v3659 = vmul.f32 %v3657, %v3520
        %3662 = vrot.lane.b32.xlu0 %v3658, 127
        %v3663 = vpop.permute.xlu0 %3662
        %3664 = vrot.lane.b32.xlu0 %v3659, 127
        %v3665 = vpop.permute.xlu0 %3664
        %v3668 = vadd.f32 %v3623, %v3663
        %v3669 = vadd.f32 %v3624, %v3665
        %s3670 = sld [smem:[#allocation3 + $0xd0]]
        %v3671 = vstv %s3670
        %v3672 = vmul.f32 %v3671, %v3519
        %v3673 = vmul.f32 %v3671, %v3520
        %3676 = vrot.lane.b32.xlu0 %v3672, 127
        %v3677 = vpop.permute.xlu0 %3676
        %3678 = vrot.lane.b32.xlu0 %v3673, 127
        %v3679 = vpop.permute.xlu0 %3678
        %v3682 = vadd.f32 %v3640, %v3677
        %v3683 = vadd.f32 %v3641, %v3679
        %s3684 = sld [smem:[#allocation3 + $0x43]]
        %v3685 = vstv %s3684
        %v3686 = vmul.f32 %v3685, %v3519
        %v3687 = vmul.f32 %v3685, %v3520
        %v3688 = vmul.f32 %v3685, %v3521
        %v3692 = vrot.slane %v3686, 1
        %v3693 = vrot.slane %v3687, 1
        %v3694 = vsel %vm326, %v3692, %v3693
        %v3695 = vrot.slane %v3688, 1
        %v3696 = vsel %vm326, %v3693, %v3695
        %3697 = vrot.lane.b32.xlu0 %v3694, 127
        %v3698 = vpop.permute.xlu0 %3697
        %3699 = vrot.lane.b32.xlu0 %v3696, 127
        %v3700 = vpop.permute.xlu0 %3699
        %v3703 = vadd.f32 %v3654, %v3698
        %v3704 = vadd.f32 %v3655, %v3700
        %s3705 = sld [smem:[#allocation3 + $0x8b]]
        %v3706 = vstv %s3705
        %v3707 = vmul.f32 %v3706, %v3519
        %v3708 = vmul.f32 %v3706, %v3520
        %v3709 = vmul.f32 %v3706, %v3521
        %v3713 = vrot.slane %v3707, 1
        %v3714 = vrot.slane %v3708, 1
        %v3715 = vsel %vm326, %v3713, %v3714
        %v3716 = vrot.slane %v3709, 1
        %v3717 = vsel %vm326, %v3714, %v3716
        %3718 = vrot.lane.b32.xlu0 %v3715, 127
        %v3719 = vpop.permute.xlu0 %3718
        %3720 = vrot.lane.b32.xlu0 %v3717, 127
        %v3721 = vpop.permute.xlu0 %3720
        %v3724 = vadd.f32 %v3668, %v3719
        %v3725 = vadd.f32 %v3669, %v3721
        %s3726 = sld [smem:[#allocation3 + $0xd3]]
        %v3727 = vstv %s3726
        %v3728 = vmul.f32 %v3727, %v3519
        %v3729 = vmul.f32 %v3727, %v3520
        %v3730 = vmul.f32 %v3727, %v3521
        %v3734 = vrot.slane %v3728, 1
        %v3735 = vrot.slane %v3729, 1
        %v3736 = vsel %vm326, %v3734, %v3735
        %v3737 = vrot.slane %v3730, 1
        %v3738 = vsel %vm326, %v3735, %v3737
        %3739 = vrot.lane.b32.xlu0 %v3736, 127
        %v3740 = vpop.permute.xlu0 %3739
        %3741 = vrot.lane.b32.xlu0 %v3738, 127
        %v3742 = vpop.permute.xlu0 %3741
        %v3745 = vadd.f32 %v3682, %v3740
        %v3746 = vadd.f32 %v3683, %v3742
        %s3747 = sld [smem:[#allocation3 + $0x46]]
        %v3748 = vstv %s3747
        %v3749 = vmul.f32 %v3748, %v3519
        %v3750 = vmul.f32 %v3748, %v3520
        %v3751 = vmul.f32 %v3748, %v3521
        %v3755 = vrot.slane %v3749, 2
        %v3756 = vrot.slane %v3750, 2
        %v3757 = vsel %vm378, %v3755, %v3756
        %v3758 = vrot.slane %v3751, 2
        %v3759 = vsel %vm378, %v3756, %v3758
        %3760 = vrot.lane.b32.xlu0 %v3757, 127
        %v3761 = vpop.permute.xlu0 %3760
        %3762 = vrot.lane.b32.xlu0 %v3759, 127
        %v3763 = vpop.permute.xlu0 %3762
        %v3766 = vadd.f32 %v3703, %v3761
        %v3767 = vadd.f32 %v3704, %v3763
        %s3768 = sld [smem:[#allocation3 + $0x8e]]
        %v3769 = vstv %s3768
        %v3770 = vmul.f32 %v3769, %v3519
        %v3771 = vmul.f32 %v3769, %v3520
        %v3772 = vmul.f32 %v3769, %v3521
        %v3776 = vrot.slane %v3770, 2
        %v3777 = vrot.slane %v3771, 2
        %v3778 = vsel %vm378, %v3776, %v3777
        %v3779 = vrot.slane %v3772, 2
        %v3780 = vsel %vm378, %v3777, %v3779
        %3781 = vrot.lane.b32.xlu0 %v3778, 127
        %v3782 = vpop.permute.xlu0 %3781
        %3783 = vrot.lane.b32.xlu0 %v3780, 127
        %v3784 = vpop.permute.xlu0 %3783
        %v3787 = vadd.f32 %v3724, %v3782
        %v3788 = vadd.f32 %v3725, %v3784
        %s3789 = sld [smem:[#allocation3 + $0xd6]]
        %v3790 = vstv %s3789
        %v3791 = vmul.f32 %v3790, %v3519
        %v3792 = vmul.f32 %v3790, %v3520
        %v3793 = vmul.f32 %v3790, %v3521
        %v3797 = vrot.slane %v3791, 2
        %v3798 = vrot.slane %v3792, 2
        %v3799 = vsel %vm378, %v3797, %v3798
        %v3800 = vrot.slane %v3793, 2
        %v3801 = vsel %vm378, %v3798, %v3800
        %3802 = vrot.lane.b32.xlu0 %v3799, 127
        %v3803 = vpop.permute.xlu0 %3802
        %3804 = vrot.lane.b32.xlu0 %v3801, 127
        %v3805 = vpop.permute.xlu0 %3804
        %v3808 = vadd.f32 %v3745, %v3803
        %v3809 = vadd.f32 %v3746, %v3805
        %s3810 = sld [smem:[#allocation3 + $0x41]]
        %v3811 = vstv %s3810
        %v3812 = vmul.f32 %v3811, %v3519
        %v3813 = vmul.f32 %v3811, %v3520
        %3816 = vrot.lane.b32.xlu0 %v3812, 126
        %v3817 = vpop.permute.xlu0 %3816
        %3818 = vrot.lane.b32.xlu0 %v3813, 126
        %v3819 = vpop.permute.xlu0 %3818
        %v3822 = vadd.f32 %v3766, %v3817
        %v3823 = vadd.f32 %v3767, %v3819
        %s3824 = sld [smem:[#allocation3 + $0x89]]
        %v3825 = vstv %s3824
        %v3826 = vmul.f32 %v3825, %v3519
        %v3827 = vmul.f32 %v3825, %v3520
        %3830 = vrot.lane.b32.xlu0 %v3826, 126
        %v3831 = vpop.permute.xlu0 %3830
        %3832 = vrot.lane.b32.xlu0 %v3827, 126
        %v3833 = vpop.permute.xlu0 %3832
        %v3836 = vadd.f32 %v3787, %v3831
        %v3837 = vadd.f32 %v3788, %v3833
        %s3838 = sld [smem:[#allocation3 + $0xd1]]
        %v3839 = vstv %s3838
        %v3840 = vmul.f32 %v3839, %v3519
        %v3841 = vmul.f32 %v3839, %v3520
        %3844 = vrot.lane.b32.xlu0 %v3840, 126
        %v3845 = vpop.permute.xlu0 %3844
        %3846 = vrot.lane.b32.xlu0 %v3841, 126
        %v3847 = vpop.permute.xlu0 %3846
        %v3850 = vadd.f32 %v3808, %v3845
        %v3851 = vadd.f32 %v3809, %v3847
        %s3852 = sld [smem:[#allocation3 + $0x44]]
        %v3853 = vstv %s3852
        %v3854 = vmul.f32 %v3853, %v3519
        %v3855 = vmul.f32 %v3853, %v3520
        %v3856 = vmul.f32 %v3853, %v3521
        %v3860 = vrot.slane %v3854, 1
        %v3861 = vrot.slane %v3855, 1
        %v3862 = vsel %vm326, %v3860, %v3861
        %v3863 = vrot.slane %v3856, 1
        %v3864 = vsel %vm326, %v3861, %v3863
        %3865 = vrot.lane.b32.xlu0 %v3862, 126
        %v3866 = vpop.permute.xlu0 %3865
        %3867 = vrot.lane.b32.xlu0 %v3864, 126
        %v3868 = vpop.permute.xlu0 %3867
        %v3871 = vadd.f32 %v3822, %v3866
        %v3872 = vadd.f32 %v3823, %v3868
        %s3873 = sld [smem:[#allocation3 + $0x8c]]
        %v3874 = vstv %s3873
        %v3875 = vmul.f32 %v3874, %v3519
        %v3876 = vmul.f32 %v3874, %v3520
        %v3877 = vmul.f32 %v3874, %v3521
        %v3881 = vrot.slane %v3875, 1
        %v3882 = vrot.slane %v3876, 1
        %v3883 = vsel %vm326, %v3881, %v3882
        %v3884 = vrot.slane %v3877, 1
        %v3885 = vsel %vm326, %v3882, %v3884
        %3886 = vrot.lane.b32.xlu0 %v3883, 126
        %v3887 = vpop.permute.xlu0 %3886
        %3888 = vrot.lane.b32.xlu0 %v3885, 126
        %v3889 = vpop.permute.xlu0 %3888
        %v3892 = vadd.f32 %v3836, %v3887
        %v3893 = vadd.f32 %v3837, %v3889
        %s3894 = sld [smem:[#allocation3 + $0xd4]]
        %v3895 = vstv %s3894
        %v3896 = vmul.f32 %v3895, %v3519
        %v3897 = vmul.f32 %v3895, %v3520
        %v3898 = vmul.f32 %v3895, %v3521
        %v3902 = vrot.slane %v3896, 1
        %v3903 = vrot.slane %v3897, 1
        %v3904 = vsel %vm326, %v3902, %v3903
        %v3905 = vrot.slane %v3898, 1
        %v3906 = vsel %vm326, %v3903, %v3905
        %3907 = vrot.lane.b32.xlu0 %v3904, 126
        %v3908 = vpop.permute.xlu0 %3907
        %3909 = vrot.lane.b32.xlu0 %v3906, 126
        %v3910 = vpop.permute.xlu0 %3909
        %v3913 = vadd.f32 %v3850, %v3908
        %v3914 = vadd.f32 %v3851, %v3910
        %s3915 = sld [smem:[#allocation3 + $0x47]]
        %v3916 = vstv %s3915
        %v3917 = vmul.f32 %v3916, %v3519
        %v3918 = vmul.f32 %v3916, %v3520
        %v3919 = vmul.f32 %v3916, %v3521
        %v3923 = vrot.slane %v3917, 2
        %v3924 = vrot.slane %v3918, 2
        %v3925 = vsel %vm378, %v3923, %v3924
        %v3926 = vrot.slane %v3919, 2
        %v3927 = vsel %vm378, %v3924, %v3926
        %3928 = vrot.lane.b32.xlu0 %v3925, 126
        %v3929 = vpop.permute.xlu0 %3928
        %3930 = vrot.lane.b32.xlu0 %v3927, 126
        %v3931 = vpop.permute.xlu0 %3930
        %v3934 = vadd.f32 %v3871, %v3929
        %v3935 = vadd.f32 %v3872, %v3931
        %s3936 = sld [smem:[#allocation3 + $0x8f]]
        %v3937 = vstv %s3936
        %v3938 = vmul.f32 %v3937, %v3519
        %v3939 = vmul.f32 %v3937, %v3520
        %v3940 = vmul.f32 %v3937, %v3521
        %v3944 = vrot.slane %v3938, 2
        %v3945 = vrot.slane %v3939, 2
        %v3946 = vsel %vm378, %v3944, %v3945
        %v3947 = vrot.slane %v3940, 2
        %v3948 = vsel %vm378, %v3945, %v3947
        %3949 = vrot.lane.b32.xlu0 %v3946, 126
        %v3950 = vpop.permute.xlu0 %3949
        %3951 = vrot.lane.b32.xlu0 %v3948, 126
        %v3952 = vpop.permute.xlu0 %3951
        %v3955 = vadd.f32 %v3892, %v3950
        %v3956 = vadd.f32 %v3893, %v3952
        %s3957 = sld [smem:[#allocation3 + $0xd7]]
        %v3958 = vstv %s3957
        %v3959 = vmul.f32 %v3958, %v3519
        %v3960 = vmul.f32 %v3958, %v3520
        %v3961 = vmul.f32 %v3958, %v3521
        %v3965 = vrot.slane %v3959, 2
        %v3966 = vrot.slane %v3960, 2
        %v3967 = vsel %vm378, %v3965, %v3966
        %v3968 = vrot.slane %v3961, 2
        %v3969 = vsel %vm378, %v3966, %v3968
        %3970 = vrot.lane.b32.xlu0 %v3967, 126
        %v3971 = vpop.permute.xlu0 %3970
        %3972 = vrot.lane.b32.xlu0 %v3969, 126
        %v3973 = vpop.permute.xlu0 %3972
        %v3976 = vadd.f32 %v3913, %v3971
        %v3977 = vadd.f32 %v3914, %v3973
        %v3978 = vtanh.pop %v3934
        %v3979 = vtanh.pop %v3935
        %vm3980 = vcmask 130048
        %3981 = vst.msk [vmem:[%s173] sm:$0xff] %vm3980, %v3978
        %3982 = vst.msk [vmem:[%s173 + $0x8] sm:$0xff] %vm3980, %v3979
        %v3983 = vtanh.pop %v3955
        %v3984 = vtanh.pop %v3956
        %s3985 = scalar_lea.vmem %s173, 16 [#allocation8]
        %3986 = vst.msk [vmem:[%s3985] sm:$0xff] %vm3980, %v3983
        %3987 = vst.msk [vmem:[%s3985 + $0x8] sm:$0xff] %vm3980, %v3984
        %v3988 = vtanh.pop %v3976
        %v3989 = vtanh.pop %v3977
        %s3990 = scalar_lea.vmem %s173, 32 [#allocation8]
        %3991 = vst.msk [vmem:[%s3990] sm:$0xff] %vm3980, %v3988
        %3992 = vst.msk [vmem:[%s3990 + $0x8] sm:$0xff] %vm3980, %v3989
        %s3993 = sand.u32 %s75, 1
        %s3994 = scalar_lea.sflag [#allocation5], %s3993
        %s3995 = sand.u32 %s75, 1
        %s3996 = smul.addr %s3995, 48
        %s3997 = scalar_lea.vmem [#allocation8], %s3996
        // Predicated region
        $region37: #{tpu_custom_call.1} parent=27 // pred_check
          %p3998 = pneg %p85
        $region38: #{tpu_custom_call.1} parent=27 // pred_check_branch
          %4000 = sbr.rel (%p3998) target = $region40
        $region39: #{tpu_custom_call.1} parent=27 // pred_region
          %s4002 = ssub.s32 768, 768
          %4003 = vsyncadd %s3994, %s4002
          %s4004 = smul.addr %s20, 6
          %s4005 = smul.addr %s4004, 128
          %s4006 = scalar_lea.hbm %s2, %s4005
          %s4007 = sshll.u32 %s3997, 4
          %s4008 = int_to_ptr.vmem [resolvable:$true] %s4007
          %4013 = dma.vmem_to_hbm [thread:$0]  %s4008, 768, %s4006, %s3994, 128, 128, 8
        $region40: #{tpu_custom_call.1} parent=27 // pred_fallthru
          _
      $region28: #{tpu_custom_call.1} parent=5 // pred_fallthru
        _
      %p4014 = scmp.le.s32.totalorder 2, %s15
      // Predicated region
      $region41: #{tpu_custom_call.1} parent=5 // pred_check
        %p4015 = pneg %p4014
      $region42: #{tpu_custom_call.1} parent=5 // pred_check_branch
        %4017 = sbr.rel (%p4015) target = $region44
      $region43: #{tpu_custom_call.1} parent=5 // pred_region
        %s4018 = ssub.s32 %s15, 2
        // Predicated region
        $region45: #{tpu_custom_call.1} parent=43 // pred_check
          %p4019 = pneg %p91
        $region46: #{tpu_custom_call.1} parent=43 // pred_check_branch
          %4021 = sbr.rel (%p4019) target = $region48
        $region47: #{tpu_custom_call.1} parent=43 // pred_region
          %s4022 = sand.u32 %s76, 1
          %s4023 = scalar_lea.sflag [#allocation5], %s4022
          %s4024 = sand.u32 %s76, 1
          %s4025 = smul.addr %s4024, 48
          %s4026 = scalar_lea.vmem [#allocation8], %s4025
          %4027 = dma.done %s4023, 768
        $region48: #{tpu_custom_call.1} parent=43 // pred_fallthru
          _
      $region44: #{tpu_custom_call.1} parent=5 // pred_fallthru
        _
    $region6: #{tpu_custom_call.1} parent=1 // loop_footer
      %s19 = sadd.s32 1, %s15
    $region7: #{tpu_custom_call.1} parent=1 // loop_footer_branch
      %14 = sbr.rel target = $region3
    $region8: #{tpu_custom_call.1} parent=1 // loop_exit
      _
    %4028 = vsyncpa [#allocation4], 1
    %s4029 = scalar_lea.sflag [#allocation4], 1
    %4030 = vsyncpa %s4029, 1
    %4031 = vsyncpa [#allocation5], 1
    %s4032 = scalar_lea.sflag [#allocation5], 1
    %4033 = vsyncpa %s4032, 1
    %4034 = vsyncpa [#allocation6], 1
    %s4035 = scalar_lea.sflag [#allocation6], 1
    %4036 = vsyncpa %s4035, 1

</llo_original>
